<compile_context>
chip_gen: v7x
topology: tpu7x:2x2x1
jax: 0.10.0
libtpu: 0.0.40
codegen_flags: <defaults>
</compile_context>

<pallas_src>
import numpy as np
import jax
import jax.numpy as jnp
from jax.experimental import pallas as pl
from jax.experimental.pallas import tpu as pltpu

# ---------------- config (mirrors `opt` in the PyTorch module) ----------------
HIDDEN_DIM = 200          # opt['hidden_dim']
NER_DIM = 10              # opt['ner_dim']
DEP_DIM = 30              # opt['dep_dim']
NUM_LAYERS = 2            # opt['num_layers'] (unrolled explicitly in the kernel)
MEM_DIM = HIDDEN_DIM      # GCN mem_dim
WDEP_DIM = 20             # WR output dim
BIFFINE = HIDDEN_DIM + NER_DIM + WDEP_DIM   # 230 -> LayerNorm(230), cls_layer 768->230
DEPREL_VOCAB = 42         # len(constant.DEPREL_TO_ID)
NER_VOCAB = 8             # len(constant.NER_TO_ID)
CLS_DIM = 768
LN_EPS = 1e-5             # python float (no captured jnp constants in the kernel)
NEG_INF = -1.0e12         # constant.INFINITY_NUMBER fill; python float


# ===================== single fused Pallas kernel (one sentence / grid step) =====================

def fused_forward_kernel(
        # --- per-sentence inputs (leading grid dim squeezed away) ---
        adj_ref,        # (N, N)              f32
        colsum_ref,     # (N, 1)              f32  adj.sum(0) (column sums)
        counts_ref,     # (N, 42)             f32  colsum-weighted deprel counts
        x0_ref,         # (N, 2*HIDDEN_DIM)   f32
        cls_ref,        # (1, 768)            f32
        ftrig_ref, fargu_ref,         # (Bp, N, 1) float masks, 1.0 = masked out
        subj_type_ref, obj_type_ref,  # (Bp, NER_DIM)
        rnn2_ref,       # (Bp, M, 230)
        strig_ref, sargu_ref,         # (Bp, M, 1)
        # --- VMEM-resident weights (constant index_map across the grid) ---
        dep_tab_ref,    # (42, 20)   f32   deprel_emb @ WR^T + WR_b
        w0T_ref,        # (400, 200) bf16
        b0x2_ref,       # (1, 200)   f32   2 * gcn_b0
        w1T_ref,        # (220, 200) bf16
        b1x2_ref,       # (1, 200)   f32   2 * gcn_b1
        cls_wT_ref,     # (768, 230) bf16
        cls_b_ref,      # (1, 230)   f32
        ln_g_ref, ln_b_ref,           # (1, 230) f32
        w1flat_ref,     # (230, 690) bf16  W1.transpose(1,0,2).reshape
        wmix_ref,       # (1150, 3)  f32   [segment-sum ; W2]   (f32 logits path)
        bb_ref,         # (1, 3)     f32
        # --- outputs ---
        logits_ref,     # (Bp, 3)
        hout_ref):      # (1, 220)

    f32 = jnp.float32
    bf16 = jnp.bfloat16

    adj = adj_ref[...]                                            # (N, N)

    # ---- GCN prep: denom, pool mask (shared by both layers) ----
    rowsum = jnp.sum(adj, axis=1, keepdims=True)                  # adj.sum(2) -> (N, 1)
    colsum = colsum_ref[...]                                      # adj.sum(1) -> (N, 1)
    denom = rowsum + 1.0
    inv_denom = pl.reciprocal(denom, approx=True)                 # EUP; replaces 3 divides
    pool_mask = (rowsum + colsum) == 0.0                          # (N, 1) bool

    # Wdep tail:  sum_m colsum[m] * (deprel_emb @ WR^T + b)[dep_adj[i,m]]
    #           = counts @ deprel_table   (counts built in the wrapper)
    wdep = jnp.dot(counts_ref[...], dep_tab_ref[...],
                   preferred_element_type=f32)                    # (N, 20)
    wdep_act = jnp.maximum(wdep * inv_denom, 0.0)                 # relu(Wdep/denom)

    # ---- GCN layers:  relu(((A@x + x) @ W^T + 2b) / denom)  ++  wdep tail ----
    # NOTE: concat offset 200 is lane-unaligned; left as-is (secondary, see header).
    def gcn_layer(x, wT_bf16, b2):
        ax = jnp.dot(adj, x, preferred_element_type=f32)
        pre = jnp.dot((ax + x).astype(bf16), wT_bf16,
                      preferred_element_type=f32) + b2
        z = jnp.maximum(pre * inv_denom, 0.0)                     # (N, MEM_DIM) f32
        return jnp.concatenate([z, wdep_act], axis=1)             # (N, MEM_DIM+20)

    x = gcn_layer(x0_ref[...], w0T_ref[...], b0x2_ref[...])       # layer 0
    h = gcn_layer(x,           w1T_ref[...], b1x2_ref[...])       # layer 1 -> (N, 220)

    # ---- masked max pools (torch_utils.pool, type='max'), all f32 ----
    hout_ref[...] = jnp.max(jnp.where(pool_mask, NEG_INF, h),
                            axis=0, keepdims=True)                # (1, 220)

    hb = h[None]                                                  # (1, N, 220), no tiling
    first_subj = jnp.max(jnp.where(ftrig_ref[...] > 0.5, NEG_INF, hb), axis=1)
    first_obj = jnp.max(jnp.where(fargu_ref[...] > 0.5, NEG_INF, hb), axis=1)
    first_subj = jnp.concatenate([first_subj, subj_type_ref[...]], axis=1)   # (Bp, 230)
    first_obj = jnp.concatenate([first_obj, obj_type_ref[...]], axis=1)

    rnn2 = rnn2_ref[...]                                          # (Bp, M, 230)
    second_subj = jnp.max(jnp.where(strig_ref[...] > 0.5, NEG_INF, rnn2), axis=1)
    second_obj = jnp.max(jnp.where(sargu_ref[...] > 0.5, NEG_INF, rnn2), axis=1)

    # ---- cls projection: once on the single sentence row, broadcast over pairs ----
    cls_proj = jnp.dot(cls_ref[...].astype(bf16), cls_wT_ref[...],
                       preferred_element_type=f32) + cls_b_ref[...]          # (1, 230)

    # ---- LayerNorm(a + b + c) over last dim (eps=1e-5, biased variance), f32 ----
    def layer_norm(v):
        mu = jnp.mean(v, axis=-1, keepdims=True)
        var = jnp.mean((v - mu) ** 2, axis=-1, keepdims=True)
        return (v - mu) * jax.lax.rsqrt(var + LN_EPS) * ln_g_ref[...] + ln_b_ref[...]

    s = layer_norm(cls_proj + first_subj + second_subj)           # (Bp, 230)
    o = layer_norm(cls_proj + first_obj + second_obj)             # (Bp, 230)
    # dropout(0.2) is identity in eval mode

    # ---- biaffine scorer ----
    # part1[b,r] = sum_ij s[b,i] W1[r,i,j] o[b,j]
    #   u    = s @ W1_flat                (Bp, 690), column index = r*230 + j
    #   prod = u * [o|o|o]                (Bp, 690)
    #   part1 + part2 + b = [prod | s | o] @ [seg_sum ; W2] + b   (one f32 matmul)
    u = jnp.dot(s.astype(bf16), w1flat_ref[...],
                preferred_element_type=f32)                       # (Bp, 690)
    prod = u * jnp.concatenate([o, o, o], axis=1)
    feat = jnp.concatenate([prod, s, o], axis=1)                  # (Bp, 1150) f32
    logits_ref[...] = jnp.dot(feat, wmix_ref[...],
                              preferred_element_type=f32) + bb_ref[...]


# ===================== hoisted parameter preprocessing (call ONCE) =====================

def prepare_params(params):
    """Parameter-only preprocessing hoisted out of the per-call jit.

    Runs eagerly once; the returned pytree of pre-laid-out device arrays is
    reused by every forward call (no per-call transpose/reshape/concat HLOs).
    """
    # Fold WR into the deprel embedding table: table = emb @ WR^T + b  (42 x 20)
    deprel_table = params['deprel_emb'] @ params['wr_w'].T + params['wr_b']
    # Biaffine weight preprocessing: W1 flattened r-major on columns; segment-sum
    # indicator stacked on top of W2 so part1+part2 is a single matmul.
    w1_flat = jnp.transpose(params['W1'], (1, 0, 2)).reshape(BIFFINE, 3 * BIFFINE)
    seg = jnp.repeat(jnp.eye(3, dtype=jnp.float32), BIFFINE, axis=0)   # (690, 3)
    wmix = jnp.concatenate([seg, params['W2']], axis=0)                # (1150, 3)

    bf16 = jnp.bfloat16
    prep = {
        'ner_emb': params['ner_emb'],
        'deprel_table': deprel_table.astype(jnp.float32),
        'w0T': params['gcn_w0'].T.astype(bf16),
        'b0x2': (2.0 * params['gcn_b0'])[None, :],
        'w1T': params['gcn_w1'].T.astype(bf16),
        'b1x2': (2.0 * params['gcn_b1'])[None, :],
        'cls_wT': params['cls_w'].T.astype(bf16),
        'cls_b': params['cls_b'][None, :],
        'ln_g': params['ln_gamma'][None, :],
        'ln_b': params['ln_beta'][None, :],
        'w1flat': w1_flat.astype(bf16),
        'wmix': wmix,                       # f32: final logits accumulation stays f32
        'bb': params['bb'],
    }
    return jax.tree_util.tree_map(jnp.asarray, prep)


# ===================== model forward (tiny glue + one fused, gridded kernel) =====================

def gcn_classifier_forward(prep, adj, dep_adj, cls_embs, gcn_inputs,
                           trig_type_id, first_trig_mask,
                           argu_type_id, first_argu_mask,
                           second_rnn_output, second_trig_mask, second_argu_mask):
    """Batched over S independent sentences (each with its own Bp entity pairs).

    Each grid step reproduces the original module's single-sentence forward.
    """
    S, N, _ = adj.shape
    Bp = first_trig_mask.shape[1]
    M = second_rnn_output.shape[2]

    # ---- per-call, data-dependent glue only (no weight reshapes here) ----
    colsum = jnp.sum(adj, axis=1)                                      # (S, N) = adj.sum(0) per sentence
    onehot = jax.nn.one_hot(dep_adj, DEPREL_VOCAB, dtype=jnp.float32)  # (S, N, N, 42)
    counts = jnp.einsum('sm,simv->siv', colsum, onehot)                # (S, N, 42)
    subj_type = prep['ner_emb'][trig_type_id[:, :, 0]]                 # (S, Bp, NER_DIM)
    obj_type = prep['ner_emb'][argu_type_id[:, :, 0]]

    def per_sentence(tail):
        # tile along the sentence grid axis; full trailing dims (no (8,128) issues)
        return pl.BlockSpec((None,) + tail, lambda s: (s,) + (0,) * len(tail))

    def resident(shape):
        # full-array block, constant index_map -> stays VMEM-resident across the grid
        return pl.BlockSpec(shape, lambda s: (0,) * len(shape))

    in_specs = [
        per_sentence((N, N)),                       # adj
        per_sentence((N, 1)),                       # colsum
        per_sentence((N, DEPREL_VOCAB)),            # counts
        per_sentence((N, 2 * HIDDEN_DIM)),          # gcn_inputs
        per_sentence((1, CLS_DIM)),                 # cls
        per_sentence((Bp, N, 1)),                   # first_trig_mask
        per_sentence((Bp, N, 1)),                   # first_argu_mask
        per_sentence((Bp, NER_DIM)),                # subj_type
        per_sentence((Bp, NER_DIM)),                # obj_type
        per_sentence((Bp, M, BIFFINE)),             # second_rnn_output
        per_sentence((Bp, M, 1)),                   # second_trig_mask
        per_sentence((Bp, M, 1)),                   # second_argu_mask
        resident((DEPREL_VOCAB, WDEP_DIM)),         # deprel_table
        resident((2 * HIDDEN_DIM, MEM_DIM)),        # w0T (bf16)
        resident((1, MEM_DIM)),                     # 2*b0
        resident((MEM_DIM + WDEP_DIM, MEM_DIM)),    # w1T (bf16)
        resident((1, MEM_DIM)),                     # 2*b1
        resident((CLS_DIM, BIFFINE)),               # cls_wT (bf16)
        resident((1, BIFFINE)),                     # cls_b
        resident((1, BIFFINE)),                     # ln_gamma
        resident((1, BIFFINE)),                     # ln_beta
        resident((BIFFINE, 3 * BIFFINE)),           # w1flat (bf16)
        resident((5 * BIFFINE, 3)),                 # wmix
        resident((1, 3)),                           # bb
    ]
    out_specs = (
        pl.BlockSpec((None, Bp, 3), lambda s: (s, 0, 0)),
        pl.BlockSpec((None, 1, MEM_DIM + WDEP_DIM), lambda s: (s, 0, 0)),
    )
    out_shape = (jax.ShapeDtypeStruct((S, Bp, 3), jnp.float32),
                 jax.ShapeDtypeStruct((S, 1, MEM_DIM + WDEP_DIM), jnp.float32))

    logits, h_out = pl.pallas_call(
        fused_forward_kernel,
        out_shape=out_shape,
        grid_spec=pltpu.PrefetchScalarGridSpec(
            num_scalar_prefetch=0, grid=(S,),
            in_specs=in_specs, out_specs=out_specs),
        compiler_params=pltpu.CompilerParams(
            dimension_semantics=("parallel",)),      # shards sentences across TCs on v7x
    )(adj, colsum[..., None], counts, gcn_inputs, cls_embs[:, None, :],
      first_trig_mask, first_argu_mask, subj_type, obj_type,
      second_rnn_output, second_trig_mask, second_argu_mask,
      prep['deprel_table'],
      prep['w0T'], prep['b0x2'], prep['w1T'], prep['b1x2'],
      prep['cls_wT'], prep['cls_b'], prep['ln_g'], prep['ln_b'],
      prep['w1flat'], prep['wmix'], prep['bb'])
    return logits, h_out


# ===================== deterministic parameter init =====================

def init_params(key):
    def u(k, shape, scale):
        return jax.random.uniform(k, shape, jnp.float32, -scale, scale)
    ks = jax.random.split(key, 13)
    p = {
        'deprel_emb': u(ks[0], (DEPREL_VOCAB, DEP_DIM), 0.1),
        'wr_w': u(ks[1], (WDEP_DIM, DEP_DIM), 0.2),
        'wr_b': u(ks[2], (WDEP_DIM,), 0.2),
        'gcn_w0': u(ks[3], (MEM_DIM, 2 * HIDDEN_DIM), 0.05),
        'gcn_b0': u(ks[4], (MEM_DIM,), 0.05),
        'gcn_w1': u(ks[5], (MEM_DIM, MEM_DIM + WDEP_DIM), 0.07),
        'gcn_b1': u(ks[6], (MEM_DIM,), 0.07),
        'ner_emb': u(ks[7], (NER_VOCAB, NER_DIM), 0.1),
        'W1': u(ks[8], (3, BIFFINE, BIFFINE), 0.05),
        'W2': u(ks[9], (2 * BIFFINE, 3), 0.05),
        'bb': u(ks[10], (1, 3), 0.05),
        'cls_w': u(ks[11], (BIFFINE, CLS_DIM), 0.03),
        'cls_b': u(ks[12], (BIFFINE,), 0.03),
        'ln_gamma': jnp.ones((BIFFINE,), jnp.float32),
        'ln_beta': jnp.zeros((BIFFINE,), jnp.float32),
    }
    return p


# ===================== main =====================

if __name__ == "__main__":
    key = jax.random.PRNGKey(0)
    pkey, k1, k2, k3, k4 = jax.random.split(key, 5)
    params = init_params(pkey)
    prep = prepare_params(params)          # hoisted: executed ONCE, reused per call

    S = 2           # sentences batched per call (grid axis, "parallel")
    N = 16          # max sentence length
    Bp = 2          # number of entity pairs per sentence
    M_SEQ = 8       # second-BiLSTM sequence length

    # Undirected dependency-tree adjacencies (gen_ret is CPU/numpy code).
    # TODO(synk): gen_ret tree construction is data-dependent CPU code; built here directly.
    heads_per_sent = [
        [0, 1, 2, 2, 4, 4, 1, 7, 7, 9, 9, 11],
        [0, 1, 1, 3, 3, 5, 2, 6, 8, 8, 10],
    ]
    adj_np = np.zeros((S, N, N), np.float32)
    for si, heads in enumerate(heads_per_sent):
        for i, hd in enumerate(heads):
            if hd > 0:
                adj_np[si, i, hd - 1] = 1.0
                adj_np[si, hd - 1, i] = 1.0
    adj = jnp.asarray(adj_np)
    dep_adj = jax.random.randint(k1, (S, N, N), 0, DEPREL_VOCAB)

    # TODO(synk): BERT + BiLSTM encoders (GCN_BiLSTM / Unique_BiLSTM) have no clean
    # Pallas equivalent; substitute deterministic synthetic features of the right shapes.
    cls_embs = 0.1 * jax.random.normal(k2, (S, CLS_DIM), jnp.float32)
    gcn_inputs = 0.1 * jax.random.normal(k3, (S, N, 2 * HIDDEN_DIM), jnp.float32)
    second_rnn_output = 0.1 * jax.random.normal(k4, (S, Bp, M_SEQ, BIFFINE), jnp.float32)

    trig_type_id = jnp.array([[[1], [3]], [[2], [4]]], jnp.int32)   # (S, Bp, 1)
    argu_type_id = jnp.array([[[2], [5]], [[6], [1]]], jnp.int32)

    def make_mask(s_count, batch, length, keep_positions):
        # 1.0 = masked out, 0.0 = keep (torch ByteTensor mask semantics)
        m = np.ones((s_count, batch, length, 1), np.float32)
        for si in range(s_count):
            for bi in range(batch):
                for p_ in keep_positions[si][bi]:
                    m[si, bi, p_, 0] = 0.0
        return jnp.asarray(m)

    first_trig_mask = make_mask(S, Bp, N, [[[2], [5, 6]], [[1], [3, 4]]])
    first_argu_mask = make_mask(S, Bp, N, [[[7], [9]], [[6], [8]]])
    second_trig_mask = make_mask(S, Bp, M_SEQ, [[[1], [2]], [[0], [3]]])
    second_argu_mask = make_mask(S, Bp, M_SEQ, [[[4], [6, 7]], [[5], [2, 6]]])

    fwd = jax.jit(gcn_classifier_forward)
    logits, h_out = fwd(prep, adj, dep_adj, cls_embs, gcn_inputs,
                        trig_type_id, first_trig_mask, argu_type_id, first_argu_mask,
                        second_rnn_output, second_trig_mask, second_argu_mask)
    jax.block_until_ready((logits, h_out))

    assert logits.shape == (S, Bp, 3) and logits.dtype == jnp.float32
    assert h_out.shape == (S, 1, MEM_DIM + WDEP_DIM) and h_out.dtype == jnp.float32
    assert bool(jnp.all(jnp.isfinite(logits))) and bool(jnp.all(jnp.isfinite(h_out)))
    print("KERNEL_OK")
</pallas_src>

<mosaic_0001>
module attributes {stable_mosaic.version = 11 : i64} {
  func.func @fused_forward_kernel(%arg0: i32, %arg1: memref<1x16x16xf32, #tpu.memory_space<vmem>>, %arg2: memref<1x16x1xf32, #tpu.memory_space<vmem>>, %arg3: memref<1x16x42xf32, #tpu.memory_space<vmem>>, %arg4: memref<1x16x400xf32, #tpu.memory_space<vmem>>, %arg5: memref<1x1x768xf32, #tpu.memory_space<vmem>>, %arg6: memref<1x2x16x1xf32, #tpu.memory_space<vmem>>, %arg7: memref<1x2x16x1xf32, #tpu.memory_space<vmem>>, %arg8: memref<1x2x10xf32, #tpu.memory_space<vmem>>, %arg9: memref<1x2x10xf32, #tpu.memory_space<vmem>>, %arg10: memref<1x2x8x230xf32, #tpu.memory_space<vmem>>, %arg11: memref<1x2x8x1xf32, #tpu.memory_space<vmem>>, %arg12: memref<1x2x8x1xf32, #tpu.memory_space<vmem>>, %arg13: memref<42x20xf32, #tpu.memory_space<vmem>>, %arg14: memref<400x200xbf16, #tpu.memory_space<vmem>>, %arg15: memref<1x200xf32, #tpu.memory_space<vmem>>, %arg16: memref<220x200xbf16, #tpu.memory_space<vmem>>, %arg17: memref<1x200xf32, #tpu.memory_space<vmem>>, %arg18: memref<768x230xbf16, #tpu.memory_space<vmem>>, %arg19: memref<1x230xf32, #tpu.memory_space<vmem>>, %arg20: memref<1x230xf32, #tpu.memory_space<vmem>>, %arg21: memref<1x230xf32, #tpu.memory_space<vmem>>, %arg22: memref<230x690xbf16, #tpu.memory_space<vmem>>, %arg23: memref<1150x3xf32, #tpu.memory_space<vmem>>, %arg24: memref<1x3xf32, #tpu.memory_space<vmem>>, %arg25: memref<1x2x3xf32, #tpu.memory_space<vmem>>, %arg26: memref<1x1x220xf32, #tpu.memory_space<vmem>>) attributes {dimension_semantics = [#tpu.dimension_semantics<parallel>], iteration_bounds = array<i64: 2>, scalar_prefetch = 0 : i64, scratch_operands = 0 : i64, tpu.core_type = #tpu.core_type<tc>, window_params = [{transform_indices = @transform_0, window_bounds = array<i64: 1, 16, 16>}, {transform_indices = @transform_1, window_bounds = array<i64: 1, 16, 1>}, {transform_indices = @transform_2, window_bounds = array<i64: 1, 16, 42>}, {transform_indices = @transform_3, window_bounds = array<i64: 1, 16, 400>}, {transform_indices = @transform_4, window_bounds = array<i64: 1, 1, 768>}, {transform_indices = @transform_5, window_bounds = array<i64: 1, 2, 16, 1>}, {transform_indices = @transform_6, window_bounds = array<i64: 1, 2, 16, 1>}, {transform_indices = @transform_7, window_bounds = array<i64: 1, 2, 10>}, {transform_indices = @transform_8, window_bounds = array<i64: 1, 2, 10>}, {transform_indices = @transform_9, window_bounds = array<i64: 1, 2, 8, 230>}, {transform_indices = @transform_10, window_bounds = array<i64: 1, 2, 8, 1>}, {transform_indices = @transform_11, window_bounds = array<i64: 1, 2, 8, 1>}, {pipeline_mode = #tpu.pipeline_mode<synchronous>, transform_indices = @transform_12, window_bounds = array<i64: 42, 20>}, {pipeline_mode = #tpu.pipeline_mode<synchronous>, transform_indices = @transform_13, window_bounds = array<i64: 400, 200>}, {pipeline_mode = #tpu.pipeline_mode<synchronous>, transform_indices = @transform_14, window_bounds = array<i64: 1, 200>}, {pipeline_mode = #tpu.pipeline_mode<synchronous>, transform_indices = @transform_15, window_bounds = array<i64: 220, 200>}, {pipeline_mode = #tpu.pipeline_mode<synchronous>, transform_indices = @transform_16, window_bounds = array<i64: 1, 200>}, {pipeline_mode = #tpu.pipeline_mode<synchronous>, transform_indices = @transform_17, window_bounds = array<i64: 768, 230>}, {pipeline_mode = #tpu.pipeline_mode<synchronous>, transform_indices = @transform_18, window_bounds = array<i64: 1, 230>}, {pipeline_mode = #tpu.pipeline_mode<synchronous>, transform_indices = @transform_19, window_bounds = array<i64: 1, 230>}, {pipeline_mode = #tpu.pipeline_mode<synchronous>, transform_indices = @transform_20, window_bounds = array<i64: 1, 230>}, {pipeline_mode = #tpu.pipeline_mode<synchronous>, transform_indices = @transform_21, window_bounds = array<i64: 230, 690>}, {pipeline_mode = #tpu.pipeline_mode<synchronous>, transform_indices = @transform_22, window_bounds = array<i64: 1150, 3>}, {pipeline_mode = #tpu.pipeline_mode<synchronous>, transform_indices = @transform_23, window_bounds = array<i64: 1, 3>}, {transform_indices = @transform_24, window_bounds = array<i64: 1, 2, 3>}, {transform_indices = @transform_25, window_bounds = array<i64: 1, 1, 220>}]} {
    %c0 = arith.constant 0 : index
    %c0_0 = arith.constant 0 : index
    %c0_1 = arith.constant 0 : index
    %0 = vector.load %arg1[%c0, %c0_0, %c0_1] : memref<1x16x16xf32, #tpu.memory_space<vmem>>, vector<1x16x16xf32>
    %1 = vector.shape_cast %0 : vector<1x16x16xf32> to vector<16x16xf32>
    %cst = arith.constant dense<0.000000e+00> : vector<16xf32>
    %2 = vector.multi_reduction <add>, %1, %cst [1] : vector<16x16xf32> to vector<16xf32>
    %3 = vector.shape_cast %2 : vector<16xf32> to vector<16x1xf32>
    %c0_2 = arith.constant 0 : index
    %c0_3 = arith.constant 0 : index
    %c0_4 = arith.constant 0 : index
    %4 = vector.load %arg2[%c0_2, %c0_3, %c0_4] : memref<1x16x1xf32, #tpu.memory_space<vmem>>, vector<1x16x1xf32>
    %5 = vector.shape_cast %4 : vector<1x16x1xf32> to vector<16x1xf32>
    %cst_5 = arith.constant 1.000000e+00 : f32
    %6 = vector.broadcast %cst_5 : f32 to vector<16x1xf32>
    %7 = arith.addf %3, %6 : vector<16x1xf32>
    %8 = tpu.reciprocal %7 {approx = true} : vector<16x1xf32> -> vector<16x1xf32>
    %9 = arith.addf %3, %5 : vector<16x1xf32>
    %cst_6 = arith.constant 0.000000e+00 : f32
    %10 = vector.broadcast %cst_6 : f32 to vector<16x1xf32>
    %11 = arith.cmpf oeq, %9, %10 : vector<16x1xf32>
    %c0_7 = arith.constant 0 : index
    %c0_8 = arith.constant 0 : index
    %c0_9 = arith.constant 0 : index
    %12 = vector.load %arg3[%c0_7, %c0_8, %c0_9] : memref<1x16x42xf32, #tpu.memory_space<vmem>>, vector<1x16x42xf32>
    %13 = vector.shape_cast %12 : vector<1x16x42xf32> to vector<16x42xf32>
    %c0_10 = arith.constant 0 : index
    %c0_11 = arith.constant 0 : index
    %14 = vector.load %arg13[%c0_10, %c0_11] : memref<42x20xf32, #tpu.memory_space<vmem>>, vector<42x20xf32>
    %cst_12 = arith.constant dense<0.000000e+00> : vector<16x20xf32>
    %15 = tpu.matmul %13, %14, %cst_12 {dimension_numbers = #tpu.dot_dimension_numbers<[1], [0], [0], [1], [0, 0, 1, 1], [], []>} : vector<16x42xf32>, vector<42x20xf32>, vector<16x20xf32> -> vector<16x20xf32>
    %16 = vector.broadcast %8 : vector<16x1xf32> to vector<16x20xf32>
    %17 = arith.mulf %15, %16 : vector<16x20xf32>
    %cst_13 = arith.constant 0.000000e+00 : f32
    %18 = vector.broadcast %cst_13 : f32 to vector<16x20xf32>
    %19 = arith.maximumf %17, %18 : vector<16x20xf32>
    %c0_14 = arith.constant 0 : index
    %c0_15 = arith.constant 0 : index
    %c0_16 = arith.constant 0 : index
    %20 = vector.load %arg4[%c0_14, %c0_15, %c0_16] : memref<1x16x400xf32, #tpu.memory_space<vmem>>, vector<1x16x400xf32>
    %21 = vector.shape_cast %20 : vector<1x16x400xf32> to vector<16x400xf32>
    %c0_17 = arith.constant 0 : index
    %c0_18 = arith.constant 0 : index
    %22 = vector.load %arg14[%c0_17, %c0_18] : memref<400x200xbf16, #tpu.memory_space<vmem>>, vector<400x200xbf16>
    %c0_19 = arith.constant 0 : index
    %c0_20 = arith.constant 0 : index
    %23 = vector.load %arg15[%c0_19, %c0_20] : memref<1x200xf32, #tpu.memory_space<vmem>>, vector<1x200xf32>
    %cst_21 = arith.constant dense<0.000000e+00> : vector<16x400xf32>
    %24 = tpu.matmul %1, %21, %cst_21 {dimension_numbers = #tpu.dot_dimension_numbers<[1], [0], [0], [1], [0, 0, 1, 1], [], []>} : vector<16x16xf32>, vector<16x400xf32>, vector<16x400xf32> -> vector<16x400xf32>
    %25 = arith.addf %24, %21 : vector<16x400xf32>
    %26 = arith.truncf %25 : vector<16x400xf32> to vector<16x400xbf16>
    %cst_22 = arith.constant dense<0.000000e+00> : vector<16x200xf32>
    %27 = tpu.matmul %26, %22, %cst_22 {dimension_numbers = #tpu.dot_dimension_numbers<[1], [0], [0], [1], [0, 0, 1, 1], [], []>} : vector<16x400xbf16>, vector<400x200xbf16>, vector<16x200xf32> -> vector<16x200xf32>
    %28 = vector.broadcast %23 : vector<1x200xf32> to vector<16x200xf32>
    %29 = arith.addf %27, %28 : vector<16x200xf32>
    %30 = vector.broadcast %8 : vector<16x1xf32> to vector<16x200xf32>
    %31 = arith.mulf %29, %30 : vector<16x200xf32>
    %cst_23 = arith.constant 0.000000e+00 : f32
    %32 = vector.broadcast %cst_23 : f32 to vector<16x200xf32>
    %33 = arith.maximumf %31, %32 : vector<16x200xf32>
    %34 = tpu.concatenate %33, %19 in 1 : vector<16x200xf32>, vector<16x20xf32> -> vector<16x220xf32>
    %c0_24 = arith.constant 0 : index
    %c0_25 = arith.constant 0 : index
    %35 = vector.load %arg16[%c0_24, %c0_25] : memref<220x200xbf16, #tpu.memory_space<vmem>>, vector<220x200xbf16>
    %c0_26 = arith.constant 0 : index
    %c0_27 = arith.constant 0 : index
    %36 = vector.load %arg17[%c0_26, %c0_27] : memref<1x200xf32, #tpu.memory_space<vmem>>, vector<1x200xf32>
    %cst_28 = arith.constant dense<0.000000e+00> : vector<16x220xf32>
    %37 = tpu.matmul %1, %34, %cst_28 {dimension_numbers = #tpu.dot_dimension_numbers<[1], [0], [0], [1], [0, 0, 1, 1], [], []>} : vector<16x16xf32>, vector<16x220xf32>, vector<16x220xf32> -> vector<16x220xf32>
    %38 = arith.addf %37, %34 : vector<16x220xf32>
    %39 = arith.truncf %38 : vector<16x220xf32> to vector<16x220xbf16>
    %cst_29 = arith.constant dense<0.000000e+00> : vector<16x200xf32>
    %40 = tpu.matmul %39, %35, %cst_29 {dimension_numbers = #tpu.dot_dimension_numbers<[1], [0], [0], [1], [0, 0, 1, 1], [], []>} : vector<16x220xbf16>, vector<220x200xbf16>, vector<16x200xf32> -> vector<16x200xf32>
    %41 = vector.broadcast %36 : vector<1x200xf32> to vector<16x200xf32>
    %42 = arith.addf %40, %41 : vector<16x200xf32>
    %43 = vector.broadcast %8 : vector<16x1xf32> to vector<16x200xf32>
    %44 = arith.mulf %42, %43 : vector<16x200xf32>
    %cst_30 = arith.constant 0.000000e+00 : f32
    %45 = vector.broadcast %cst_30 : f32 to vector<16x200xf32>
    %46 = arith.maximumf %44, %45 : vector<16x200xf32>
    %47 = tpu.concatenate %46, %19 in 1 : vector<16x200xf32>, vector<16x20xf32> -> vector<16x220xf32>
    %cst_31 = arith.constant -9.99999995E+11 : f32
    %48 = vector.shape_cast %11 : vector<16x1xi1> to vector<16x1xi1>
    %49 = vector.broadcast %48 : vector<16x1xi1> to vector<16x220xi1>
    %50 = vector.broadcast %cst_31 : f32 to vector<16x220xf32>
    %51 = arith.select %49, %50, %47 : vector<16x220xi1>, vector<16x220xf32>
    %cst_32 = arith.constant dense<0xFF800000> : vector<220xf32>
    %52 = vector.multi_reduction <maximumf>, %51, %cst_32 [0] : vector<16x220xf32> to vector<220xf32>
    %53 = vector.shape_cast %52 : vector<220xf32> to vector<1x220xf32>
    %c0_33 = arith.constant 0 : index
    %c0_34 = arith.constant 0 : index
    %c0_35 = arith.constant 0 : index
    %54 = vector.load %arg26[%c0_33, %c0_34, %c0_35] : memref<1x1x220xf32, #tpu.memory_space<vmem>>, vector<1x1x220xf32>
    %55 = vector.shape_cast %54 : vector<1x1x220xf32> to vector<1x220xf32>
    %56 = vector.shape_cast %53 : vector<1x220xf32> to vector<1x1x220xf32>
    tpu.vector_store %arg26[%c0_33, %c0_34, %c0_35], %56 {strides = array<i32>} : memref<1x1x220xf32, #tpu.memory_space<vmem>>, vector<1x1x220xf32>,
    %57 = vector.shape_cast %47 : vector<16x220xf32> to vector<1x16x220xf32>
    %c0_36 = arith.constant 0 : index
    %c0_37 = arith.constant 0 : index
    %c0_38 = arith.constant 0 : index
    %c0_39 = arith.constant 0 : index
    %58 = vector.load %arg6[%c0_36, %c0_37, %c0_38, %c0_39] : memref<1x2x16x1xf32, #tpu.memory_space<vmem>>, vector<1x2x16x1xf32>
    %59 = vector.shape_cast %58 : vector<1x2x16x1xf32> to vector<2x16x1xf32>
    %cst_40 = arith.constant 5.000000e-01 : f32
    %60 = vector.broadcast %cst_40 : f32 to vector<2x16x1xf32>
    %61 = arith.cmpf ogt, %59, %60 : vector<2x16x1xf32>
    %cst_41 = arith.constant -9.99999995E+11 : f32
    %62 = vector.shape_cast %61 : vector<2x16x1xi1> to vector<2x16x1xi1>
    %63 = vector.broadcast %62 : vector<2x16x1xi1> to vector<2x16x220xi1>
    %64 = vector.broadcast %cst_41 : f32 to vector<2x16x220xf32>
    %65 = vector.shape_cast %57 : vector<1x16x220xf32> to vector<1x16x220xf32>
    %66 = vector.broadcast %65 : vector<1x16x220xf32> to vector<2x16x220xf32>
    %67 = arith.select %63, %64, %66 : vector<2x16x220xi1>, vector<2x16x220xf32>
    %cst_42 = arith.constant dense<0xFF800000> : vector<2x220xf32>
    %68 = vector.multi_reduction <maximumf>, %67, %cst_42 [1] : vector<2x16x220xf32> to vector<2x220xf32>
    %c0_43 = arith.constant 0 : index
    %c0_44 = arith.constant 0 : index
    %c0_45 = arith.constant 0 : index
    %c0_46 = arith.constant 0 : index
    %69 = vector.load %arg7[%c0_43, %c0_44, %c0_45, %c0_46] : memref<1x2x16x1xf32, #tpu.memory_space<vmem>>, vector<1x2x16x1xf32>
    %70 = vector.shape_cast %69 : vector<1x2x16x1xf32> to vector<2x16x1xf32>
    %cst_47 = arith.constant 5.000000e-01 : f32
    %71 = vector.broadcast %cst_47 : f32 to vector<2x16x1xf32>
    %72 = arith.cmpf ogt, %70, %71 : vector<2x16x1xf32>
    %cst_48 = arith.constant -9.99999995E+11 : f32
    %73 = vector.shape_cast %72 : vector<2x16x1xi1> to vector<2x16x1xi1>
    %74 = vector.broadcast %73 : vector<2x16x1xi1> to vector<2x16x220xi1>
    %75 = vector.broadcast %cst_48 : f32 to vector<2x16x220xf32>
    %76 = vector.shape_cast %57 : vector<1x16x220xf32> to vector<1x16x220xf32>
    %77 = vector.broadcast %76 : vector<1x16x220xf32> to vector<2x16x220xf32>
    %78 = arith.select %74, %75, %77 : vector<2x16x220xi1>, vector<2x16x220xf32>
    %cst_49 = arith.constant dense<0xFF800000> : vector<2x220xf32>
    %79 = vector.multi_reduction <maximumf>, %78, %cst_49 [1] : vector<2x16x220xf32> to vector<2x220xf32>
    %c0_50 = arith.constant 0 : index
    %c0_51 = arith.constant 0 : index
    %c0_52 = arith.constant 0 : index
    %80 = vector.load %arg8[%c0_50, %c0_51, %c0_52] : memref<1x2x10xf32, #tpu.memory_space<vmem>>, vector<1x2x10xf32>
    %81 = vector.shape_cast %80 : vector<1x2x10xf32> to vector<2x10xf32>
    %82 = tpu.concatenate %68, %81 in 1 : vector<2x220xf32>, vector<2x10xf32> -> vector<2x230xf32>
    %c0_53 = arith.constant 0 : index
    %c0_54 = arith.constant 0 : index
    %c0_55 = arith.constant 0 : index
    %83 = vector.load %arg9[%c0_53, %c0_54, %c0_55] : memref<1x2x10xf32, #tpu.memory_space<vmem>>, vector<1x2x10xf32>
    %84 = vector.shape_cast %83 : vector<1x2x10xf32> to vector<2x10xf32>
    %85 = tpu.concatenate %79, %84 in 1 : vector<2x220xf32>, vector<2x10xf32> -> vector<2x230xf32>
    %c0_56 = arith.constant 0 : index
    %c0_57 = arith.constant 0 : index
    %c0_58 = arith.constant 0 : index
    %c0_59 = arith.constant 0 : index
    %86 = vector.load %arg10[%c0_56, %c0_57, %c0_58, %c0_59] : memref<1x2x8x230xf32, #tpu.memory_space<vmem>>, vector<1x2x8x230xf32>
    %87 = vector.shape_cast %86 : vector<1x2x8x230xf32> to vector<2x8x230xf32>
    %c0_60 = arith.constant 0 : index
    %c0_61 = arith.constant 0 : index
    %c0_62 = arith.constant 0 : index
    %c0_63 = arith.constant 0 : index
    %88 = vector.load %arg11[%c0_60, %c0_61, %c0_62, %c0_63] : memref<1x2x8x1xf32, #tpu.memory_space<vmem>>, vector<1x2x8x1xf32>
    %89 = vector.shape_cast %88 : vector<1x2x8x1xf32> to vector<2x8x1xf32>
    %cst_64 = arith.constant 5.000000e-01 : f32
    %90 = vector.broadcast %cst_64 : f32 to vector<2x8x1xf32>
    %91 = arith.cmpf ogt, %89, %90 : vector<2x8x1xf32>
    %cst_65 = arith.constant -9.99999995E+11 : f32
    %92 = vector.shape_cast %91 : vector<2x8x1xi1> to vector<2x8x1xi1>
    %93 = vector.broadcast %92 : vector<2x8x1xi1> to vector<2x8x230xi1>
    %94 = vector.broadcast %cst_65 : f32 to vector<2x8x230xf32>
    %95 = arith.select %93, %94, %87 : vector<2x8x230xi1>, vector<2x8x230xf32>
    %cst_66 = arith.constant dense<0xFF800000> : vector<2x230xf32>
    %96 = vector.multi_reduction <maximumf>, %95, %cst_66 [1] : vector<2x8x230xf32> to vector<2x230xf32>
    %c0_67 = arith.constant 0 : index
    %c0_68 = arith.constant 0 : index
    %c0_69 = arith.constant 0 : index
    %c0_70 = arith.constant 0 : index
    %97 = vector.load %arg12[%c0_67, %c0_68, %c0_69, %c0_70] : memref<1x2x8x1xf32, #tpu.memory_space<vmem>>, vector<1x2x8x1xf32>
    %98 = vector.shape_cast %97 : vector<1x2x8x1xf32> to vector<2x8x1xf32>
    %cst_71 = arith.constant 5.000000e-01 : f32
    %99 = vector.broadcast %cst_71 : f32 to vector<2x8x1xf32>
    %100 = arith.cmpf ogt, %98, %99 : vector<2x8x1xf32>
    %cst_72 = arith.constant -9.99999995E+11 : f32
    %101 = vector.shape_cast %100 : vector<2x8x1xi1> to vector<2x8x1xi1>
    %102 = vector.broadcast %101 : vector<2x8x1xi1> to vector<2x8x230xi1>
    %103 = vector.broadcast %cst_72 : f32 to vector<2x8x230xf32>
    %104 = arith.select %102, %103, %87 : vector<2x8x230xi1>, vector<2x8x230xf32>
    %cst_73 = arith.constant dense<0xFF800000> : vector<2x230xf32>
    %105 = vector.multi_reduction <maximumf>, %104, %cst_73 [1] : vector<2x8x230xf32> to vector<2x230xf32>
    %c0_74 = arith.constant 0 : index
    %c0_75 = arith.constant 0 : index
    %c0_76 = arith.constant 0 : index
    %106 = vector.load %arg5[%c0_74, %c0_75, %c0_76] : memref<1x1x768xf32, #tpu.memory_space<vmem>>, vector<1x1x768xf32>
    %107 = vector.shape_cast %106 : vector<1x1x768xf32> to vector<1x768xf32>
    %108 = arith.truncf %107 : vector<1x768xf32> to vector<1x768xbf16>
    %c0_77 = arith.constant 0 : index
    %c0_78 = arith.constant 0 : index
    %109 = vector.load %arg18[%c0_77, %c0_78] : memref<768x230xbf16, #tpu.memory_space<vmem>>, vector<768x230xbf16>
    %cst_79 = arith.constant dense<0.000000e+00> : vector<1x230xf32>
    %110 = tpu.matmul %108, %109, %cst_79 {dimension_numbers = #tpu.dot_dimension_numbers<[1], [0], [0], [1], [0, 0, 1, 1], [], []>} : vector<1x768xbf16>, vector<768x230xbf16>, vector<1x230xf32> -> vector<1x230xf32>
    %c0_80 = arith.constant 0 : index
    %c0_81 = arith.constant 0 : index
    %111 = vector.load %arg19[%c0_80, %c0_81] : memref<1x230xf32, #tpu.memory_space<vmem>>, vector<1x230xf32>
    %112 = arith.addf %110, %111 : vector<1x230xf32>
    %113 = vector.broadcast %112 : vector<1x230xf32> to vector<2x230xf32>
    %114 = arith.addf %113, %82 : vector<2x230xf32>
    %115 = arith.addf %114, %96 : vector<2x230xf32>
    %cst_82 = arith.constant dense<0.000000e+00> : vector<2xf32>
    %116 = vector.multi_reduction <add>, %115, %cst_82 [1] : vector<2x230xf32> to vector<2xf32>
    %117 = vector.shape_cast %116 : vector<2xf32> to vector<2x1xf32>
    %cst_83 = arith.constant 2.300000e+02 : f32
    %118 = vector.broadcast %cst_83 : f32 to vector<2x1xf32>
    %119 = arith.divf %117, %118 : vector<2x1xf32>
    %120 = vector.broadcast %119 : vector<2x1xf32> to vector<2x230xf32>
    %121 = arith.subf %115, %120 : vector<2x230xf32>
    %122 = arith.mulf %121, %121 : vector<2x230xf32>
    %cst_84 = arith.constant dense<0.000000e+00> : vector<2xf32>
    %123 = vector.multi_reduction <add>, %122, %cst_84 [1] : vector<2x230xf32> to vector<2xf32>
    %124 = vector.shape_cast %123 : vector<2xf32> to vector<2x1xf32>
    %cst_85 = arith.constant 2.300000e+02 : f32
    %125 = vector.broadcast %cst_85 : f32 to vector<2x1xf32>
    %126 = arith.divf %124, %125 : vector<2x1xf32>
    %127 = vector.broadcast %119 : vector<2x1xf32> to vector<2x230xf32>
    %128 = arith.subf %115, %127 : vector<2x230xf32>
    %cst_86 = arith.constant 9.99999974E-6 : f32
    %129 = vector.broadcast %cst_86 : f32 to vector<2x1xf32>
    %130 = arith.addf %126, %129 : vector<2x1xf32>
    %131 = math.rsqrt %130 : vector<2x1xf32>
    %132 = vector.broadcast %131 : vector<2x1xf32> to vector<2x230xf32>
    %133 = arith.mulf %128, %132 : vector<2x230xf32>
    %c0_87 = arith.constant 0 : index
    %c0_88 = arith.constant 0 : index
    %134 = vector.load %arg20[%c0_87, %c0_88] : memref<1x230xf32, #tpu.memory_space<vmem>>, vector<1x230xf32>
    %135 = vector.broadcast %134 : vector<1x230xf32> to vector<2x230xf32>
    %136 = arith.mulf %133, %135 : vector<2x230xf32>
    %c0_89 = arith.constant 0 : index
    %c0_90 = arith.constant 0 : index
    %137 = vector.load %arg21[%c0_89, %c0_90] : memref<1x230xf32, #tpu.memory_space<vmem>>, vector<1x230xf32>
    %138 = vector.broadcast %137 : vector<1x230xf32> to vector<2x230xf32>
    %139 = arith.addf %136, %138 : vector<2x230xf32>
    %140 = vector.broadcast %112 : vector<1x230xf32> to vector<2x230xf32>
    %141 = arith.addf %140, %85 : vector<2x230xf32>
    %142 = arith.addf %141, %105 : vector<2x230xf32>
    %cst_91 = arith.constant dense<0.000000e+00> : vector<2xf32>
    %143 = vector.multi_reduction <add>, %142, %cst_91 [1] : vector<2x230xf32> to vector<2xf32>
    %144 = vector.shape_cast %143 : vector<2xf32> to vector<2x1xf32>
    %cst_92 = arith.constant 2.300000e+02 : f32
    %145 = vector.broadcast %cst_92 : f32 to vector<2x1xf32>
    %146 = arith.divf %144, %145 : vector<2x1xf32>
    %147 = vector.broadcast %146 : vector<2x1xf32> to vector<2x230xf32>
    %148 = arith.subf %142, %147 : vector<2x230xf32>
    %149 = arith.mulf %148, %148 : vector<2x230xf32>
    %cst_93 = arith.constant dense<0.000000e+00> : vector<2xf32>
    %150 = vector.multi_reduction <add>, %149, %cst_93 [1] : vector<2x230xf32> to vector<2xf32>
    %151 = vector.shape_cast %150 : vector<2xf32> to vector<2x1xf32>
    %cst_94 = arith.constant 2.300000e+02 : f32
    %152 = vector.broadcast %cst_94 : f32 to vector<2x1xf32>
    %153 = arith.divf %151, %152 : vector<2x1xf32>
    %154 = vector.broadcast %146 : vector<2x1xf32> to vector<2x230xf32>
    %155 = arith.subf %142, %154 : vector<2x230xf32>
    %cst_95 = arith.constant 9.99999974E-6 : f32
    %156 = vector.broadcast %cst_95 : f32 to vector<2x1xf32>
    %157 = arith.addf %153, %156 : vector<2x1xf32>
    %158 = math.rsqrt %157 : vector<2x1xf32>
    %159 = vector.broadcast %158 : vector<2x1xf32> to vector<2x230xf32>
    %160 = arith.mulf %155, %159 : vector<2x230xf32>
    %c0_96 = arith.constant 0 : index
    %c0_97 = arith.constant 0 : index
    %161 = vector.load %arg20[%c0_96, %c0_97] : memref<1x230xf32, #tpu.memory_space<vmem>>, vector<1x230xf32>
    %162 = vector.broadcast %161 : vector<1x230xf32> to vector<2x230xf32>
    %163 = arith.mulf %160, %162 : vector<2x230xf32>
    %c0_98 = arith.constant 0 : index
    %c0_99 = arith.constant 0 : index
    %164 = vector.load %arg21[%c0_98, %c0_99] : memref<1x230xf32, #tpu.memory_space<vmem>>, vector<1x230xf32>
    %165 = vector.broadcast %164 : vector<1x230xf32> to vector<2x230xf32>
    %166 = arith.addf %163, %165 : vector<2x230xf32>
    %167 = arith.truncf %139 : vector<2x230xf32> to vector<2x230xbf16>
    %c0_100 = arith.constant 0 : index
    %c0_101 = arith.constant 0 : index
    %168 = vector.load %arg22[%c0_100, %c0_101] : memref<230x690xbf16, #tpu.memory_space<vmem>>, vector<230x690xbf16>
    %cst_102 = arith.constant dense<0.000000e+00> : vector<2x690xf32>
    %169 = tpu.matmul %167, %168, %cst_102 {dimension_numbers = #tpu.dot_dimension_numbers<[1], [0], [0], [1], [0, 0, 1, 1], [], []>} : vector<2x230xbf16>, vector<230x690xbf16>, vector<2x690xf32> -> vector<2x690xf32>
    %170 = tpu.concatenate %166, %166, %166 in 1 : vector<2x230xf32>, vector<2x230xf32>, vector<2x230xf32> -> vector<2x690xf32>
    %171 = arith.mulf %169, %170 : vector<2x690xf32>
    %172 = tpu.concatenate %171, %139, %166 in 1 : vector<2x690xf32>, vector<2x230xf32>, vector<2x230xf32> -> vector<2x1150xf32>
    %c0_103 = arith.constant 0 : index
    %c0_104 = arith.constant 0 : index
    %173 = vector.load %arg23[%c0_103, %c0_104] : memref<1150x3xf32, #tpu.memory_space<vmem>>, vector<1150x3xf32>
    %cst_105 = arith.constant dense<0.000000e+00> : vector<2x3xf32>
    %174 = tpu.matmul %172, %173, %cst_105 {dimension_numbers = #tpu.dot_dimension_numbers<[1], [0], [0], [1], [0, 0, 1, 1], [], []>} : vector<2x1150xf32>, vector<1150x3xf32>, vector<2x3xf32> -> vector<2x3xf32>
    %c0_106 = arith.constant 0 : index
    %c0_107 = arith.constant 0 : index
    %175 = vector.load %arg24[%c0_106, %c0_107] : memref<1x3xf32, #tpu.memory_space<vmem>>, vector<1x3xf32>
    %176 = vector.broadcast %175 : vector<1x3xf32> to vector<2x3xf32>
    %177 = arith.addf %174, %176 : vector<2x3xf32>
    %c0_108 = arith.constant 0 : index
    %c0_109 = arith.constant 0 : index
    %c0_110 = arith.constant 0 : index
    %178 = vector.load %arg25[%c0_108, %c0_109, %c0_110] : memref<1x2x3xf32, #tpu.memory_space<vmem>>, vector<1x2x3xf32>
    %179 = vector.shape_cast %178 : vector<1x2x3xf32> to vector<2x3xf32>
    %180 = vector.shape_cast %177 : vector<2x3xf32> to vector<1x2x3xf32>
    tpu.vector_store %arg25[%c0_108, %c0_109, %c0_110], %180 {strides = array<i32>} : memref<1x2x3xf32, #tpu.memory_space<vmem>>, vector<1x2x3xf32>,
    return
  }
  func.func @transform_0(%arg0: i32) -> (i32, i32, i32) {
    %c0_i32 = arith.constant 0 : i32
    %c0_i32_0 = arith.constant 0 : i32
    %c0_i32_1 = arith.constant 0 : i32
    return %arg0, %c0_i32, %c0_i32_0 : i32, i32, i32
  }
  func.func @transform_1(%arg0: i32) -> (i32, i32, i32) {
    %c0_i32 = arith.constant 0 : i32
    %c0_i32_0 = arith.constant 0 : i32
    %c0_i32_1 = arith.constant 0 : i32
    return %arg0, %c0_i32, %c0_i32_0 : i32, i32, i32
  }
  func.func @transform_2(%arg0: i32) -> (i32, i32, i32) {
    %c0_i32 = arith.constant 0 : i32
    %c0_i32_0 = arith.constant 0 : i32
    %c0_i32_1 = arith.constant 0 : i32
    return %arg0, %c0_i32, %c0_i32_0 : i32, i32, i32
  }
  func.func @transform_3(%arg0: i32) -> (i32, i32, i32) {
    %c0_i32 = arith.constant 0 : i32
    %c0_i32_0 = arith.constant 0 : i32
    %c0_i32_1 = arith.constant 0 : i32
    return %arg0, %c0_i32, %c0_i32_0 : i32, i32, i32
  }
  func.func @transform_4(%arg0: i32) -> (i32, i32, i32) {
    %c0_i32 = arith.constant 0 : i32
    %c0_i32_0 = arith.constant 0 : i32
    %c0_i32_1 = arith.constant 0 : i32
    return %arg0, %c0_i32, %c0_i32_0 : i32, i32, i32
  }
  func.func @transform_5(%arg0: i32) -> (i32, i32, i32, i32) {
    %c0_i32 = arith.constant 0 : i32
    %c0_i32_0 = arith.constant 0 : i32
    %c0_i32_1 = arith.constant 0 : i32
    %c0_i32_2 = arith.constant 0 : i32
    return %arg0, %c0_i32, %c0_i32_0, %c0_i32_1 : i32, i32, i32, i32
  }
  func.func @transform_6(%arg0: i32) -> (i32, i32, i32, i32) {
    %c0_i32 = arith.constant 0 : i32
    %c0_i32_0 = arith.constant 0 : i32
    %c0_i32_1 = arith.constant 0 : i32
    %c0_i32_2 = arith.constant 0 : i32
    return %arg0, %c0_i32, %c0_i32_0, %c0_i32_1 : i32, i32, i32, i32
  }
  func.func @transform_7(%arg0: i32) -> (i32, i32, i32) {
    %c0_i32 = arith.constant 0 : i32
    %c0_i32_0 = arith.constant 0 : i32
    %c0_i32_1 = arith.constant 0 : i32
    return %arg0, %c0_i32, %c0_i32_0 : i32, i32, i32
  }
  func.func @transform_8(%arg0: i32) -> (i32, i32, i32) {
    %c0_i32 = arith.constant 0 : i32
    %c0_i32_0 = arith.constant 0 : i32
    %c0_i32_1 = arith.constant 0 : i32
    return %arg0, %c0_i32, %c0_i32_0 : i32, i32, i32
  }
  func.func @transform_9(%arg0: i32) -> (i32, i32, i32, i32) {
    %c0_i32 = arith.constant 0 : i32
    %c0_i32_0 = arith.constant 0 : i32
    %c0_i32_1 = arith.constant 0 : i32
    %c0_i32_2 = arith.constant 0 : i32
    return %arg0, %c0_i32, %c0_i32_0, %c0_i32_1 : i32, i32, i32, i32
  }
  func.func @transform_10(%arg0: i32) -> (i32, i32, i32, i32) {
    %c0_i32 = arith.constant 0 : i32
    %c0_i32_0 = arith.constant 0 : i32
    %c0_i32_1 = arith.constant 0 : i32
    %c0_i32_2 = arith.constant 0 : i32
    return %arg0, %c0_i32, %c0_i32_0, %c0_i32_1 : i32, i32, i32, i32
  }
  func.func @transform_11(%arg0: i32) -> (i32, i32, i32, i32) {
    %c0_i32 = arith.constant 0 : i32
    %c0_i32_0 = arith.constant 0 : i32
    %c0_i32_1 = arith.constant 0 : i32
    %c0_i32_2 = arith.constant 0 : i32
    return %arg0, %c0_i32, %c0_i32_0, %c0_i32_1 : i32, i32, i32, i32
  }
  func.func @transform_12(%arg0: i32) -> (i32, i32) {
    %c0_i32 = arith.constant 0 : i32
    %c0_i32_0 = arith.constant 0 : i32
    %c0_i32_1 = arith.constant 0 : i32
    return %c0_i32, %c0_i32_0 : i32, i32
  }
  func.func @transform_13(%arg0: i32) -> (i32, i32) {
    %c0_i32 = arith.constant 0 : i32
    %c0_i32_0 = arith.constant 0 : i32
    %c0_i32_1 = arith.constant 0 : i32
    return %c0_i32, %c0_i32_0 : i32, i32
  }
  func.func @transform_14(%arg0: i32) -> (i32, i32) {
    %c0_i32 = arith.constant 0 : i32
    %c0_i32_0 = arith.constant 0 : i32
    %c0_i32_1 = arith.constant 0 : i32
    return %c0_i32, %c0_i32_0 : i32, i32
  }
  func.func @transform_15(%arg0: i32) -> (i32, i32) {
    %c0_i32 = arith.constant 0 : i32
    %c0_i32_0 = arith.constant 0 : i32
    %c0_i32_1 = arith.constant 0 : i32
    return %c0_i32, %c0_i32_0 : i32, i32
  }
  func.func @transform_16(%arg0: i32) -> (i32, i32) {
    %c0_i32 = arith.constant 0 : i32
    %c0_i32_0 = arith.constant 0 : i32
    %c0_i32_1 = arith.constant 0 : i32
    return %c0_i32, %c0_i32_0 : i32, i32
  }
  func.func @transform_17(%arg0: i32) -> (i32, i32) {
    %c0_i32 = arith.constant 0 : i32
    %c0_i32_0 = arith.constant 0 : i32
    %c0_i32_1 = arith.constant 0 : i32
    return %c0_i32, %c0_i32_0 : i32, i32
  }
  func.func @transform_18(%arg0: i32) -> (i32, i32) {
    %c0_i32 = arith.constant 0 : i32
    %c0_i32_0 = arith.constant 0 : i32
    %c0_i32_1 = arith.constant 0 : i32
    return %c0_i32, %c0_i32_0 : i32, i32
  }
  func.func @transform_19(%arg0: i32) -> (i32, i32) {
    %c0_i32 = arith.constant 0 : i32
    %c0_i32_0 = arith.constant 0 : i32
    %c0_i32_1 = arith.constant 0 : i32
    return %c0_i32, %c0_i32_0 : i32, i32
  }
  func.func @transform_20(%arg0: i32) -> (i32, i32) {
    %c0_i32 = arith.constant 0 : i32
    %c0_i32_0 = arith.constant 0 : i32
    %c0_i32_1 = arith.constant 0 : i32
    return %c0_i32, %c0_i32_0 : i32, i32
  }
  func.func @transform_21(%arg0: i32) -> (i32, i32) {
    %c0_i32 = arith.constant 0 : i32
    %c0_i32_0 = arith.constant 0 : i32
    %c0_i32_1 = arith.constant 0 : i32
    return %c0_i32, %c0_i32_0 : i32, i32
  }
  func.func @transform_22(%arg0: i32) -> (i32, i32) {
    %c0_i32 = arith.constant 0 : i32
    %c0_i32_0 = arith.constant 0 : i32
    %c0_i32_1 = arith.constant 0 : i32
    return %c0_i32, %c0_i32_0 : i32, i32
  }
  func.func @transform_23(%arg0: i32) -> (i32, i32) {
    %c0_i32 = arith.constant 0 : i32
    %c0_i32_0 = arith.constant 0 : i32
    %c0_i32_1 = arith.constant 0 : i32
    return %c0_i32, %c0_i32_0 : i32, i32
  }
  func.func @transform_24(%arg0: i32) -> (i32, i32, i32) {
    %c0_i32 = arith.constant 0 : i32
    %c0_i32_0 = arith.constant 0 : i32
    %c0_i32_1 = arith.constant 0 : i32
    return %arg0, %c0_i32, %c0_i32_0 : i32, i32, i32
  }
  func.func @transform_25(%arg0: i32) -> (i32, i32, i32) {
    %c0_i32 = arith.constant 0 : i32
    %c0_i32_0 = arith.constant 0 : i32
    %c0_i32_1 = arith.constant 0 : i32
    return %arg0, %c0_i32, %c0_i32_0 : i32, i32, i32
  }
}

</mosaic_0001>

<llo_original>
// kernel: gcn_classifier_forward.1
$region0: #{gcn_classifier_forward.1}
  #allocation0 [shape = 'u32[]', space=smem, size = 0x4, offset = 0x4, fixed_abs, tag = 'smem constant byte address 0x4 - core index']
  #allocation1 [shape = 'u32[144,128]{1,0:T(1,128)}', space=vmem, size = 0x12000, scoped, tag = 'internal scratch']
  %s0 = inlined_call_operand.vmem [shape: f32[2,16,16], index: 0, kind: input, shape index: {}]
  %s1 = inlined_call_operand.vmem [shape: f32[2,16,1], index: 1, kind: input, shape index: {}]
  %s2 = inlined_call_operand.vmem [shape: f32[2,16,42], index: 2, kind: input, shape index: {}]
  %s3 = inlined_call_operand.vmem [shape: f32[2,16,400], index: 3, kind: input, shape index: {}]
  %s4 = inlined_call_operand.vmem [shape: f32[2,1,768], index: 4, kind: input, shape index: {}]
  %s5 = inlined_call_operand.vmem [shape: f32[2,2,16,1], index: 5, kind: input, shape index: {}]
  %s6 = inlined_call_operand.vmem [shape: f32[2,2,16,1], index: 6, kind: input, shape index: {}]
  %s7 = inlined_call_operand.vmem [shape: f32[2,2,10], index: 7, kind: input, shape index: {}]
  %s8 = inlined_call_operand.vmem [shape: f32[2,2,10], index: 8, kind: input, shape index: {}]
  %s9 = inlined_call_operand.vmem [shape: f32[2,2,8,230], index: 9, kind: input, shape index: {}]
  %s10 = inlined_call_operand.vmem [shape: f32[2,2,8,1], index: 10, kind: input, shape index: {}]
  %s11 = inlined_call_operand.vmem [shape: f32[2,2,8,1], index: 11, kind: input, shape index: {}]
  %s12 = inlined_call_operand.vmem [shape: f32[42,20], index: 12, kind: input, shape index: {}]
  %s13 = inlined_call_operand.vmem [shape: bf16[400,200], index: 13, kind: input, shape index: {}]
  %s14 = inlined_call_operand.vmem [shape: f32[1,200], index: 14, kind: input, shape index: {}]
  %s15 = inlined_call_operand.vmem [shape: bf16[220,200], index: 15, kind: input, shape index: {}]
  %s16 = inlined_call_operand.vmem [shape: f32[1,200], index: 16, kind: input, shape index: {}]
  %s17 = inlined_call_operand.vmem [shape: bf16[768,230], index: 17, kind: input, shape index: {}]
  %s18 = inlined_call_operand.vmem [shape: f32[1,230], index: 18, kind: input, shape index: {}]
  %s19 = inlined_call_operand.vmem [shape: f32[1,230], index: 19, kind: input, shape index: {}]
  %s20 = inlined_call_operand.vmem [shape: f32[1,230], index: 20, kind: input, shape index: {}]
  %s21 = inlined_call_operand.vmem [shape: bf16[230,690], index: 21, kind: input, shape index: {}]
  %s22 = inlined_call_operand.vmem [shape: f32[1150,3], index: 22, kind: input, shape index: {}]
  %s23 = inlined_call_operand.vmem [shape: f32[1,3], index: 23, kind: input, shape index: {}]
  %s24 = inlined_call_operand.hbm [shape: f32[2,2,3], index: 24, kind: output, shape index: {0}]
  %s25 = inlined_call_operand.hbm [shape: f32[2,1,220], index: 25, kind: output, shape index: {1}]
  %26 = xla_tuple %s24, %s25
  %s27 = sld [smem:[#allocation0]]
  $region137: #{gcn_classifier_forward.1} parent=0
    _
  %s29 = ssub.s32 1, %s27
  %s30 = scalar_select 0, %s29, %s27
  $region1: #{gcn_classifier_forward.1} parent=0
    #allocation2 [shape = 'u8[2048]{0}', space=vmem, size = 0x800, scoped, tag = 'output window, operand 0']
    #allocation3 [shape = 's32[2]{0}', space=sflag, size = 0x8, scoped, tag = 'scoped memory for gcn_classifier_forward.1']
    #allocation4 [shape = 'u8[2048]{0}', space=vmem, size = 0x800, scoped, tag = 'output window, operand 1']
    #allocation5 [shape = 's32[2]{0}', space=sflag, size = 0x8, scoped, tag = 'scoped memory for gcn_classifier_forward.1']
    %31 = vsyncpa [#allocation3], 0
    %s32 = scalar_lea.sflag [#allocation3], 1
    %33 = vsyncpa %s32, 0
    %34 = vsyncpa [#allocation5], 0
    %s35 = scalar_lea.sflag [#allocation5], 1
    %36 = vsyncpa %s35, 0
    loop: start=0, step=1, limit=4
    $region2: #{gcn_classifier_forward.1} parent=1 // loop_pre_header
      _
    $region3: #{gcn_classifier_forward.1} parent=1 // loop_header
      %s38 = sphi 0, %s42
      %p39 = scmp.ge.s32.totalorder %s38, 4
      %s48 = sphi 0, %s50
      %s51 = sphi 0, %s48
      %s52 = sphi 0, %s51
      %s68 = sphi 0, %s52
      %s74 = sphi 0, %s76
      %s77 = sphi 0, %s74
      %s78 = sphi 0, %s77
      %s94 = sphi 0, %s78
      %s100 = sphi 0, %s102
      %s103 = sphi 0, %s100
      %s104 = sphi 0, %s103
      %s120 = sphi 0, %s104
      %s126 = sphi 0, %s128
      %s129 = sphi 0, %s126
      %s130 = sphi 0, %s129
      %s146 = sphi 0, %s130
      %s152 = sphi 0, %s154
      %s155 = sphi 0, %s152
      %s156 = sphi 0, %s155
      %s172 = sphi 0, %s156
      %s178 = sphi 0, %s180
      %s181 = sphi 0, %s178
      %s182 = sphi 0, %s181
      %s198 = sphi 0, %s182
      %s204 = sphi 0, %s206
      %s207 = sphi 0, %s204
      %s208 = sphi 0, %s207
      %s224 = sphi 0, %s208
      %s230 = sphi 0, %s232
      %s233 = sphi 0, %s230
      %s234 = sphi 0, %s233
      %s250 = sphi 0, %s234
      %s256 = sphi 0, %s258
      %s259 = sphi 0, %s256
      %s260 = sphi 0, %s259
      %s276 = sphi 0, %s260
      %s282 = sphi 0, %s284
      %s285 = sphi 0, %s282
      %s286 = sphi 0, %s285
      %s302 = sphi 0, %s286
      %s308 = sphi 0, %s310
      %s311 = sphi 0, %s308
      %s312 = sphi 0, %s311
      %s328 = sphi 0, %s312
      %s334 = sphi 0, %s336
      %s337 = sphi 0, %s334
      %s338 = sphi 0, %s337
      %s354 = sphi 0, %s338
      %s358 = sphi 0, %s358
      %s360 = sphi 0, %s358
      %s361 = sphi 0, %s360
      %s375 = sphi 0, %s361
      %s379 = sphi 0, %s379
      %s381 = sphi 0, %s379
      %s382 = sphi 0, %s381
      %s396 = sphi 0, %s382
      %s400 = sphi 0, %s400
      %s402 = sphi 0, %s400
      %s403 = sphi 0, %s402
      %s417 = sphi 0, %s403
      %s421 = sphi 0, %s421
      %s423 = sphi 0, %s421
      %s424 = sphi 0, %s423
      %s438 = sphi 0, %s424
      %s442 = sphi 0, %s442
      %s444 = sphi 0, %s442
      %s445 = sphi 0, %s444
      %s459 = sphi 0, %s445
      %s463 = sphi 0, %s463
      %s465 = sphi 0, %s463
      %s466 = sphi 0, %s465
      %s480 = sphi 0, %s466
      %s484 = sphi 0, %s484
      %s486 = sphi 0, %s484
      %s487 = sphi 0, %s486
      %s501 = sphi 0, %s487
      %s505 = sphi 0, %s505
      %s507 = sphi 0, %s505
      %s508 = sphi 0, %s507
      %s522 = sphi 0, %s508
      %s526 = sphi 0, %s526
      %s528 = sphi 0, %s526
      %s529 = sphi 0, %s528
      %s543 = sphi 0, %s529
      %s547 = sphi 0, %s547
      %s549 = sphi 0, %s547
      %s550 = sphi 0, %s549
      %s564 = sphi 0, %s550
      %s568 = sphi 0, %s568
      %s570 = sphi 0, %s568
      %s571 = sphi 0, %s570
      %s585 = sphi 0, %s571
      %s589 = sphi 0, %s589
      %s591 = sphi 0, %s589
      %s592 = sphi 0, %s591
      %s606 = sphi 0, %s592
      %s612 = sphi 0, %s614
      %s615 = sphi 0, %s612
      %s616 = sphi 0, %s615
      %s632 = sphi 0, %s616
      %s638 = sphi 0, %s640
      %s641 = sphi 0, %s638
      %s642 = sphi 0, %s641
      %s658 = sphi 0, %s642
    $region4: #{gcn_classifier_forward.1} parent=1 // loop_header_branch
      %41 = sbr.rel (%p39) target = $region8
    $region5: #{gcn_classifier_forward.1} parent=1 // loop_body
      %s43 = ssub.s32 %s38, 1
      %s44 = ssub.s32 %s38, 2
      %s45 = sadd.s32 %s38, 1
      %s46 = ssub.s32 %s38, %s45
      %p47 = scmp.eq.s32.totalorder %s46, 0
      %s49 = sadd.s32 %s48, 1
      %s50 = scalar_select %p47, %s48, %s49
      %p53 = pneg %p47
      %p54 = scmp.eq.s32.totalorder %s38, 1
      %p55 = por %p53, %p54
      %p56 = scmp.ne.s32.totalorder %s48, %s51
      %p57 = scmp.eq.s32.totalorder %s38, 0
      %p58 = por %p56, %p57
      %p59 = scmp.ne.s32.totalorder %s48, %s51
      %p60 = scmp.eq.s32.totalorder %s43, 1
      %p61 = por %p59, %p60
      %p62 = scmp.ne.s32.totalorder %s51, %s52
      %p63 = scmp.eq.s32.totalorder %s43, 0
      %p64 = por %p62, %p63
      %p65 = scmp.ne.s32.totalorder %s51, %s52
      %p66 = scmp.eq.s32.totalorder %s44, 1
      %p67 = por %p65, %p66
      %p69 = scmp.ne.s32.totalorder %s52, %s68
      %p70 = scmp.eq.s32.totalorder %s44, 0
      %p71 = por %p69, %p70
      %s72 = ssub.s32 %s38, %s45
      %p73 = scmp.eq.s32.totalorder %s72, 0
      %s75 = sadd.s32 %s74, 1
      %s76 = scalar_select %p73, %s74, %s75
      %p79 = pneg %p73
      %p80 = scmp.eq.s32.totalorder %s38, 1
      %p81 = por %p79, %p80
      %p82 = scmp.ne.s32.totalorder %s74, %s77
      %p83 = scmp.eq.s32.totalorder %s38, 0
      %p84 = por %p82, %p83
      %p85 = scmp.ne.s32.totalorder %s74, %s77
      %p86 = scmp.eq.s32.totalorder %s43, 1
      %p87 = por %p85, %p86
      %p88 = scmp.ne.s32.totalorder %s77, %s78
      %p89 = scmp.eq.s32.totalorder %s43, 0
      %p90 = por %p88, %p89
      %p91 = scmp.ne.s32.totalorder %s77, %s78
      %p92 = scmp.eq.s32.totalorder %s44, 1
      %p93 = por %p91, %p92
      %p95 = scmp.ne.s32.totalorder %s78, %s94
      %p96 = scmp.eq.s32.totalorder %s44, 0
      %p97 = por %p95, %p96
      %s98 = ssub.s32 %s38, %s45
      %p99 = scmp.eq.s32.totalorder %s98, 0
      %s101 = sadd.s32 %s100, 1
      %s102 = scalar_select %p99, %s100, %s101
      %p105 = pneg %p99
      %p106 = scmp.eq.s32.totalorder %s38, 1
      %p107 = por %p105, %p106
      %p108 = scmp.ne.s32.totalorder %s100, %s103
      %p109 = scmp.eq.s32.totalorder %s38, 0
      %p110 = por %p108, %p109
      %p111 = scmp.ne.s32.totalorder %s100, %s103
      %p112 = scmp.eq.s32.totalorder %s43, 1
      %p113 = por %p111, %p112
      %p114 = scmp.ne.s32.totalorder %s103, %s104
      %p115 = scmp.eq.s32.totalorder %s43, 0
      %p116 = por %p114, %p115
      %p117 = scmp.ne.s32.totalorder %s103, %s104
      %p118 = scmp.eq.s32.totalorder %s44, 1
      %p119 = por %p117, %p118
      %p121 = scmp.ne.s32.totalorder %s104, %s120
      %p122 = scmp.eq.s32.totalorder %s44, 0
      %p123 = por %p121, %p122
      %s124 = ssub.s32 %s38, %s45
      %p125 = scmp.eq.s32.totalorder %s124, 0
      %s127 = sadd.s32 %s126, 1
      %s128 = scalar_select %p125, %s126, %s127
      %p131 = pneg %p125
      %p132 = scmp.eq.s32.totalorder %s38, 1
      %p133 = por %p131, %p132
      %p134 = scmp.ne.s32.totalorder %s126, %s129
      %p135 = scmp.eq.s32.totalorder %s38, 0
      %p136 = por %p134, %p135
      %p137 = scmp.ne.s32.totalorder %s126, %s129
      %p138 = scmp.eq.s32.totalorder %s43, 1
      %p139 = por %p137, %p138
      %p140 = scmp.ne.s32.totalorder %s129, %s130
      %p141 = scmp.eq.s32.totalorder %s43, 0
      %p142 = por %p140, %p141
      %p143 = scmp.ne.s32.totalorder %s129, %s130
      %p144 = scmp.eq.s32.totalorder %s44, 1
      %p145 = por %p143, %p144
      %p147 = scmp.ne.s32.totalorder %s130, %s146
      %p148 = scmp.eq.s32.totalorder %s44, 0
      %p149 = por %p147, %p148
      %s150 = ssub.s32 %s38, %s45
      %p151 = scmp.eq.s32.totalorder %s150, 0
      %s153 = sadd.s32 %s152, 1
      %s154 = scalar_select %p151, %s152, %s153
      %p157 = pneg %p151
      %p158 = scmp.eq.s32.totalorder %s38, 1
      %p159 = por %p157, %p158
      %p160 = scmp.ne.s32.totalorder %s152, %s155
      %p161 = scmp.eq.s32.totalorder %s38, 0
      %p162 = por %p160, %p161
      %p163 = scmp.ne.s32.totalorder %s152, %s155
      %p164 = scmp.eq.s32.totalorder %s43, 1
      %p165 = por %p163, %p164
      %p166 = scmp.ne.s32.totalorder %s155, %s156
      %p167 = scmp.eq.s32.totalorder %s43, 0
      %p168 = por %p166, %p167
      %p169 = scmp.ne.s32.totalorder %s155, %s156
      %p170 = scmp.eq.s32.totalorder %s44, 1
      %p171 = por %p169, %p170
      %p173 = scmp.ne.s32.totalorder %s156, %s172
      %p174 = scmp.eq.s32.totalorder %s44, 0
      %p175 = por %p173, %p174
      %s176 = ssub.s32 %s38, %s45
      %p177 = scmp.eq.s32.totalorder %s176, 0
      %s179 = sadd.s32 %s178, 1
      %s180 = scalar_select %p177, %s178, %s179
      %p183 = pneg %p177
      %p184 = scmp.eq.s32.totalorder %s38, 1
      %p185 = por %p183, %p184
      %p186 = scmp.ne.s32.totalorder %s178, %s181
      %p187 = scmp.eq.s32.totalorder %s38, 0
      %p188 = por %p186, %p187
      %p189 = scmp.ne.s32.totalorder %s178, %s181
      %p190 = scmp.eq.s32.totalorder %s43, 1
      %p191 = por %p189, %p190
      %p192 = scmp.ne.s32.totalorder %s181, %s182
      %p193 = scmp.eq.s32.totalorder %s43, 0
      %p194 = por %p192, %p193
      %p195 = scmp.ne.s32.totalorder %s181, %s182
      %p196 = scmp.eq.s32.totalorder %s44, 1
      %p197 = por %p195, %p196
      %p199 = scmp.ne.s32.totalorder %s182, %s198
      %p200 = scmp.eq.s32.totalorder %s44, 0
      %p201 = por %p199, %p200
      %s202 = ssub.s32 %s38, %s45
      %p203 = scmp.eq.s32.totalorder %s202, 0
      %s205 = sadd.s32 %s204, 1
      %s206 = scalar_select %p203, %s204, %s205
      %p209 = pneg %p203
      %p210 = scmp.eq.s32.totalorder %s38, 1
      %p211 = por %p209, %p210
      %p212 = scmp.ne.s32.totalorder %s204, %s207
      %p213 = scmp.eq.s32.totalorder %s38, 0
      %p214 = por %p212, %p213
      %p215 = scmp.ne.s32.totalorder %s204, %s207
      %p216 = scmp.eq.s32.totalorder %s43, 1
      %p217 = por %p215, %p216
      %p218 = scmp.ne.s32.totalorder %s207, %s208
      %p219 = scmp.eq.s32.totalorder %s43, 0
      %p220 = por %p218, %p219
      %p221 = scmp.ne.s32.totalorder %s207, %s208
      %p222 = scmp.eq.s32.totalorder %s44, 1
      %p223 = por %p221, %p222
      %p225 = scmp.ne.s32.totalorder %s208, %s224
      %p226 = scmp.eq.s32.totalorder %s44, 0
      %p227 = por %p225, %p226
      %s228 = ssub.s32 %s38, %s45
      %p229 = scmp.eq.s32.totalorder %s228, 0
      %s231 = sadd.s32 %s230, 1
      %s232 = scalar_select %p229, %s230, %s231
      %p235 = pneg %p229
      %p236 = scmp.eq.s32.totalorder %s38, 1
      %p237 = por %p235, %p236
      %p238 = scmp.ne.s32.totalorder %s230, %s233
      %p239 = scmp.eq.s32.totalorder %s38, 0
      %p240 = por %p238, %p239
      %p241 = scmp.ne.s32.totalorder %s230, %s233
      %p242 = scmp.eq.s32.totalorder %s43, 1
      %p243 = por %p241, %p242
      %p244 = scmp.ne.s32.totalorder %s233, %s234
      %p245 = scmp.eq.s32.totalorder %s43, 0
      %p246 = por %p244, %p245
      %p247 = scmp.ne.s32.totalorder %s233, %s234
      %p248 = scmp.eq.s32.totalorder %s44, 1
      %p249 = por %p247, %p248
      %p251 = scmp.ne.s32.totalorder %s234, %s250
      %p252 = scmp.eq.s32.totalorder %s44, 0
      %p253 = por %p251, %p252
      %s254 = ssub.s32 %s38, %s45
      %p255 = scmp.eq.s32.totalorder %s254, 0
      %s257 = sadd.s32 %s256, 1
      %s258 = scalar_select %p255, %s256, %s257
      %p261 = pneg %p255
      %p262 = scmp.eq.s32.totalorder %s38, 1
      %p263 = por %p261, %p262
      %p264 = scmp.ne.s32.totalorder %s256, %s259
      %p265 = scmp.eq.s32.totalorder %s38, 0
      %p266 = por %p264, %p265
      %p267 = scmp.ne.s32.totalorder %s256, %s259
      %p268 = scmp.eq.s32.totalorder %s43, 1
      %p269 = por %p267, %p268
      %p270 = scmp.ne.s32.totalorder %s259, %s260
      %p271 = scmp.eq.s32.totalorder %s43, 0
      %p272 = por %p270, %p271
      %p273 = scmp.ne.s32.totalorder %s259, %s260
      %p274 = scmp.eq.s32.totalorder %s44, 1
      %p275 = por %p273, %p274
      %p277 = scmp.ne.s32.totalorder %s260, %s276
      %p278 = scmp.eq.s32.totalorder %s44, 0
      %p279 = por %p277, %p278
      %s280 = ssub.s32 %s38, %s45
      %p281 = scmp.eq.s32.totalorder %s280, 0
      %s283 = sadd.s32 %s282, 1
      %s284 = scalar_select %p281, %s282, %s283
      %p287 = pneg %p281
      %p288 = scmp.eq.s32.totalorder %s38, 1
      %p289 = por %p287, %p288
      %p290 = scmp.ne.s32.totalorder %s282, %s285
      %p291 = scmp.eq.s32.totalorder %s38, 0
      %p292 = por %p290, %p291
      %p293 = scmp.ne.s32.totalorder %s282, %s285
      %p294 = scmp.eq.s32.totalorder %s43, 1
      %p295 = por %p293, %p294
      %p296 = scmp.ne.s32.totalorder %s285, %s286
      %p297 = scmp.eq.s32.totalorder %s43, 0
      %p298 = por %p296, %p297
      %p299 = scmp.ne.s32.totalorder %s285, %s286
      %p300 = scmp.eq.s32.totalorder %s44, 1
      %p301 = por %p299, %p300
      %p303 = scmp.ne.s32.totalorder %s286, %s302
      %p304 = scmp.eq.s32.totalorder %s44, 0
      %p305 = por %p303, %p304
      %s306 = ssub.s32 %s38, %s45
      %p307 = scmp.eq.s32.totalorder %s306, 0
      %s309 = sadd.s32 %s308, 1
      %s310 = scalar_select %p307, %s308, %s309
      %p313 = pneg %p307
      %p314 = scmp.eq.s32.totalorder %s38, 1
      %p315 = por %p313, %p314
      %p316 = scmp.ne.s32.totalorder %s308, %s311
      %p317 = scmp.eq.s32.totalorder %s38, 0
      %p318 = por %p316, %p317
      %p319 = scmp.ne.s32.totalorder %s308, %s311
      %p320 = scmp.eq.s32.totalorder %s43, 1
      %p321 = por %p319, %p320
      %p322 = scmp.ne.s32.totalorder %s311, %s312
      %p323 = scmp.eq.s32.totalorder %s43, 0
      %p324 = por %p322, %p323
      %p325 = scmp.ne.s32.totalorder %s311, %s312
      %p326 = scmp.eq.s32.totalorder %s44, 1
      %p327 = por %p325, %p326
      %p329 = scmp.ne.s32.totalorder %s312, %s328
      %p330 = scmp.eq.s32.totalorder %s44, 0
      %p331 = por %p329, %p330
      %s332 = ssub.s32 %s38, %s45
      %p333 = scmp.eq.s32.totalorder %s332, 0
      %s335 = sadd.s32 %s334, 1
      %s336 = scalar_select %p333, %s334, %s335
      %p339 = pneg %p333
      %p340 = scmp.eq.s32.totalorder %s38, 1
      %p341 = por %p339, %p340
      %p342 = scmp.ne.s32.totalorder %s334, %s337
      %p343 = scmp.eq.s32.totalorder %s38, 0
      %p344 = por %p342, %p343
      %p345 = scmp.ne.s32.totalorder %s334, %s337
      %p346 = scmp.eq.s32.totalorder %s43, 1
      %p347 = por %p345, %p346
      %p348 = scmp.ne.s32.totalorder %s337, %s338
      %p349 = scmp.eq.s32.totalorder %s43, 0
      %p350 = por %p348, %p349
      %p351 = scmp.ne.s32.totalorder %s337, %s338
      %p352 = scmp.eq.s32.totalorder %s44, 1
      %p353 = por %p351, %p352
      %p355 = scmp.ne.s32.totalorder %s338, %s354
      %p356 = scmp.eq.s32.totalorder %s44, 0
      %p357 = por %p355, %p356
      %s359 = sadd.s32 %s358, 1
      %p362 = scmp.eq.s32.totalorder %s38, 1
      %p363 = scmp.ne.s32.totalorder %s358, %s360
      %p364 = scmp.eq.s32.totalorder %s38, 0
      %p365 = por %p363, %p364
      %p366 = scmp.ne.s32.totalorder %s358, %s360
      %p367 = scmp.eq.s32.totalorder %s43, 1
      %p368 = por %p366, %p367
      %p369 = scmp.ne.s32.totalorder %s360, %s361
      %p370 = scmp.eq.s32.totalorder %s43, 0
      %p371 = por %p369, %p370
      %p372 = scmp.ne.s32.totalorder %s360, %s361
      %p373 = scmp.eq.s32.totalorder %s44, 1
      %p374 = por %p372, %p373
      %p376 = scmp.ne.s32.totalorder %s361, %s375
      %p377 = scmp.eq.s32.totalorder %s44, 0
      %p378 = por %p376, %p377
      %s380 = sadd.s32 %s379, 1
      %p383 = scmp.eq.s32.totalorder %s38, 1
      %p384 = scmp.ne.s32.totalorder %s379, %s381
      %p385 = scmp.eq.s32.totalorder %s38, 0
      %p386 = por %p384, %p385
      %p387 = scmp.ne.s32.totalorder %s379, %s381
      %p388 = scmp.eq.s32.totalorder %s43, 1
      %p389 = por %p387, %p388
      %p390 = scmp.ne.s32.totalorder %s381, %s382
      %p391 = scmp.eq.s32.totalorder %s43, 0
      %p392 = por %p390, %p391
      %p393 = scmp.ne.s32.totalorder %s381, %s382
      %p394 = scmp.eq.s32.totalorder %s44, 1
      %p395 = por %p393, %p394
      %p397 = scmp.ne.s32.totalorder %s382, %s396
      %p398 = scmp.eq.s32.totalorder %s44, 0
      %p399 = por %p397, %p398
      %s401 = sadd.s32 %s400, 1
      %p404 = scmp.eq.s32.totalorder %s38, 1
      %p405 = scmp.ne.s32.totalorder %s400, %s402
      %p406 = scmp.eq.s32.totalorder %s38, 0
      %p407 = por %p405, %p406
      %p408 = scmp.ne.s32.totalorder %s400, %s402
      %p409 = scmp.eq.s32.totalorder %s43, 1
      %p410 = por %p408, %p409
      %p411 = scmp.ne.s32.totalorder %s402, %s403
      %p412 = scmp.eq.s32.totalorder %s43, 0
      %p413 = por %p411, %p412
      %p414 = scmp.ne.s32.totalorder %s402, %s403
      %p415 = scmp.eq.s32.totalorder %s44, 1
      %p416 = por %p414, %p415
      %p418 = scmp.ne.s32.totalorder %s403, %s417
      %p419 = scmp.eq.s32.totalorder %s44, 0
      %p420 = por %p418, %p419
      %s422 = sadd.s32 %s421, 1
      %p425 = scmp.eq.s32.totalorder %s38, 1
      %p426 = scmp.ne.s32.totalorder %s421, %s423
      %p427 = scmp.eq.s32.totalorder %s38, 0
      %p428 = por %p426, %p427
      %p429 = scmp.ne.s32.totalorder %s421, %s423
      %p430 = scmp.eq.s32.totalorder %s43, 1
      %p431 = por %p429, %p430
      %p432 = scmp.ne.s32.totalorder %s423, %s424
      %p433 = scmp.eq.s32.totalorder %s43, 0
      %p434 = por %p432, %p433
      %p435 = scmp.ne.s32.totalorder %s423, %s424
      %p436 = scmp.eq.s32.totalorder %s44, 1
      %p437 = por %p435, %p436
      %p439 = scmp.ne.s32.totalorder %s424, %s438
      %p440 = scmp.eq.s32.totalorder %s44, 0
      %p441 = por %p439, %p440
      %s443 = sadd.s32 %s442, 1
      %p446 = scmp.eq.s32.totalorder %s38, 1
      %p447 = scmp.ne.s32.totalorder %s442, %s444
      %p448 = scmp.eq.s32.totalorder %s38, 0
      %p449 = por %p447, %p448
      %p450 = scmp.ne.s32.totalorder %s442, %s444
      %p451 = scmp.eq.s32.totalorder %s43, 1
      %p452 = por %p450, %p451
      %p453 = scmp.ne.s32.totalorder %s444, %s445
      %p454 = scmp.eq.s32.totalorder %s43, 0
      %p455 = por %p453, %p454
      %p456 = scmp.ne.s32.totalorder %s444, %s445
      %p457 = scmp.eq.s32.totalorder %s44, 1
      %p458 = por %p456, %p457
      %p460 = scmp.ne.s32.totalorder %s445, %s459
      %p461 = scmp.eq.s32.totalorder %s44, 0
      %p462 = por %p460, %p461
      %s464 = sadd.s32 %s463, 1
      %p467 = scmp.eq.s32.totalorder %s38, 1
      %p468 = scmp.ne.s32.totalorder %s463, %s465
      %p469 = scmp.eq.s32.totalorder %s38, 0
      %p470 = por %p468, %p469
      %p471 = scmp.ne.s32.totalorder %s463, %s465
      %p472 = scmp.eq.s32.totalorder %s43, 1
      %p473 = por %p471, %p472
      %p474 = scmp.ne.s32.totalorder %s465, %s466
      %p475 = scmp.eq.s32.totalorder %s43, 0
      %p476 = por %p474, %p475
      %p477 = scmp.ne.s32.totalorder %s465, %s466
      %p478 = scmp.eq.s32.totalorder %s44, 1
      %p479 = por %p477, %p478
      %p481 = scmp.ne.s32.totalorder %s466, %s480
      %p482 = scmp.eq.s32.totalorder %s44, 0
      %p483 = por %p481, %p482
      %s485 = sadd.s32 %s484, 1
      %p488 = scmp.eq.s32.totalorder %s38, 1
      %p489 = scmp.ne.s32.totalorder %s484, %s486
      %p490 = scmp.eq.s32.totalorder %s38, 0
      %p491 = por %p489, %p490
      %p492 = scmp.ne.s32.totalorder %s484, %s486
      %p493 = scmp.eq.s32.totalorder %s43, 1
      %p494 = por %p492, %p493
      %p495 = scmp.ne.s32.totalorder %s486, %s487
      %p496 = scmp.eq.s32.totalorder %s43, 0
      %p497 = por %p495, %p496
      %p498 = scmp.ne.s32.totalorder %s486, %s487
      %p499 = scmp.eq.s32.totalorder %s44, 1
      %p500 = por %p498, %p499
      %p502 = scmp.ne.s32.totalorder %s487, %s501
      %p503 = scmp.eq.s32.totalorder %s44, 0
      %p504 = por %p502, %p503
      %s506 = sadd.s32 %s505, 1
      %p509 = scmp.eq.s32.totalorder %s38, 1
      %p510 = scmp.ne.s32.totalorder %s505, %s507
      %p511 = scmp.eq.s32.totalorder %s38, 0
      %p512 = por %p510, %p511
      %p513 = scmp.ne.s32.totalorder %s505, %s507
      %p514 = scmp.eq.s32.totalorder %s43, 1
      %p515 = por %p513, %p514
      %p516 = scmp.ne.s32.totalorder %s507, %s508
      %p517 = scmp.eq.s32.totalorder %s43, 0
      %p518 = por %p516, %p517
      %p519 = scmp.ne.s32.totalorder %s507, %s508
      %p520 = scmp.eq.s32.totalorder %s44, 1
      %p521 = por %p519, %p520
      %p523 = scmp.ne.s32.totalorder %s508, %s522
      %p524 = scmp.eq.s32.totalorder %s44, 0
      %p525 = por %p523, %p524
      %s527 = sadd.s32 %s526, 1
      %p530 = scmp.eq.s32.totalorder %s38, 1
      %p531 = scmp.ne.s32.totalorder %s526, %s528
      %p532 = scmp.eq.s32.totalorder %s38, 0
      %p533 = por %p531, %p532
      %p534 = scmp.ne.s32.totalorder %s526, %s528
      %p535 = scmp.eq.s32.totalorder %s43, 1
      %p536 = por %p534, %p535
      %p537 = scmp.ne.s32.totalorder %s528, %s529
      %p538 = scmp.eq.s32.totalorder %s43, 0
      %p539 = por %p537, %p538
      %p540 = scmp.ne.s32.totalorder %s528, %s529
      %p541 = scmp.eq.s32.totalorder %s44, 1
      %p542 = por %p540, %p541
      %p544 = scmp.ne.s32.totalorder %s529, %s543
      %p545 = scmp.eq.s32.totalorder %s44, 0
      %p546 = por %p544, %p545
      %s548 = sadd.s32 %s547, 1
      %p551 = scmp.eq.s32.totalorder %s38, 1
      %p552 = scmp.ne.s32.totalorder %s547, %s549
      %p553 = scmp.eq.s32.totalorder %s38, 0
      %p554 = por %p552, %p553
      %p555 = scmp.ne.s32.totalorder %s547, %s549
      %p556 = scmp.eq.s32.totalorder %s43, 1
      %p557 = por %p555, %p556
      %p558 = scmp.ne.s32.totalorder %s549, %s550
      %p559 = scmp.eq.s32.totalorder %s43, 0
      %p560 = por %p558, %p559
      %p561 = scmp.ne.s32.totalorder %s549, %s550
      %p562 = scmp.eq.s32.totalorder %s44, 1
      %p563 = por %p561, %p562
      %p565 = scmp.ne.s32.totalorder %s550, %s564
      %p566 = scmp.eq.s32.totalorder %s44, 0
      %p567 = por %p565, %p566
      %s569 = sadd.s32 %s568, 1
      %p572 = scmp.eq.s32.totalorder %s38, 1
      %p573 = scmp.ne.s32.totalorder %s568, %s570
      %p574 = scmp.eq.s32.totalorder %s38, 0
      %p575 = por %p573, %p574
      %p576 = scmp.ne.s32.totalorder %s568, %s570
      %p577 = scmp.eq.s32.totalorder %s43, 1
      %p578 = por %p576, %p577
      %p579 = scmp.ne.s32.totalorder %s570, %s571
      %p580 = scmp.eq.s32.totalorder %s43, 0
      %p581 = por %p579, %p580
      %p582 = scmp.ne.s32.totalorder %s570, %s571
      %p583 = scmp.eq.s32.totalorder %s44, 1
      %p584 = por %p582, %p583
      %p586 = scmp.ne.s32.totalorder %s571, %s585
      %p587 = scmp.eq.s32.totalorder %s44, 0
      %p588 = por %p586, %p587
      %s590 = sadd.s32 %s589, 1
      %p593 = scmp.eq.s32.totalorder %s38, 1
      %p594 = scmp.ne.s32.totalorder %s589, %s591
      %p595 = scmp.eq.s32.totalorder %s38, 0
      %p596 = por %p594, %p595
      %p597 = scmp.ne.s32.totalorder %s589, %s591
      %p598 = scmp.eq.s32.totalorder %s43, 1
      %p599 = por %p597, %p598
      %p600 = scmp.ne.s32.totalorder %s591, %s592
      %p601 = scmp.eq.s32.totalorder %s43, 0
      %p602 = por %p600, %p601
      %p603 = scmp.ne.s32.totalorder %s591, %s592
      %p604 = scmp.eq.s32.totalorder %s44, 1
      %p605 = por %p603, %p604
      %p607 = scmp.ne.s32.totalorder %s592, %s606
      %p608 = scmp.eq.s32.totalorder %s44, 0
      %p609 = por %p607, %p608
      %s610 = ssub.s32 %s38, %s45
      %p611 = scmp.eq.s32.totalorder %s610, 0
      %s613 = sadd.s32 %s612, 1
      %s614 = scalar_select %p611, %s612, %s613
      %p617 = pneg %p611
      %p618 = scmp.eq.s32.totalorder %s38, 1
      %p619 = por %p617, %p618
      %p620 = scmp.ne.s32.totalorder %s612, %s615
      %p621 = scmp.eq.s32.totalorder %s38, 0
      %p622 = por %p620, %p621
      %p623 = scmp.ne.s32.totalorder %s612, %s615
      %p624 = scmp.eq.s32.totalorder %s43, 1
      %p625 = por %p623, %p624
      %p626 = scmp.ne.s32.totalorder %s615, %s616
      %p627 = scmp.eq.s32.totalorder %s43, 0
      %p628 = por %p626, %p627
      %p629 = scmp.ne.s32.totalorder %s615, %s616
      %p630 = scmp.eq.s32.totalorder %s44, 1
      %p631 = por %p629, %p630
      %p633 = scmp.ne.s32.totalorder %s616, %s632
      %p634 = scmp.eq.s32.totalorder %s44, 0
      %p635 = por %p633, %p634
      %s636 = ssub.s32 %s38, %s45
      %p637 = scmp.eq.s32.totalorder %s636, 0
      %s639 = sadd.s32 %s638, 1
      %s640 = scalar_select %p637, %s638, %s639
      %p643 = pneg %p637
      %p644 = scmp.eq.s32.totalorder %s38, 1
      %p645 = por %p643, %p644
      %p646 = scmp.ne.s32.totalorder %s638, %s641
      %p647 = scmp.eq.s32.totalorder %s38, 0
      %p648 = por %p646, %p647
      %p649 = scmp.ne.s32.totalorder %s638, %s641
      %p650 = scmp.eq.s32.totalorder %s43, 1
      %p651 = por %p649, %p650
      %p652 = scmp.ne.s32.totalorder %s641, %s642
      %p653 = scmp.eq.s32.totalorder %s43, 0
      %p654 = por %p652, %p653
      %p655 = scmp.ne.s32.totalorder %s641, %s642
      %p656 = scmp.eq.s32.totalorder %s44, 1
      %p657 = por %p655, %p656
      %p659 = scmp.ne.s32.totalorder %s642, %s658
      %p660 = scmp.eq.s32.totalorder %s44, 0
      %p661 = por %p659, %p660
      %p662 = scmp.le.s32.totalorder 1, %s38
      %p663 = scmp.lt.s32.totalorder %s38, 3
      %p664 = pnand %p662, %p663
      %p665 = pneg %p664
      // Predicated region
      $region9: #{gcn_classifier_forward.1} parent=5 // pred_check
        _
      $region10: #{gcn_classifier_forward.1} parent=5 // pred_check_branch
        %667 = sbr.rel (%p664) target = $region12
      $region11: #{gcn_classifier_forward.1} parent=5 // pred_region
        %s668 = ssub.s32 %s38, 1
        // Predicated region
        $region13: #{gcn_classifier_forward.1} parent=11 // pred_check
          %p669 = pneg %p371
        $region14: #{gcn_classifier_forward.1} parent=11 // pred_check_branch
          %671 = sbr.rel (%p669) target = $region16
        $region15: #{gcn_classifier_forward.1} parent=11 // pred_region
          _
        $region16: #{gcn_classifier_forward.1} parent=11 // pred_fallthru
          _
        // Predicated region
        $region17: #{gcn_classifier_forward.1} parent=11 // pred_check
          %p672 = pneg %p392
        $region18: #{gcn_classifier_forward.1} parent=11 // pred_check_branch
          %674 = sbr.rel (%p672) target = $region20
        $region19: #{gcn_classifier_forward.1} parent=11 // pred_region
          _
        $region20: #{gcn_classifier_forward.1} parent=11 // pred_fallthru
          _
        // Predicated region
        $region21: #{gcn_classifier_forward.1} parent=11 // pred_check
          %p675 = pneg %p413
        $region22: #{gcn_classifier_forward.1} parent=11 // pred_check_branch
          %677 = sbr.rel (%p675) target = $region24
        $region23: #{gcn_classifier_forward.1} parent=11 // pred_region
          _
        $region24: #{gcn_classifier_forward.1} parent=11 // pred_fallthru
          _
        // Predicated region
        $region25: #{gcn_classifier_forward.1} parent=11 // pred_check
          %p678 = pneg %p434
        $region26: #{gcn_classifier_forward.1} parent=11 // pred_check_branch
          %680 = sbr.rel (%p678) target = $region28
        $region27: #{gcn_classifier_forward.1} parent=11 // pred_region
          _
        $region28: #{gcn_classifier_forward.1} parent=11 // pred_fallthru
          _
        // Predicated region
        $region29: #{gcn_classifier_forward.1} parent=11 // pred_check
          %p681 = pneg %p455
        $region30: #{gcn_classifier_forward.1} parent=11 // pred_check_branch
          %683 = sbr.rel (%p681) target = $region32
        $region31: #{gcn_classifier_forward.1} parent=11 // pred_region
          _
        $region32: #{gcn_classifier_forward.1} parent=11 // pred_fallthru
          _
        // Predicated region
        $region33: #{gcn_classifier_forward.1} parent=11 // pred_check
          %p684 = pneg %p476
        $region34: #{gcn_classifier_forward.1} parent=11 // pred_check_branch
          %686 = sbr.rel (%p684) target = $region36
        $region35: #{gcn_classifier_forward.1} parent=11 // pred_region
          _
        $region36: #{gcn_classifier_forward.1} parent=11 // pred_fallthru
          _
        // Predicated region
        $region37: #{gcn_classifier_forward.1} parent=11 // pred_check
          %p687 = pneg %p497
        $region38: #{gcn_classifier_forward.1} parent=11 // pred_check_branch
          %689 = sbr.rel (%p687) target = $region40
        $region39: #{gcn_classifier_forward.1} parent=11 // pred_region
          _
        $region40: #{gcn_classifier_forward.1} parent=11 // pred_fallthru
          _
        // Predicated region
        $region41: #{gcn_classifier_forward.1} parent=11 // pred_check
          %p690 = pneg %p518
        $region42: #{gcn_classifier_forward.1} parent=11 // pred_check_branch
          %692 = sbr.rel (%p690) target = $region44
        $region43: #{gcn_classifier_forward.1} parent=11 // pred_region
          _
        $region44: #{gcn_classifier_forward.1} parent=11 // pred_fallthru
          _
        // Predicated region
        $region45: #{gcn_classifier_forward.1} parent=11 // pred_check
          %p693 = pneg %p539
        $region46: #{gcn_classifier_forward.1} parent=11 // pred_check_branch
          %695 = sbr.rel (%p693) target = $region48
        $region47: #{gcn_classifier_forward.1} parent=11 // pred_region
          _
        $region48: #{gcn_classifier_forward.1} parent=11 // pred_fallthru
          _
        // Predicated region
        $region49: #{gcn_classifier_forward.1} parent=11 // pred_check
          %p696 = pneg %p560
        $region50: #{gcn_classifier_forward.1} parent=11 // pred_check_branch
          %698 = sbr.rel (%p696) target = $region52
        $region51: #{gcn_classifier_forward.1} parent=11 // pred_region
          _
        $region52: #{gcn_classifier_forward.1} parent=11 // pred_fallthru
          _
        // Predicated region
        $region53: #{gcn_classifier_forward.1} parent=11 // pred_check
          %p699 = pneg %p581
        $region54: #{gcn_classifier_forward.1} parent=11 // pred_check_branch
          %701 = sbr.rel (%p699) target = $region56
        $region55: #{gcn_classifier_forward.1} parent=11 // pred_region
          _
        $region56: #{gcn_classifier_forward.1} parent=11 // pred_fallthru
          _
        // Predicated region
        $region57: #{gcn_classifier_forward.1} parent=11 // pred_check
          %p702 = pneg %p602
        $region58: #{gcn_classifier_forward.1} parent=11 // pred_check_branch
          %704 = sbr.rel (%p702) target = $region60
        $region59: #{gcn_classifier_forward.1} parent=11 // pred_region
          _
        $region60: #{gcn_classifier_forward.1} parent=11 // pred_fallthru
          _
      $region12: #{gcn_classifier_forward.1} parent=5 // pred_fallthru
        _
      %p705 = scmp.lt.s32.totalorder %s38, 2
      // Predicated region
      $region61: #{gcn_classifier_forward.1} parent=5 // pred_check
        %p706 = pneg %p705
      $region62: #{gcn_classifier_forward.1} parent=5 // pred_check_branch
        %708 = sbr.rel (%p706) target = $region64
      $region63: #{gcn_classifier_forward.1} parent=5 // pred_region
        // Predicated region
        $region65: #{gcn_classifier_forward.1} parent=63 // pred_check
          %p709 = pneg %p58
        $region66: #{gcn_classifier_forward.1} parent=63 // pred_check_branch
          %711 = sbr.rel (%p709) target = $region68
        $region67: #{gcn_classifier_forward.1} parent=63 // pred_region
          %p712 = scmp.lt.s32.totalorder %s38, 1
          %s713 = scalar_select %p712, %s38, 1
          %s714 = smul.addr %s713, 2
          %s715 = smul.addr %s714, 8
          %s716 = scalar_lea.vmem %s0, %s715
        $region68: #{gcn_classifier_forward.1} parent=63 // pred_fallthru
          _
        // Predicated region
        $region69: #{gcn_classifier_forward.1} parent=63 // pred_check
          %p717 = pneg %p84
        $region70: #{gcn_classifier_forward.1} parent=63 // pred_check_branch
          %719 = sbr.rel (%p717) target = $region72
        $region71: #{gcn_classifier_forward.1} parent=63 // pred_region
          %p720 = scmp.lt.s32.totalorder %s38, 1
          %s721 = scalar_select %p720, %s38, 1
          %s722 = smul.addr %s721, 2
          %s723 = smul.addr %s722, 8
          %s724 = scalar_lea.vmem %s1, %s723
        $region72: #{gcn_classifier_forward.1} parent=63 // pred_fallthru
          _
        // Predicated region
        $region73: #{gcn_classifier_forward.1} parent=63 // pred_check
          %p725 = pneg %p110
        $region74: #{gcn_classifier_forward.1} parent=63 // pred_check_branch
          %727 = sbr.rel (%p725) target = $region76
        $region75: #{gcn_classifier_forward.1} parent=63 // pred_region
          %p728 = scmp.lt.s32.totalorder %s38, 1
          %s729 = scalar_select %p728, %s38, 1
          %s730 = smul.addr %s729, 2
          %s731 = smul.addr %s730, 8
          %s732 = scalar_lea.vmem %s2, %s731
        $region76: #{gcn_classifier_forward.1} parent=63 // pred_fallthru
          _
        // Predicated region
        $region77: #{gcn_classifier_forward.1} parent=63 // pred_check
          %p733 = pneg %p136
        $region78: #{gcn_classifier_forward.1} parent=63 // pred_check_branch
          %735 = sbr.rel (%p733) target = $region80
        $region79: #{gcn_classifier_forward.1} parent=63 // pred_region
          %p736 = scmp.lt.s32.totalorder %s38, 1
          %s737 = scalar_select %p736, %s38, 1
          %s738 = smul.addr %s737, 8
          %s739 = smul.addr %s738, 8
          %s740 = scalar_lea.vmem %s3, %s739
        $region80: #{gcn_classifier_forward.1} parent=63 // pred_fallthru
          _
        // Predicated region
        $region81: #{gcn_classifier_forward.1} parent=63 // pred_check
          %p741 = pneg %p162
        $region82: #{gcn_classifier_forward.1} parent=63 // pred_check_branch
          %743 = sbr.rel (%p741) target = $region84
        $region83: #{gcn_classifier_forward.1} parent=63 // pred_region
          %p744 = scmp.lt.s32.totalorder %s38, 1
          %s745 = scalar_select %p744, %s38, 1
          %s746 = smul.addr %s745, 6
          %s747 = scalar_lea.vmem %s4, %s746
        $region84: #{gcn_classifier_forward.1} parent=63 // pred_fallthru
          _
        // Predicated region
        $region85: #{gcn_classifier_forward.1} parent=63 // pred_check
          %p748 = pneg %p188
        $region86: #{gcn_classifier_forward.1} parent=63 // pred_check_branch
          %750 = sbr.rel (%p748) target = $region88
        $region87: #{gcn_classifier_forward.1} parent=63 // pred_region
          %p751 = scmp.lt.s32.totalorder %s38, 1
          %s752 = scalar_select %p751, %s38, 1
          %s753 = smul.addr %s752, 4
          %s754 = smul.addr %s753, 8
          %s755 = scalar_lea.vmem %s5, %s754
        $region88: #{gcn_classifier_forward.1} parent=63 // pred_fallthru
          _
        // Predicated region
        $region89: #{gcn_classifier_forward.1} parent=63 // pred_check
          %p756 = pneg %p214
        $region90: #{gcn_classifier_forward.1} parent=63 // pred_check_branch
          %758 = sbr.rel (%p756) target = $region92
        $region91: #{gcn_classifier_forward.1} parent=63 // pred_region
          %p759 = scmp.lt.s32.totalorder %s38, 1
          %s760 = scalar_select %p759, %s38, 1
          %s761 = smul.addr %s760, 4
          %s762 = smul.addr %s761, 8
          %s763 = scalar_lea.vmem %s6, %s762
        $region92: #{gcn_classifier_forward.1} parent=63 // pred_fallthru
          _
        // Predicated region
        $region93: #{gcn_classifier_forward.1} parent=63 // pred_check
          %p764 = pneg %p240
        $region94: #{gcn_classifier_forward.1} parent=63 // pred_check_branch
          %766 = sbr.rel (%p764) target = $region96
        $region95: #{gcn_classifier_forward.1} parent=63 // pred_region
          %p767 = scmp.lt.s32.totalorder %s38, 1
          %s768 = scalar_select %p767, %s38, 1
          %s769 = smul.addr %s768, 2
          %s770 = scalar_lea.vmem %s7, %s769
        $region96: #{gcn_classifier_forward.1} parent=63 // pred_fallthru
          _
        // Predicated region
        $region97: #{gcn_classifier_forward.1} parent=63 // pred_check
          %p771 = pneg %p266
        $region98: #{gcn_classifier_forward.1} parent=63 // pred_check_branch
          %773 = sbr.rel (%p771) target = $region100
        $region99: #{gcn_classifier_forward.1} parent=63 // pred_region
          %p774 = scmp.lt.s32.totalorder %s38, 1
          %s775 = scalar_select %p774, %s38, 1
          %s776 = smul.addr %s775, 2
          %s777 = scalar_lea.vmem %s8, %s776
        $region100: #{gcn_classifier_forward.1} parent=63 // pred_fallthru
          _
        // Predicated region
        $region101: #{gcn_classifier_forward.1} parent=63 // pred_check
          %p778 = pneg %p292
        $region102: #{gcn_classifier_forward.1} parent=63 // pred_check_branch
          %780 = sbr.rel (%p778) target = $region104
        $region103: #{gcn_classifier_forward.1} parent=63 // pred_region
          %p781 = scmp.lt.s32.totalorder %s38, 1
          %s782 = scalar_select %p781, %s38, 1
          %s783 = smul.addr %s782, 4
          %s784 = smul.addr %s783, 8
          %s785 = scalar_lea.vmem %s9, %s784
        $region104: #{gcn_classifier_forward.1} parent=63 // pred_fallthru
          _
        // Predicated region
        $region105: #{gcn_classifier_forward.1} parent=63 // pred_check
          %p786 = pneg %p318
        $region106: #{gcn_classifier_forward.1} parent=63 // pred_check_branch
          %788 = sbr.rel (%p786) target = $region108
        $region107: #{gcn_classifier_forward.1} parent=63 // pred_region
          %p789 = scmp.lt.s32.totalorder %s38, 1
          %s790 = scalar_select %p789, %s38, 1
          %s791 = smul.addr %s790, 2
          %s792 = smul.addr %s791, 8
          %s793 = scalar_lea.vmem %s10, %s792
        $region108: #{gcn_classifier_forward.1} parent=63 // pred_fallthru
          _
        // Predicated region
        $region109: #{gcn_classifier_forward.1} parent=63 // pred_check
          %p794 = pneg %p344
        $region110: #{gcn_classifier_forward.1} parent=63 // pred_check_branch
          %796 = sbr.rel (%p794) target = $region112
        $region111: #{gcn_classifier_forward.1} parent=63 // pred_region
          %p797 = scmp.lt.s32.totalorder %s38, 1
          %s798 = scalar_select %p797, %s38, 1
          %s799 = smul.addr %s798, 2
          %s800 = smul.addr %s799, 8
          %s801 = scalar_lea.vmem %s11, %s800
        $region112: #{gcn_classifier_forward.1} parent=63 // pred_fallthru
          _
      $region64: #{gcn_classifier_forward.1} parent=5 // pred_fallthru
        _
      %p802 = scmp.le.s32.totalorder 1, %s38
      %p803 = scmp.lt.s32.totalorder %s38, 3
      %p804 = pnand %p802, %p803
      %p805 = pneg %p804
      // Predicated region
      $region113: #{gcn_classifier_forward.1} parent=5 // pred_check
        _
      $region114: #{gcn_classifier_forward.1} parent=5 // pred_check_branch
        %807 = sbr.rel (%p804) target = $region116
      $region115: #{gcn_classifier_forward.1} parent=5 // pred_region
        %s808 = ssub.s32 %s38, 1
        %p809 = scmp.lt.s32.totalorder %s43, 1
        %s810 = scalar_select %p809, %s43, 1
        %s811 = smul.addr %s810, 2
        %s812 = smul.addr %s811, 8
        %s813 = scalar_lea.vmem %s0, %s812
        %p814 = pneg %p64
        %p815 = pneg %p61
        %p816 = scmp.lt.s32.totalorder %s43, 1
        %s817 = scalar_select %p816, %s43, 1
        %s818 = smul.addr %s817, 2
        %s819 = smul.addr %s818, 8
        %s820 = scalar_lea.vmem %s1, %s819
        %p821 = pneg %p90
        %p822 = pneg %p87
        %p823 = scmp.lt.s32.totalorder %s43, 1
        %s824 = scalar_select %p823, %s43, 1
        %s825 = smul.addr %s824, 2
        %s826 = smul.addr %s825, 8
        %s827 = scalar_lea.vmem %s2, %s826
        %p828 = pneg %p116
        %p829 = pneg %p113
        %p830 = scmp.lt.s32.totalorder %s43, 1
        %s831 = scalar_select %p830, %s43, 1
        %s832 = smul.addr %s831, 8
        %s833 = smul.addr %s832, 8
        %s834 = scalar_lea.vmem %s3, %s833
        %p835 = pneg %p142
        %p836 = pneg %p139
        %p837 = scmp.lt.s32.totalorder %s43, 1
        %s838 = scalar_select %p837, %s43, 1
        %s839 = smul.addr %s838, 6
        %s840 = scalar_lea.vmem %s4, %s839
        %p841 = pneg %p168
        %p842 = pneg %p165
        %p843 = scmp.lt.s32.totalorder %s43, 1
        %s844 = scalar_select %p843, %s43, 1
        %s845 = smul.addr %s844, 4
        %s846 = smul.addr %s845, 8
        %s847 = scalar_lea.vmem %s5, %s846
        %p848 = pneg %p194
        %p849 = pneg %p191
        %p850 = scmp.lt.s32.totalorder %s43, 1
        %s851 = scalar_select %p850, %s43, 1
        %s852 = smul.addr %s851, 4
        %s853 = smul.addr %s852, 8
        %s854 = scalar_lea.vmem %s6, %s853
        %p855 = pneg %p220
        %p856 = pneg %p217
        %p857 = scmp.lt.s32.totalorder %s43, 1
        %s858 = scalar_select %p857, %s43, 1
        %s859 = smul.addr %s858, 2
        %s860 = scalar_lea.vmem %s7, %s859
        %p861 = pneg %p246
        %p862 = pneg %p243
        %p863 = scmp.lt.s32.totalorder %s43, 1
        %s864 = scalar_select %p863, %s43, 1
        %s865 = smul.addr %s864, 2
        %s866 = scalar_lea.vmem %s8, %s865
        %p867 = pneg %p272
        %p868 = pneg %p269
        %p869 = scmp.lt.s32.totalorder %s43, 1
        %s870 = scalar_select %p869, %s43, 1
        %s871 = smul.addr %s870, 4
        %s872 = smul.addr %s871, 8
        %s873 = scalar_lea.vmem %s9, %s872
        %p874 = pneg %p298
        %p875 = pneg %p295
        %p876 = scmp.lt.s32.totalorder %s43, 1
        %s877 = scalar_select %p876, %s43, 1
        %s878 = smul.addr %s877, 2
        %s879 = smul.addr %s878, 8
        %s880 = scalar_lea.vmem %s10, %s879
        %p881 = pneg %p324
        %p882 = pneg %p321
        %p883 = scmp.lt.s32.totalorder %s43, 1
        %s884 = scalar_select %p883, %s43, 1
        %s885 = smul.addr %s884, 2
        %s886 = smul.addr %s885, 8
        %s887 = scalar_lea.vmem %s11, %s886
        %p888 = pneg %p350
        %p889 = pneg %p347
        %p890 = pneg %p371
        %p891 = pneg %p368
        %p892 = pneg %p392
        %p893 = pneg %p389
        %p894 = pneg %p413
        %p895 = pneg %p410
        %p896 = pneg %p434
        %p897 = pneg %p431
        %p898 = pneg %p455
        %p899 = pneg %p452
        %p900 = pneg %p476
        %p901 = pneg %p473
        %p902 = pneg %p497
        %p903 = pneg %p494
        %p904 = pneg %p518
        %p905 = pneg %p515
        %p906 = pneg %p539
        %p907 = pneg %p536
        %p908 = pneg %p560
        %p909 = pneg %p557
        %p910 = pneg %p581
        %p911 = pneg %p578
        %p912 = pneg %p602
        %p913 = pneg %p599
        %p914 = pneg %p628
        %p915 = pneg %p625
        %s916 = sand.u32 %s615, 1
        %s917 = scalar_lea.sflag [#allocation3], %s916
        %s918 = sand.u32 %s615, 1
        %s919 = smul.addr %s918, 2
        %s920 = scalar_lea.vmem [#allocation2], %s919
        %p921 = pneg %p654
        %p922 = pneg %p651
        %s923 = sand.u32 %s641, 1
        %s924 = scalar_lea.sflag [#allocation5], %s923
        %s925 = sand.u32 %s641, 1
        %s926 = smul.addr %s925, 2
        %s927 = scalar_lea.vmem [#allocation4], %s926
        %p928 = scmp.lt.s32.totalorder %s43, 1
        %s929 = scalar_select %p928, %s43, 1
        %s930 = smul.addr %s929, 2
        %s931 = smul.addr %s930, 8
        %s932 = scalar_lea.vmem %s0, %s931
        %p933 = scmp.lt.s32.totalorder %s43, 1
        %s934 = scalar_select %p933, %s43, 1
        %s935 = smul.addr %s934, 2
        %s936 = smul.addr %s935, 8
        %s937 = scalar_lea.vmem %s1, %s936
        %p938 = scmp.lt.s32.totalorder %s43, 1
        %s939 = scalar_select %p938, %s43, 1
        %s940 = smul.addr %s939, 2
        %s941 = smul.addr %s940, 8
        %s942 = scalar_lea.vmem %s2, %s941
        %p943 = scmp.lt.s32.totalorder %s43, 1
        %s944 = scalar_select %p943, %s43, 1
        %s945 = smul.addr %s944, 8
        %s946 = smul.addr %s945, 8
        %s947 = scalar_lea.vmem %s3, %s946
        %p948 = scmp.lt.s32.totalorder %s43, 1
        %s949 = scalar_select %p948, %s43, 1
        %s950 = smul.addr %s949, 6
        %s951 = scalar_lea.vmem %s4, %s950
        %p952 = scmp.lt.s32.totalorder %s43, 1
        %s953 = scalar_select %p952, %s43, 1
        %s954 = smul.addr %s953, 4
        %s955 = smul.addr %s954, 8
        %s956 = scalar_lea.vmem %s5, %s955
        %p957 = scmp.lt.s32.totalorder %s43, 1
        %s958 = scalar_select %p957, %s43, 1
        %s959 = smul.addr %s958, 4
        %s960 = smul.addr %s959, 8
        %s961 = scalar_lea.vmem %s6, %s960
        %p962 = scmp.lt.s32.totalorder %s43, 1
        %s963 = scalar_select %p962, %s43, 1
        %s964 = smul.addr %s963, 2
        %s965 = scalar_lea.vmem %s7, %s964
        %p966 = scmp.lt.s32.totalorder %s43, 1
        %s967 = scalar_select %p966, %s43, 1
        %s968 = smul.addr %s967, 2
        %s969 = scalar_lea.vmem %s8, %s968
        %p970 = scmp.lt.s32.totalorder %s43, 1
        %s971 = scalar_select %p970, %s43, 1
        %s972 = smul.addr %s971, 4
        %s973 = smul.addr %s972, 8
        %s974 = scalar_lea.vmem %s9, %s973
        %p975 = scmp.lt.s32.totalorder %s43, 1
        %s976 = scalar_select %p975, %s43, 1
        %s977 = smul.addr %s976, 2
        %s978 = smul.addr %s977, 8
        %s979 = scalar_lea.vmem %s10, %s978
        %p980 = scmp.lt.s32.totalorder %s43, 1
        %s981 = scalar_select %p980, %s43, 1
        %s982 = smul.addr %s981, 2
        %s983 = smul.addr %s982, 8
        %s984 = scalar_lea.vmem %s11, %s983
        %v986 = vld [vmem:[%s932] sm:$0xff]
        %v987 = vld [vmem:[%s932 + $0x8] sm:$0xff]
        %vm988 = vcmask 130048
        %v989 = vsel %vm988, %v986, 0.0
        %990 = vadd.xlane.f32.xlu0 %v989
        %v991 = vpop.xlane.xlu0 %990
        %v992 = vsel %vm988, %v987, 0.0
        %993 = vadd.xlane.f32.xlu0 %v992
        %v994 = vpop.xlane.xlu0 %993
        %v995 = vld [vmem:[%s937] sm:$0xff]
        %v996 = vld [vmem:[%s937 + $0x8] sm:$0xff]
        %v997 = vadd.f32 %v991, 1.0
        %v998 = vadd.f32 %v994, 1.0
        %v999 = vrcp.pop %v997
        %v1000 = vrcp.pop %v998
        %v1001 = vadd.f32 %v991, %v995
        %v1002 = vadd.f32 %v994, %v996
        %vm1003 = vcmp.eq.f32.partialorder %v1001, 0.0
        %vm1004 = vcmp.eq.f32.partialorder %v1002, 0.0
        %v1005 = vld [vmem:[%s942] sm:$0xff]
        %v1006 = vld [vmem:[%s942 + $0x8] sm:$0xff]
        %v1007 = vld [vmem:[%s12] sm:$0xff]
        %v1008 = vld [vmem:[%s12 + $0x8] sm:$0xff]
        %v1009 = vld [vmem:[%s12 + $0x10] sm:$0xff]
        %v1010 = vld [vmem:[%s12 + $0x18] sm:$0xff]
        %v1011 = vld [vmem:[%s12 + $0x20] sm:$0xff]
        %v1012 = vld [vmem:[%s12 + $0x28] sm:$0x3]
        %vm1013 = vcmask 343040
        %v1015 = vsel %vm1013, %v1005, 0
        %v1018 = vsel %vm1013, %v1006, 0
        %vm1020 = vcmask 1041408
        %v1022 = vsel %vm1020, %v1012, 0
        %1024 = vmatprep.subr.mxu0 0.0
        %1025 = vmatpush1.msra.mxu0 %v1007
        %1026 = vmatprep.subr.mxu0 0.0
        %1027 = vmatpush1.msra.mxu0 %v1008
        %1028 = vmatprep.subr.mxu0 0.0
        %1029 = vmatpush1.msra.mxu0 %v1009
        %1030 = vmatprep.subr.mxu0 0.0
        %1031 = vmatpush1.msra.mxu0 %v1010
        %1032 = vmatprep.subr.mxu0 0.0
        %1033 = vmatpush1.msra.mxu0 %v1011
        %1034 = vmatprep.subr.mxu0 0.0
        %1035 = vmatpush1.msra.mxu0 %v1022
        %1036 = vmatprep.subr.mxu0 0.0
        %1037 = vmatpush1.msra.mxu0 0.0
        %1038 = vmatprep.subr.mxu0 0.0
        %1039 = vmatpush1.msra.mxu0 0.0
        %1040 = vmatprep.subr.mxu0 0.0
        %1041 = vmatpush1.msra.mxu0 0.0
        %1042 = vmatprep.subr.mxu0 0.0
        %1043 = vmatpush1.msra.mxu0 0.0
        %1044 = vmatprep.subr.mxu0 0.0
        %1045 = vmatpush1.msra.mxu0 0.0
        %1046 = vmatprep.subr.mxu0 0.0
        %1047 = vmatpush1.msra.mxu0 0.0
        %1048 = vmatprep.subr.mxu0 0.0
        %1049 = vmatpush1.msra.mxu0 0.0
        %1050 = vmatprep.subr.mxu0 0.0
        %1051 = vmatpush1.msra.mxu0 0.0
        %1052 = vmatprep.subr.mxu0 0.0
        %1053 = vmatpush1.msra.mxu0 0.0
        %1054 = vmatprep.subr.mxu0 0.0
        %1055 = vmatpush1.msra.mxu0 0.0
        %1056 = vmatprep.subr.mxu0 0.0
        %1057 = vmatpush1.msra.mxu0 0.0
        %1058 = vmatprep.subr.mxu0 0.0
        %1059 = vmatpush1.msra.mxu0 0.0
        %1060 = vmatprep.subr.mxu0 0.0
        %1061 = vmatpush1.msra.mxu0 0.0
        %1062 = vmatprep.subr.mxu0 0.0
        %1063 = vmatpush1.msra.mxu0 0.0
        %1064 = vmatprep.subr.mxu0 0.0
        %1065 = vmatpush1.msra.mxu0 0.0
        %1066 = vmatprep.subr.mxu0 0.0
        %1067 = vmatpush1.msra.mxu0 0.0
        %1068 = vmatprep.subr.mxu0 0.0
        %1069 = vmatpush1.msra.mxu0 0.0
        %1070 = vmatprep.subr.mxu0 0.0
        %1071 = vmatpush1.msra.mxu0 0.0
        %1072 = vmatprep.subr.mxu0 0.0
        %1073 = vmatpush1.msra.mxu0 0.0
        %1074 = vmatprep.subr.mxu0 0.0
        %1075 = vmatpush1.msra.mxu0 0.0
        %1076 = vmatprep.subr.mxu0 0.0
        %1077 = vmatpush1.msra.mxu0 0.0
        %1078 = vmatprep.subr.mxu0 0.0
        %1079 = vmatpush1.msra.mxu0 0.0
        %1080 = vmatprep.subr.mxu0 0.0
        %1081 = vmatpush1.msra.mxu0 0.0
        %1082 = vmatprep.subr.mxu0 0.0
        %1083 = vmatpush1.msra.mxu0 0.0
        %1084 = vmatprep.subr.mxu0 0.0
        %1085 = vmatpush1.msra.mxu0 0.0
        %1086 = vmatprep.subr.mxu0 0.0
        %1087 = vmatpush1.msra.mxu0 0.0
        %1088 = vmatprep.mubr.f32.mxu0 0.0
        %1089 = vmatmul.mubr.f32.gmra.mrb[0].mxu0 %v1015
        %v1090 = vpop.f32.mrb[0].mxu0
        %v1091 = vadd.f32 0.0, %v1090
        %v1092 = vpop.f32.mrb[0].mxu0
        %1093 = vmatprep.mubr.f32.mxu0 0.0
        %1094 = vmatmul.mubr.f32.gmra.mrb[0].mxu0 %v1018
        %v1095 = vpop.f32.mrb[0].mxu0
        %v1096 = vadd.f32 0.0, %v1095
        %v1097 = vpop.f32.mrb[0].mxu0
        %1098 = vdwg.mxu0
        %v1099 = vmul.f32 %v1091, %v999
        %v1100 = vmul.f32 %v1096, %v1000
        %v1101 = vmax.f32 %v1099, 0.0
        %v1102 = vmax.f32 %v1100, 0.0
        %v1103 = vld [vmem:[%s947] sm:$0xff]
        %v1104 = vld [vmem:[%s947 + $0x8] sm:$0xff]
        %v1105 = vld [vmem:[%s947 + $0x10] sm:$0xff]
        %v1106 = vld [vmem:[%s947 + $0x18] sm:$0xff]
        %v1107 = vld [vmem:[%s947 + $0x20] sm:$0xff]
        %v1108 = vld [vmem:[%s947 + $0x28] sm:$0xff]
        %v1109 = vld [vmem:[%s947 + $0x30] sm:$0xff]
        %v1110 = vld [vmem:[%s947 + $0x38] sm:$0xff]
        %v1111 = vld [vmem:[%s13] sm:$0xff]
        %v1112 = vld [vmem:[%s13 + $0x8] sm:$0xff]
        %v1113 = vld [vmem:[%s13 + $0x10] sm:$0xff]
        %v1114 = vld [vmem:[%s13 + $0x18] sm:$0xff]
        %v1115 = vld [vmem:[%s13 + $0x20] sm:$0xff]
        %v1116 = vld [vmem:[%s13 + $0x28] sm:$0xff]
        %v1117 = vld [vmem:[%s13 + $0x30] sm:$0xff]
        %v1118 = vld [vmem:[%s13 + $0x38] sm:$0xff]
        %v1119 = vld [vmem:[%s13 + $0x40] sm:$0xff]
        %v1120 = vld [vmem:[%s13 + $0x48] sm:$0xff]
        %v1121 = vld [vmem:[%s13 + $0x50] sm:$0xff]
        %v1122 = vld [vmem:[%s13 + $0x58] sm:$0xff]
        %v1123 = vld [vmem:[%s13 + $0x60] sm:$0xff]
        %v1124 = vld [vmem:[%s13 + $0x68] sm:$0xff]
        %v1125 = vld [vmem:[%s13 + $0x70] sm:$0xff]
        %v1126 = vld [vmem:[%s13 + $0x78] sm:$0xff]
        %v1127 = vld [vmem:[%s13 + $0x80] sm:$0xff]
        %v1128 = vld [vmem:[%s13 + $0x88] sm:$0xff]
        %v1129 = vld [vmem:[%s13 + $0x90] sm:$0xff]
        %v1130 = vld [vmem:[%s13 + $0x98] sm:$0xff]
        %v1131 = vld [vmem:[%s13 + $0xa0] sm:$0xff]
        %v1132 = vld [vmem:[%s13 + $0xa8] sm:$0xff]
        %v1133 = vld [vmem:[%s13 + $0xb0] sm:$0xff]
        %v1134 = vld [vmem:[%s13 + $0xb8] sm:$0xff]
        %v1135 = vld [vmem:[%s13 + $0xc0] sm:$0xff]
        %v1136 = vld [vmem:[%s13 + $0xc8] sm:$0xff]
        %v1137 = vld [vmem:[%s13 + $0xd0] sm:$0xff]
        %v1138 = vld [vmem:[%s13 + $0xd8] sm:$0xff]
        %v1139 = vld [vmem:[%s13 + $0xe0] sm:$0xff]
        %v1140 = vld [vmem:[%s13 + $0xe8] sm:$0xff]
        %v1141 = vld [vmem:[%s13 + $0xf0] sm:$0xff]
        %v1142 = vld [vmem:[%s13 + $0xf8] sm:$0xff]
        %v1143 = vld [vmem:[%s13 + $0x100] sm:$0xff]
        %v1144 = vld [vmem:[%s13 + $0x108] sm:$0xff]
        %v1145 = vld [vmem:[%s13 + $0x110] sm:$0xff]
        %v1146 = vld [vmem:[%s13 + $0x118] sm:$0xff]
        %v1147 = vld [vmem:[%s13 + $0x120] sm:$0xff]
        %v1148 = vld [vmem:[%s13 + $0x128] sm:$0xff]
        %v1149 = vld [vmem:[%s13 + $0x130] sm:$0xff]
        %v1150 = vld [vmem:[%s13 + $0x138] sm:$0xff]
        %v1151 = vld [vmem:[%s13 + $0x140] sm:$0xff]
        %v1152 = vld [vmem:[%s13 + $0x148] sm:$0xff]
        %v1153 = vld [vmem:[%s13 + $0x150] sm:$0xff]
        %v1154 = vld [vmem:[%s13 + $0x158] sm:$0xff]
        %v1155 = vld [vmem:[%s13 + $0x160] sm:$0xff]
        %v1156 = vld [vmem:[%s13 + $0x168] sm:$0xff]
        %v1157 = vld [vmem:[%s13 + $0x170] sm:$0xff]
        %v1158 = vld [vmem:[%s13 + $0x178] sm:$0xff]
        %v1159 = vld [vmem:[%s13 + $0x180] sm:$0xff]
        %v1160 = vld [vmem:[%s13 + $0x188] sm:$0xff]
        %v1161 = vld [vmem:[%s14] sm:$0x3]
        %v1163 = vsel %vm988, %v986, 0
        %v1166 = vsel %vm988, %v987, 0
        %1168 = vmatprep.subr.mxu0 %v1104
        %1169 = vmatpush1.msra.mxu0 %v1103
        %1170 = vmatprep.subr.mxu0 %v1108
        %1171 = vmatpush1.msra.mxu0 %v1107
        %1172 = vmatprep.subr.mxu0 0.0
        %1173 = vmatpush1.msra.mxu0 0.0
        %1174 = vmatprep.subr.mxu0 0.0
        %1175 = vmatpush1.msra.mxu0 0.0
        %1176 = vmatprep.subr.mxu0 0.0
        %1177 = vmatpush1.msra.mxu0 0.0
        %1178 = vmatprep.subr.mxu0 0.0
        %1179 = vmatpush1.msra.mxu0 0.0
        %1180 = vmatprep.subr.mxu0 0.0
        %1181 = vmatpush1.msra.mxu0 0.0
        %1182 = vmatprep.subr.mxu0 0.0
        %1183 = vmatpush1.msra.mxu0 0.0
        %1184 = vmatprep.subr.mxu0 0.0
        %1185 = vmatpush1.msra.mxu0 0.0
        %1186 = vmatprep.subr.mxu0 0.0
        %1187 = vmatpush1.msra.mxu0 0.0
        %1188 = vmatprep.subr.mxu0 0.0
        %1189 = vmatpush1.msra.mxu0 0.0
        %1190 = vmatprep.subr.mxu0 0.0
        %1191 = vmatpush1.msra.mxu0 0.0
        %1192 = vmatprep.subr.mxu0 0.0
        %1193 = vmatpush1.msra.mxu0 0.0
        %1194 = vmatprep.subr.mxu0 0.0
        %1195 = vmatpush1.msra.mxu0 0.0
        %1196 = vmatprep.subr.mxu0 0.0
        %1197 = vmatpush1.msra.mxu0 0.0
        %1198 = vmatprep.subr.mxu0 0.0
        %1199 = vmatpush1.msra.mxu0 0.0
        %1200 = vmatprep.subr.mxu0 0.0
        %1201 = vmatpush1.msra.mxu0 0.0
        %1202 = vmatprep.subr.mxu0 0.0
        %1203 = vmatpush1.msra.mxu0 0.0
        %1204 = vmatprep.subr.mxu0 0.0
        %1205 = vmatpush1.msra.mxu0 0.0
        %1206 = vmatprep.subr.mxu0 0.0
        %1207 = vmatpush1.msra.mxu0 0.0
        %1208 = vmatprep.subr.mxu0 0.0
        %1209 = vmatpush1.msra.mxu0 0.0
        %1210 = vmatprep.subr.mxu0 0.0
        %1211 = vmatpush1.msra.mxu0 0.0
        %1212 = vmatprep.subr.mxu0 0.0
        %1213 = vmatpush1.msra.mxu0 0.0
        %1214 = vmatprep.subr.mxu0 0.0
        %1215 = vmatpush1.msra.mxu0 0.0
        %1216 = vmatprep.subr.mxu0 0.0
        %1217 = vmatpush1.msra.mxu0 0.0
        %1218 = vmatprep.subr.mxu0 0.0
        %1219 = vmatpush1.msra.mxu0 0.0
        %1220 = vmatprep.subr.mxu0 0.0
        %1221 = vmatpush1.msra.mxu0 0.0
        %1222 = vmatprep.subr.mxu0 0.0
        %1223 = vmatpush1.msra.mxu0 0.0
        %1224 = vmatprep.subr.mxu0 0.0
        %1225 = vmatpush1.msra.mxu0 0.0
        %1226 = vmatprep.subr.mxu0 0.0
        %1227 = vmatpush1.msra.mxu0 0.0
        %1228 = vmatprep.subr.mxu0 0.0
        %1229 = vmatpush1.msra.mxu0 0.0
        %1230 = vmatprep.subr.mxu0 0.0
        %1231 = vmatpush1.msra.mxu0 0.0
        %1232 = vmatprep.mubr.f32.mxu0 0.0
        %1233 = vmatmul.mubr.f32.gmra.mrb[0].mxu0 %v1163
        %v1234 = vpop.f32.mrb[0].mxu0
        %v1235 = vadd.f32 %v1103, %v1234
        %v1236 = vpop.f32.mrb[0].mxu0
        %v1237 = vadd.f32 %v1104, %v1236
        %1238 = vmatprep.mubr.f32.mxu0 0.0
        %1239 = vmatmul.mubr.f32.gmra.mrb[0].mxu0 %v1166
        %v1240 = vpop.f32.mrb[0].mxu0
        %v1241 = vadd.f32 %v1107, %v1240
        %v1242 = vpop.f32.mrb[0].mxu0
        %v1243 = vadd.f32 %v1108, %v1242
        %1244 = vdwg.mxu0
        %1245 = vmatprep.subr.mxu0 %v1106
        %1246 = vmatpush1.msra.mxu0 %v1105
        %1247 = vmatprep.subr.mxu0 %v1110
        %1248 = vmatpush1.msra.mxu0 %v1109
        %1249 = vmatprep.subr.mxu0 0.0
        %1250 = vmatpush1.msra.mxu0 0.0
        %1251 = vmatprep.subr.mxu0 0.0
        %1252 = vmatpush1.msra.mxu0 0.0
        %1253 = vmatprep.subr.mxu0 0.0
        %1254 = vmatpush1.msra.mxu0 0.0
        %1255 = vmatprep.subr.mxu0 0.0
        %1256 = vmatpush1.msra.mxu0 0.0
        %1257 = vmatprep.subr.mxu0 0.0
        %1258 = vmatpush1.msra.mxu0 0.0
        %1259 = vmatprep.subr.mxu0 0.0
        %1260 = vmatpush1.msra.mxu0 0.0
        %1261 = vmatprep.subr.mxu0 0.0
        %1262 = vmatpush1.msra.mxu0 0.0
        %1263 = vmatprep.subr.mxu0 0.0
        %1264 = vmatpush1.msra.mxu0 0.0
        %1265 = vmatprep.subr.mxu0 0.0
        %1266 = vmatpush1.msra.mxu0 0.0
        %1267 = vmatprep.subr.mxu0 0.0
        %1268 = vmatpush1.msra.mxu0 0.0
        %1269 = vmatprep.subr.mxu0 0.0
        %1270 = vmatpush1.msra.mxu0 0.0
        %1271 = vmatprep.subr.mxu0 0.0
        %1272 = vmatpush1.msra.mxu0 0.0
        %1273 = vmatprep.subr.mxu0 0.0
        %1274 = vmatpush1.msra.mxu0 0.0
        %1275 = vmatprep.subr.mxu0 0.0
        %1276 = vmatpush1.msra.mxu0 0.0
        %1277 = vmatprep.subr.mxu0 0.0
        %1278 = vmatpush1.msra.mxu0 0.0
        %1279 = vmatprep.subr.mxu0 0.0
        %1280 = vmatpush1.msra.mxu0 0.0
        %1281 = vmatprep.subr.mxu0 0.0
        %1282 = vmatpush1.msra.mxu0 0.0
        %1283 = vmatprep.subr.mxu0 0.0
        %1284 = vmatpush1.msra.mxu0 0.0
        %1285 = vmatprep.subr.mxu0 0.0
        %1286 = vmatpush1.msra.mxu0 0.0
        %1287 = vmatprep.subr.mxu0 0.0
        %1288 = vmatpush1.msra.mxu0 0.0
        %1289 = vmatprep.subr.mxu0 0.0
        %1290 = vmatpush1.msra.mxu0 0.0
        %1291 = vmatprep.subr.mxu0 0.0
        %1292 = vmatpush1.msra.mxu0 0.0
        %1293 = vmatprep.subr.mxu0 0.0
        %1294 = vmatpush1.msra.mxu0 0.0
        %1295 = vmatprep.subr.mxu0 0.0
        %1296 = vmatpush1.msra.mxu0 0.0
        %1297 = vmatprep.subr.mxu0 0.0
        %1298 = vmatpush1.msra.mxu0 0.0
        %1299 = vmatprep.subr.mxu0 0.0
        %1300 = vmatpush1.msra.mxu0 0.0
        %1301 = vmatprep.subr.mxu0 0.0
        %1302 = vmatpush1.msra.mxu0 0.0
        %1303 = vmatprep.subr.mxu0 0.0
        %1304 = vmatpush1.msra.mxu0 0.0
        %1305 = vmatprep.subr.mxu0 0.0
        %1306 = vmatpush1.msra.mxu0 0.0
        %1307 = vmatprep.subr.mxu0 0.0
        %1308 = vmatpush1.msra.mxu0 0.0
        %1309 = vmatprep.mubr.f32.mxu0 0.0
        %1310 = vmatmul.mubr.f32.gmra.mrb[0].mxu0 %v1163
        %v1311 = vpop.f32.mrb[0].mxu0
        %v1312 = vadd.f32 %v1105, %v1311
        %v1313 = vpop.f32.mrb[0].mxu0
        %v1314 = vadd.f32 %v1106, %v1313
        %1315 = vmatprep.mubr.f32.mxu0 0.0
        %1316 = vmatmul.mubr.f32.gmra.mrb[0].mxu0 %v1166
        %v1317 = vpop.f32.mrb[0].mxu0
        %v1318 = vadd.f32 %v1109, %v1317
        %v1319 = vpop.f32.mrb[0].mxu0
        %v1320 = vadd.f32 %v1110, %v1319
        %1321 = vdwg.mxu0
        %v1322 = vpack.c.bf16 %v1241, %v1235
        %v1323 = vpack.c.bf16 %v1243, %v1237
        %v1324 = vpack.c.bf16 %v1318, %v1312
        %v1325 = vpack.c.bf16 %v1320, %v1314
        %v1327 = vlaneseq
        %v1328 = vshrl.u32 %v1327, 7
        %v1329 = vsub.s32 0, %v1328
        %v1330 = vrot.slane %v1161, %v1329
        %v1331 = vlaneseq
        %v1332 = vshrl.u32 %v1331, 7
        %v1333 = vsub.s32 1, %v1332
        %v1334 = vrot.slane %v1161, %v1333
        %v1387 = vunpack.c.l.b16 %v1111
        %v1388 = vunpack.c.h.b16 %v1111
        %v1389 = vunpack.c.l.b16 %v1112
        %v1390 = vunpack.c.h.b16 %v1112
        %v1391 = vunpack.c.l.b16 %v1113
        %v1392 = vunpack.c.h.b16 %v1113
        %v1393 = vunpack.c.l.b16 %v1114
        %v1394 = vunpack.c.h.b16 %v1114
        %v1395 = vunpack.c.l.b16 %v1115
        %v1396 = vunpack.c.h.b16 %v1115
        %v1397 = vunpack.c.l.b16 %v1116
        %v1398 = vunpack.c.h.b16 %v1116
        %v1399 = vunpack.c.l.b16 %v1117
        %v1400 = vunpack.c.h.b16 %v1117
        %v1401 = vunpack.c.l.b16 %v1118
        %v1402 = vunpack.c.h.b16 %v1118
        %v1403 = vunpack.c.l.b16 %v1119
        %v1404 = vunpack.c.h.b16 %v1119
        %v1405 = vunpack.c.l.b16 %v1120
        %v1406 = vunpack.c.h.b16 %v1120
        %v1407 = vunpack.c.l.b16 %v1121
        %v1408 = vunpack.c.h.b16 %v1121
        %v1409 = vunpack.c.l.b16 %v1122
        %v1410 = vunpack.c.h.b16 %v1122
        %v1411 = vunpack.c.l.b16 %v1123
        %v1412 = vunpack.c.h.b16 %v1123
        %v1413 = vunpack.c.l.b16 %v1124
        %v1414 = vunpack.c.h.b16 %v1124
        %v1415 = vunpack.c.l.b16 %v1125
        %v1416 = vunpack.c.h.b16 %v1125
        %v1417 = vunpack.c.l.b16 %v1126
        %v1418 = vunpack.c.h.b16 %v1126
        %v1419 = vunpack.c.l.b16 %v1127
        %v1420 = vunpack.c.h.b16 %v1127
        %v1421 = vunpack.c.l.b16 %v1128
        %v1422 = vunpack.c.h.b16 %v1128
        %v1423 = vunpack.c.l.b16 %v1129
        %v1424 = vunpack.c.h.b16 %v1129
        %v1425 = vunpack.c.l.b16 %v1130
        %v1426 = vunpack.c.h.b16 %v1130
        %v1427 = vunpack.c.l.b16 %v1131
        %v1428 = vunpack.c.h.b16 %v1131
        %v1429 = vunpack.c.l.b16 %v1132
        %v1430 = vunpack.c.h.b16 %v1132
        %v1431 = vunpack.c.l.b16 %v1133
        %v1432 = vunpack.c.h.b16 %v1133
        %v1433 = vunpack.c.l.b16 %v1134
        %v1434 = vunpack.c.h.b16 %v1134
        %v1435 = vunpack.c.l.b16 %v1135
        %v1436 = vunpack.c.h.b16 %v1135
        %v1437 = vunpack.c.l.b16 %v1136
        %v1438 = vunpack.c.h.b16 %v1136
        %v1439 = vunpack.c.l.b16 %v1137
        %v1440 = vunpack.c.h.b16 %v1137
        %v1441 = vunpack.c.l.b16 %v1138
        %v1442 = vunpack.c.h.b16 %v1138
        %v1443 = vunpack.c.l.b16 %v1139
        %v1444 = vunpack.c.h.b16 %v1139
        %v1445 = vunpack.c.l.b16 %v1140
        %v1446 = vunpack.c.h.b16 %v1140
        %v1447 = vunpack.c.l.b16 %v1141
        %v1448 = vunpack.c.h.b16 %v1141
        %v1449 = vunpack.c.l.b16 %v1142
        %v1450 = vunpack.c.h.b16 %v1142
        %v1451 = vunpack.c.l.b16 %v1143
        %v1452 = vunpack.c.h.b16 %v1143
        %v1453 = vunpack.c.l.b16 %v1144
        %v1454 = vunpack.c.h.b16 %v1144
        %v1455 = vunpack.c.l.b16 %v1145
        %v1456 = vunpack.c.h.b16 %v1145
        %v1457 = vunpack.c.l.b16 %v1146
        %v1458 = vunpack.c.h.b16 %v1146
        %v1459 = vunpack.c.l.b16 %v1147
        %v1460 = vunpack.c.h.b16 %v1147
        %v1461 = vunpack.c.l.b16 %v1148
        %v1462 = vunpack.c.h.b16 %v1148
        %v1463 = vunpack.c.l.b16 %v1149
        %v1464 = vunpack.c.h.b16 %v1149
        %v1465 = vunpack.c.l.b16 %v1150
        %v1466 = vunpack.c.h.b16 %v1150
        %v1467 = vunpack.c.l.b16 %v1151
        %v1468 = vunpack.c.h.b16 %v1151
        %v1469 = vunpack.c.l.b16 %v1152
        %v1470 = vunpack.c.h.b16 %v1152
        %v1471 = vunpack.c.l.b16 %v1153
        %v1472 = vunpack.c.h.b16 %v1153
        %v1473 = vunpack.c.l.b16 %v1154
        %v1474 = vunpack.c.h.b16 %v1154
        %v1475 = vunpack.c.l.b16 %v1155
        %v1476 = vunpack.c.h.b16 %v1155
        %v1477 = vunpack.c.l.b16 %v1156
        %v1478 = vunpack.c.h.b16 %v1156
        %v1479 = vunpack.c.l.b16 %v1157
        %v1480 = vunpack.c.h.b16 %v1157
        %v1481 = vunpack.c.l.b16 %v1158
        %v1482 = vunpack.c.h.b16 %v1158
        %v1483 = vunpack.c.l.b16 %v1159
        %v1484 = vunpack.c.h.b16 %v1159
        %v1485 = vunpack.c.l.b16 %v1160
        %v1486 = vunpack.c.h.b16 %v1160
        %v1487 = vpack.c.b16 %v1389, %v1387
        %v1488 = vpack.c.b16 %v1390, %v1388
        %v1489 = vpack.c.b16 %v1393, %v1391
        %v1490 = vpack.c.b16 %v1394, %v1392
        %v1491 = vpack.c.b16 %v1397, %v1395
        %v1492 = vpack.c.b16 %v1398, %v1396
        %v1493 = vpack.c.b16 %v1401, %v1399
        %v1494 = vpack.c.b16 %v1402, %v1400
        %v1495 = vpack.c.b16 %v1405, %v1403
        %v1496 = vpack.c.b16 %v1406, %v1404
        %v1497 = vpack.c.b16 %v1409, %v1407
        %v1498 = vpack.c.b16 %v1410, %v1408
        %v1499 = vpack.c.b16 %v1413, %v1411
        %v1500 = vpack.c.b16 %v1414, %v1412
        %v1501 = vpack.c.b16 %v1417, %v1415
        %v1502 = vpack.c.b16 %v1418, %v1416
        %v1503 = vpack.c.b16 %v1421, %v1419
        %v1504 = vpack.c.b16 %v1422, %v1420
        %v1505 = vpack.c.b16 %v1425, %v1423
        %v1506 = vpack.c.b16 %v1426, %v1424
        %v1507 = vpack.c.b16 %v1429, %v1427
        %v1508 = vpack.c.b16 %v1430, %v1428
        %v1509 = vpack.c.b16 %v1433, %v1431
        %v1510 = vpack.c.b16 %v1434, %v1432
        %v1511 = vpack.c.b16 %v1437, %v1435
        %v1512 = vpack.c.b16 %v1438, %v1436
        %v1513 = vpack.c.b16 %v1441, %v1439
        %v1514 = vpack.c.b16 %v1442, %v1440
        %v1515 = vpack.c.b16 %v1445, %v1443
        %v1516 = vpack.c.b16 %v1446, %v1444
        %v1517 = vpack.c.b16 %v1449, %v1447
        %v1518 = vpack.c.b16 %v1450, %v1448
        %v1519 = vpack.c.b16 %v1453, %v1451
        %v1520 = vpack.c.b16 %v1454, %v1452
        %v1521 = vpack.c.b16 %v1457, %v1455
        %v1522 = vpack.c.b16 %v1458, %v1456
        %v1523 = vpack.c.b16 %v1461, %v1459
        %v1524 = vpack.c.b16 %v1462, %v1460
        %v1525 = vpack.c.b16 %v1465, %v1463
        %v1526 = vpack.c.b16 %v1466, %v1464
        %v1527 = vpack.c.b16 %v1469, %v1467
        %v1528 = vpack.c.b16 %v1470, %v1468
        %v1529 = vpack.c.b16 %v1473, %v1471
        %v1530 = vpack.c.b16 %v1474, %v1472
        %v1531 = vpack.c.b16 %v1477, %v1475
        %v1532 = vpack.c.b16 %v1478, %v1476
        %v1533 = vpack.c.b16 %v1481, %v1479
        %v1534 = vpack.c.b16 %v1482, %v1480
        %v1535 = vpack.c.b16 %v1485, %v1483
        %v1536 = vpack.c.b16 %v1486, %v1484
        %v1588 = vsel %vm988, %v1325, 0
        %1590 = vmatprep.subr.bf16.mxu0 %v1488
        %1591 = vmatpush1.bf16.msra.mxu0 %v1487
        %1592 = vmatprep.subr.bf16.mxu0 %v1490
        %1593 = vmatpush1.bf16.msra.mxu0 %v1489
        %1594 = vmatprep.subr.bf16.mxu0 %v1492
        %1595 = vmatpush1.bf16.msra.mxu0 %v1491
        %1596 = vmatprep.subr.bf16.mxu0 %v1494
        %1597 = vmatpush1.bf16.msra.mxu0 %v1493
        %1598 = vmatprep.subr.bf16.mxu0 %v1496
        %1599 = vmatpush1.bf16.msra.mxu0 %v1495
        %1600 = vmatprep.subr.bf16.mxu0 %v1498
        %1601 = vmatpush1.bf16.msra.mxu0 %v1497
        %1602 = vmatprep.subr.bf16.mxu0 %v1500
        %1603 = vmatpush1.bf16.msra.mxu0 %v1499
        %1604 = vmatprep.subr.bf16.mxu0 %v1502
        %1605 = vmatpush1.bf16.msra.mxu0 %v1501
        %1606 = vmatprep.subr.bf16.mxu0 %v1504
        %1607 = vmatpush1.bf16.msra.mxu0 %v1503
        %1608 = vmatprep.subr.bf16.mxu0 %v1506
        %1609 = vmatpush1.bf16.msra.mxu0 %v1505
        %1610 = vmatprep.subr.bf16.mxu0 %v1508
        %1611 = vmatpush1.bf16.msra.mxu0 %v1507
        %1612 = vmatprep.subr.bf16.mxu0 %v1510
        %1613 = vmatpush1.bf16.msra.mxu0 %v1509
        %1614 = vmatprep.subr.bf16.mxu0 %v1512
        %1615 = vmatpush1.bf16.msra.mxu0 %v1511
        %1616 = vmatprep.subr.bf16.mxu0 %v1514
        %1617 = vmatpush1.bf16.msra.mxu0 %v1513
        %1618 = vmatprep.subr.bf16.mxu0 %v1516
        %1619 = vmatpush1.bf16.msra.mxu0 %v1515
        %1620 = vmatprep.subr.bf16.mxu0 %v1518
        %1621 = vmatpush1.bf16.msra.mxu0 %v1517
        %1622 = vmatprep.mubr.bf16.mxu0 %v1323
        %1623 = vmatmul.mubr.bf16.gmra.mrb[0].mxu0 %v1322
        %v1624 = vpop.f32.mrb[0].mxu0
        %v1625 = vadd.f32 %v1330, %v1624
        %v1626 = vpop.f32.mrb[0].mxu0
        %v1627 = vadd.f32 %v1334, %v1626
        %v1628 = vpop.f32.mrb[0].mxu0
        %v1629 = vadd.f32 %v1330, %v1628
        %v1630 = vpop.f32.mrb[0].mxu0
        %v1631 = vadd.f32 %v1334, %v1630
        %1632 = vdwg.mxu0
        %1633 = vmatprep.subr.bf16.mxu0 %v1520
        %1634 = vmatpush1.bf16.msra.mxu0 %v1519
        %1635 = vmatprep.subr.bf16.mxu0 %v1522
        %1636 = vmatpush1.bf16.msra.mxu0 %v1521
        %1637 = vmatprep.subr.bf16.mxu0 %v1524
        %1638 = vmatpush1.bf16.msra.mxu0 %v1523
        %1639 = vmatprep.subr.bf16.mxu0 %v1526
        %1640 = vmatpush1.bf16.msra.mxu0 %v1525
        %1641 = vmatprep.subr.bf16.mxu0 %v1528
        %1642 = vmatpush1.bf16.msra.mxu0 %v1527
        %1643 = vmatprep.subr.bf16.mxu0 %v1530
        %1644 = vmatpush1.bf16.msra.mxu0 %v1529
        %1645 = vmatprep.subr.bf16.mxu0 %v1532
        %1646 = vmatpush1.bf16.msra.mxu0 %v1531
        %1647 = vmatprep.subr.bf16.mxu0 %v1534
        %1648 = vmatpush1.bf16.msra.mxu0 %v1533
        %1649 = vmatprep.subr.bf16.mxu0 %v1536
        %1650 = vmatpush1.bf16.msra.mxu0 %v1535
        %1651 = vmatprep.subr.bf16.mxu0 0
        %1652 = vmatpush1.bf16.msra.mxu0 0
        %1653 = vmatprep.subr.bf16.mxu0 0
        %1654 = vmatpush1.bf16.msra.mxu0 0
        %1655 = vmatprep.subr.bf16.mxu0 0
        %1656 = vmatpush1.bf16.msra.mxu0 0
        %1657 = vmatprep.subr.bf16.mxu0 0
        %1658 = vmatpush1.bf16.msra.mxu0 0
        %1659 = vmatprep.subr.bf16.mxu0 0
        %1660 = vmatpush1.bf16.msra.mxu0 0
        %1661 = vmatprep.subr.bf16.mxu0 0
        %1662 = vmatpush1.bf16.msra.mxu0 0
        %1663 = vmatprep.subr.bf16.mxu0 0
        %1664 = vmatpush1.bf16.msra.mxu0 0
        %1665 = vmatprep.mubr.bf16.mxu0 %v1588
        %1666 = vmatmul.mubr.bf16.gmra.mrb[0].mxu0 %v1324
        %v1667 = vpop.f32.mrb[0].mxu0
        %v1668 = vadd.f32 %v1625, %v1667
        %v1669 = vpop.f32.mrb[0].mxu0
        %v1670 = vadd.f32 %v1627, %v1669
        %v1671 = vpop.f32.mrb[0].mxu0
        %v1672 = vadd.f32 %v1629, %v1671
        %v1673 = vpop.f32.mrb[0].mxu0
        %v1674 = vadd.f32 %v1631, %v1673
        %1675 = vdwg.mxu0
        %v1676 = vmul.f32 %v1668, %v999
        %v1677 = vmul.f32 %v1670, %v999
        %v1678 = vmul.f32 %v1672, %v1000
        %v1679 = vmul.f32 %v1674, %v1000
        %v1680 = vmax.f32 %v1676, 0.0
        %v1681 = vmax.f32 %v1677, 0.0
        %v1682 = vmax.f32 %v1678, 0.0
        %v1683 = vmax.f32 %v1679, 0.0
        %1686 = vrot.lane.b32.xlu0 %v1101, 72
        %v1687 = vpop.permute.xlu0 %1686
        %1688 = vrot.lane.b32.xlu0 %v1102, 72
        %v1689 = vpop.permute.xlu0 %1688
        %vm1692 = vcmask 588800
        %v1693 = vsel %vm1692, %v1681, %v1687
        %v1694 = vsel %vm1692, %v1683, %v1689
        %v1695 = vld [vmem:[%s15] sm:$0xff]
        %v1696 = vld [vmem:[%s15 + $0x8] sm:$0xff]
        %v1697 = vld [vmem:[%s15 + $0x10] sm:$0xff]
        %v1698 = vld [vmem:[%s15 + $0x18] sm:$0xff]
        %v1699 = vld [vmem:[%s15 + $0x20] sm:$0xff]
        %v1700 = vld [vmem:[%s15 + $0x28] sm:$0xff]
        %v1701 = vld [vmem:[%s15 + $0x30] sm:$0xff]
        %v1702 = vld [vmem:[%s15 + $0x38] sm:$0xff]
        %v1703 = vld [vmem:[%s15 + $0x40] sm:$0xff]
        %v1704 = vld [vmem:[%s15 + $0x48] sm:$0xff]
        %v1705 = vld [vmem:[%s15 + $0x50] sm:$0xff]
        %v1706 = vld [vmem:[%s15 + $0x58] sm:$0xff]
        %v1707 = vld [vmem:[%s15 + $0x60] sm:$0xff]
        %v1708 = vld [vmem:[%s15 + $0x68] sm:$0xff]
        %v1709 = vld [vmem:[%s15 + $0x70] sm:$0xff]
        %v1710 = vld [vmem:[%s15 + $0x78] sm:$0xff]
        %v1711 = vld [vmem:[%s15 + $0x80] sm:$0xff]
        %v1712 = vld [vmem:[%s15 + $0x88] sm:$0xff]
        %v1713 = vld [vmem:[%s15 + $0x90] sm:$0xff]
        %v1714 = vld [vmem:[%s15 + $0x98] sm:$0xff]
        %v1715 = vld [vmem:[%s15 + $0xa0] sm:$0xff]
        %v1716 = vld [vmem:[%s15 + $0xa8] sm:$0xff]
        %v1717 = vld [vmem:[%s15 + $0xb0] sm:$0xff]
        %v1718 = vld [vmem:[%s15 + $0xb8] sm:$0xff]
        %v1719 = vld [vmem:[%s15 + $0xc0] sm:$0xff]
        %v1720 = vld [vmem:[%s15 + $0xc8] sm:$0xff]
        %v1721 = vld [vmem:[%s15 + $0xd0] sm:$0xff]
        %v1722 = vld [vmem:[%s15 + $0xd8] sm:$0x33]
        %v1723 = vld [vmem:[%s16] sm:$0x3]
        %1724 = vmatprep.subr.mxu0 %v1693
        %1725 = vmatpush1.msra.mxu0 %v1680
        %1726 = vmatprep.subr.mxu0 %v1694
        %1727 = vmatpush1.msra.mxu0 %v1682
        %1728 = vmatprep.subr.mxu0 0.0
        %1729 = vmatpush1.msra.mxu0 0.0
        %1730 = vmatprep.subr.mxu0 0.0
        %1731 = vmatpush1.msra.mxu0 0.0
        %1732 = vmatprep.subr.mxu0 0.0
        %1733 = vmatpush1.msra.mxu0 0.0
        %1734 = vmatprep.subr.mxu0 0.0
        %1735 = vmatpush1.msra.mxu0 0.0
        %1736 = vmatprep.subr.mxu0 0.0
        %1737 = vmatpush1.msra.mxu0 0.0
        %1738 = vmatprep.subr.mxu0 0.0
        %1739 = vmatpush1.msra.mxu0 0.0
        %1740 = vmatprep.subr.mxu0 0.0
        %1741 = vmatpush1.msra.mxu0 0.0
        %1742 = vmatprep.subr.mxu0 0.0
        %1743 = vmatpush1.msra.mxu0 0.0
        %1744 = vmatprep.subr.mxu0 0.0
        %1745 = vmatpush1.msra.mxu0 0.0
        %1746 = vmatprep.subr.mxu0 0.0
        %1747 = vmatpush1.msra.mxu0 0.0
        %1748 = vmatprep.subr.mxu0 0.0
        %1749 = vmatpush1.msra.mxu0 0.0
        %1750 = vmatprep.subr.mxu0 0.0
        %1751 = vmatpush1.msra.mxu0 0.0
        %1752 = vmatprep.subr.mxu0 0.0
        %1753 = vmatpush1.msra.mxu0 0.0
        %1754 = vmatprep.subr.mxu0 0.0
        %1755 = vmatpush1.msra.mxu0 0.0
        %1756 = vmatprep.subr.mxu0 0.0
        %1757 = vmatpush1.msra.mxu0 0.0
        %1758 = vmatprep.subr.mxu0 0.0
        %1759 = vmatpush1.msra.mxu0 0.0
        %1760 = vmatprep.subr.mxu0 0.0
        %1761 = vmatpush1.msra.mxu0 0.0
        %1762 = vmatprep.subr.mxu0 0.0
        %1763 = vmatpush1.msra.mxu0 0.0
        %1764 = vmatprep.subr.mxu0 0.0
        %1765 = vmatpush1.msra.mxu0 0.0
        %1766 = vmatprep.subr.mxu0 0.0
        %1767 = vmatpush1.msra.mxu0 0.0
        %1768 = vmatprep.subr.mxu0 0.0
        %1769 = vmatpush1.msra.mxu0 0.0
        %1770 = vmatprep.subr.mxu0 0.0
        %1771 = vmatpush1.msra.mxu0 0.0
        %1772 = vmatprep.subr.mxu0 0.0
        %1773 = vmatpush1.msra.mxu0 0.0
        %1774 = vmatprep.subr.mxu0 0.0
        %1775 = vmatpush1.msra.mxu0 0.0
        %1776 = vmatprep.subr.mxu0 0.0
        %1777 = vmatpush1.msra.mxu0 0.0
        %1778 = vmatprep.subr.mxu0 0.0
        %1779 = vmatpush1.msra.mxu0 0.0
        %1780 = vmatprep.subr.mxu0 0.0
        %1781 = vmatpush1.msra.mxu0 0.0
        %1782 = vmatprep.subr.mxu0 0.0
        %1783 = vmatpush1.msra.mxu0 0.0
        %1784 = vmatprep.subr.mxu0 0.0
        %1785 = vmatpush1.msra.mxu0 0.0
        %1786 = vmatprep.subr.mxu0 0.0
        %1787 = vmatpush1.msra.mxu0 0.0
        %1788 = vmatprep.mubr.f32.mxu0 0.0
        %1789 = vmatmul.mubr.f32.gmra.mrb[0].mxu0 %v1163
        %v1790 = vpop.f32.mrb[0].mxu0
        %v1791 = vadd.f32 %v1680, %v1790
        %v1792 = vpop.f32.mrb[0].mxu0
        %v1793 = vadd.f32 %v1693, %v1792
        %1794 = vmatprep.mubr.f32.mxu0 0.0
        %1795 = vmatmul.mubr.f32.gmra.mrb[0].mxu0 %v1166
        %v1796 = vpop.f32.mrb[0].mxu0
        %v1797 = vadd.f32 %v1682, %v1796
        %v1798 = vpop.f32.mrb[0].mxu0
        %v1799 = vadd.f32 %v1694, %v1798
        %1800 = vdwg.mxu0
        %v1801 = vpack.c.bf16 %v1797, %v1791
        %v1802 = vpack.c.bf16 %v1799, %v1793
        %v1804 = vlaneseq
        %v1805 = vshrl.u32 %v1804, 7
        %v1806 = vsub.s32 0, %v1805
        %v1807 = vrot.slane %v1723, %v1806
        %v1808 = vlaneseq
        %v1809 = vshrl.u32 %v1808, 7
        %v1810 = vsub.s32 1, %v1809
        %v1811 = vrot.slane %v1723, %v1810
        %v1842 = vunpack.c.l.b16 %v1695
        %v1843 = vunpack.c.h.b16 %v1695
        %v1844 = vunpack.c.l.b16 %v1696
        %v1845 = vunpack.c.h.b16 %v1696
        %v1846 = vunpack.c.l.b16 %v1697
        %v1847 = vunpack.c.h.b16 %v1697
        %v1848 = vunpack.c.l.b16 %v1698
        %v1849 = vunpack.c.h.b16 %v1698
        %v1850 = vunpack.c.l.b16 %v1699
        %v1851 = vunpack.c.h.b16 %v1699
        %v1852 = vunpack.c.l.b16 %v1700
        %v1853 = vunpack.c.h.b16 %v1700
        %v1854 = vunpack.c.l.b16 %v1701
        %v1855 = vunpack.c.h.b16 %v1701
        %v1856 = vunpack.c.l.b16 %v1702
        %v1857 = vunpack.c.h.b16 %v1702
        %v1858 = vunpack.c.l.b16 %v1703
        %v1859 = vunpack.c.h.b16 %v1703
        %v1860 = vunpack.c.l.b16 %v1704
        %v1861 = vunpack.c.h.b16 %v1704
        %v1862 = vunpack.c.l.b16 %v1705
        %v1863 = vunpack.c.h.b16 %v1705
        %v1864 = vunpack.c.l.b16 %v1706
        %v1865 = vunpack.c.h.b16 %v1706
        %v1866 = vunpack.c.l.b16 %v1707
        %v1867 = vunpack.c.h.b16 %v1707
        %v1868 = vunpack.c.l.b16 %v1708
        %v1869 = vunpack.c.h.b16 %v1708
        %v1870 = vunpack.c.l.b16 %v1709
        %v1871 = vunpack.c.h.b16 %v1709
        %v1872 = vunpack.c.l.b16 %v1710
        %v1873 = vunpack.c.h.b16 %v1710
        %v1874 = vunpack.c.l.b16 %v1711
        %v1875 = vunpack.c.h.b16 %v1711
        %v1876 = vunpack.c.l.b16 %v1712
        %v1877 = vunpack.c.h.b16 %v1712
        %v1878 = vunpack.c.l.b16 %v1713
        %v1879 = vunpack.c.h.b16 %v1713
        %v1880 = vunpack.c.l.b16 %v1714
        %v1881 = vunpack.c.h.b16 %v1714
        %v1882 = vunpack.c.l.b16 %v1715
        %v1883 = vunpack.c.h.b16 %v1715
        %v1884 = vunpack.c.l.b16 %v1716
        %v1885 = vunpack.c.h.b16 %v1716
        %v1886 = vunpack.c.l.b16 %v1717
        %v1887 = vunpack.c.h.b16 %v1717
        %v1888 = vunpack.c.l.b16 %v1718
        %v1889 = vunpack.c.h.b16 %v1718
        %v1890 = vunpack.c.l.b16 %v1719
        %v1891 = vunpack.c.h.b16 %v1719
        %v1892 = vunpack.c.l.b16 %v1720
        %v1893 = vunpack.c.h.b16 %v1720
        %v1894 = vunpack.c.l.b16 %v1721
        %v1895 = vunpack.c.h.b16 %v1721
        %v1896 = vunpack.c.l.b16 %v1722
        %v1897 = vunpack.c.h.b16 %v1722
        %v1898 = vpack.c.b16 %v1844, %v1842
        %v1899 = vpack.c.b16 %v1845, %v1843
        %v1900 = vpack.c.b16 %v1848, %v1846
        %v1901 = vpack.c.b16 %v1849, %v1847
        %v1902 = vpack.c.b16 %v1852, %v1850
        %v1903 = vpack.c.b16 %v1853, %v1851
        %v1904 = vpack.c.b16 %v1856, %v1854
        %v1905 = vpack.c.b16 %v1857, %v1855
        %v1906 = vpack.c.b16 %v1860, %v1858
        %v1907 = vpack.c.b16 %v1861, %v1859
        %v1908 = vpack.c.b16 %v1864, %v1862
        %v1909 = vpack.c.b16 %v1865, %v1863
        %v1910 = vpack.c.b16 %v1868, %v1866
        %v1911 = vpack.c.b16 %v1869, %v1867
        %v1912 = vpack.c.b16 %v1872, %v1870
        %v1913 = vpack.c.b16 %v1873, %v1871
        %v1914 = vpack.c.b16 %v1876, %v1874
        %v1915 = vpack.c.b16 %v1877, %v1875
        %v1916 = vpack.c.b16 %v1880, %v1878
        %v1917 = vpack.c.b16 %v1881, %v1879
        %v1918 = vpack.c.b16 %v1884, %v1882
        %v1919 = vpack.c.b16 %v1885, %v1883
        %v1920 = vpack.c.b16 %v1888, %v1886
        %v1921 = vpack.c.b16 %v1889, %v1887
        %v1922 = vpack.c.b16 %v1892, %v1890
        %v1923 = vpack.c.b16 %v1893, %v1891
        %v1924 = vpack.c.b16 %v1896, %v1894
        %v1925 = vpack.c.b16 %v1897, %v1895
        %vm1952 = vcmask 752640
        %v1954 = vsel %vm1952, %v1802, 0
        %vm1956 = vcmask 1045504
        %v1958 = vsel %vm1956, %v1924, 0
        %v1961 = vsel %vm1956, %v1925, 0
        %1963 = vmatprep.subr.bf16.mxu0 %v1899
        %1964 = vmatpush1.bf16.msra.mxu0 %v1898
        %1965 = vmatprep.subr.bf16.mxu0 %v1901
        %1966 = vmatpush1.bf16.msra.mxu0 %v1900
        %1967 = vmatprep.subr.bf16.mxu0 %v1903
        %1968 = vmatpush1.bf16.msra.mxu0 %v1902
        %1969 = vmatprep.subr.bf16.mxu0 %v1905
        %1970 = vmatpush1.bf16.msra.mxu0 %v1904
        %1971 = vmatprep.subr.bf16.mxu0 %v1907
        %1972 = vmatpush1.bf16.msra.mxu0 %v1906
        %1973 = vmatprep.subr.bf16.mxu0 %v1909
        %1974 = vmatpush1.bf16.msra.mxu0 %v1908
        %1975 = vmatprep.subr.bf16.mxu0 %v1911
        %1976 = vmatpush1.bf16.msra.mxu0 %v1910
        %1977 = vmatprep.subr.bf16.mxu0 %v1913
        %1978 = vmatpush1.bf16.msra.mxu0 %v1912
        %1979 = vmatprep.subr.bf16.mxu0 %v1915
        %1980 = vmatpush1.bf16.msra.mxu0 %v1914
        %1981 = vmatprep.subr.bf16.mxu0 %v1917
        %1982 = vmatpush1.bf16.msra.mxu0 %v1916
        %1983 = vmatprep.subr.bf16.mxu0 %v1919
        %1984 = vmatpush1.bf16.msra.mxu0 %v1918
        %1985 = vmatprep.subr.bf16.mxu0 %v1921
        %1986 = vmatpush1.bf16.msra.mxu0 %v1920
        %1987 = vmatprep.subr.bf16.mxu0 %v1923
        %1988 = vmatpush1.bf16.msra.mxu0 %v1922
        %1989 = vmatprep.subr.bf16.mxu0 %v1961
        %1990 = vmatpush1.bf16.msra.mxu0 %v1958
        %1991 = vmatprep.subr.bf16.mxu0 0
        %1992 = vmatpush1.bf16.msra.mxu0 0
        %1993 = vmatprep.subr.bf16.mxu0 0
        %1994 = vmatpush1.bf16.msra.mxu0 0
        %1995 = vmatprep.mubr.bf16.mxu0 %v1954
        %1996 = vmatmul.mubr.bf16.gmra.mrb[0].mxu0 %v1801
        %v1997 = vpop.f32.mrb[0].mxu0
        %v1998 = vadd.f32 %v1807, %v1997
        %v1999 = vpop.f32.mrb[0].mxu0
        %v2000 = vadd.f32 %v1811, %v1999
        %v2001 = vpop.f32.mrb[0].mxu0
        %v2002 = vadd.f32 %v1807, %v2001
        %v2003 = vpop.f32.mrb[0].mxu0
        %v2004 = vadd.f32 %v1811, %v2003
        %2005 = vdwg.mxu0
        %v2006 = vmul.f32 %v1998, %v999
        %v2007 = vmul.f32 %v2000, %v999
        %v2008 = vmul.f32 %v2002, %v1000
        %v2009 = vmul.f32 %v2004, %v1000
        %v2010 = vmax.f32 %v2006, 0.0
        %v2011 = vmax.f32 %v2007, 0.0
        %v2012 = vmax.f32 %v2008, 0.0
        %v2013 = vmax.f32 %v2009, 0.0
        %v2014 = vsel %vm1692, %v2011, %v1687
        %v2015 = vsel %vm1692, %v2013, %v1689
        %v2016 = vsel %vm1003, 1, 0
        %v2017 = vsel %vm1004, 1, 0
        %2018 = vset.pattern.permute.xlu0 0
        %2019 = vperm.xlu0 %2018, %v2016
        %v2020 = vpop.permute.xlu0 %2019
        %2021 = vset.pattern.permute.xlu0 0
        %2022 = vperm.xlu0 %2021, %v2017
        %v2023 = vpop.permute.xlu0 %2022
        %vm2024 = vcmp.eq.s32.totalorder %v2020, 1
        %vm2025 = vcmp.eq.s32.totalorder %v2023, 1
        %v2026 = vsel %vm2024, -1e+12, %v2010
        %v2027 = vsel %vm2024, -1e+12, %v2014
        %v2028 = vsel %vm2025, -1e+12, %v2012
        %v2029 = vsel %vm2025, -1e+12, %v2015
        %v2030 = vmax.f32 %v2026, %v2028
        %v2031 = vrot.slane %v2030, 4
        %v2032 = vmax.f32 %v2030, %v2031
        %v2033 = vrot.slane %v2032, 2
        %v2034 = vmax.f32 %v2032, %v2033
        %v2035 = vrot.slane %v2034, 1
        %v2036 = vmax.f32 %v2034, %v2035
        %v2037 = vsel %vm1952, %v2027, -inf
        %v2038 = vsel %vm1952, %v2029, -inf
        %v2039 = vmax.f32 %v2037, %v2038
        %v2040 = vrot.slane %v2039, 4
        %v2041 = vmax.f32 %v2039, %v2040
        %v2042 = vrot.slane %v2041, 2
        %v2043 = vmax.f32 %v2041, %v2042
        %v2044 = vrot.slane %v2043, 1
        %v2045 = vmax.f32 %v2043, %v2044
        %v2048 = vcombine.low %v2036, %v2045
        %v2050 = vunpack.c.l.s4 1966171168
        %v2051 = vunpack.c.0.s8 %v2050
        %v2052 = vlaneseq
        %v2053 = vshrl.u32 %v2052, 7
        %v2054 = vsub.s32 %v2051, %v2053
        %v2055 = vrot.slane %v2048, %v2054
        %v2057 = vunpack.c.l.s4 1966171168
        %v2058 = vunpack.c.0.s8 %v2057
        %v2059 = vlaneseq
        %v2060 = vshrl.u32 %v2059, 7
        %v2061 = vsub.s32 %v2058, %v2060
        %v2062 = vrot.slane %v2055, %v2061
        %v2064 = vlaneseq
        %vm2065 = vcmp.ge.s32.totalorder %v2064, 0
        %vm2066 = vcmp.lt.s32.totalorder %v2064, 220
        %vm2067 = vmand %vm2065, %vm2066
        %2068 = vst.msk [vmem:[%s927] sm:$0x3] %vm2067, %v2062
        %v2069 = vld [vmem:[%s956] sm:$0xff]
        %v2070 = vld [vmem:[%s956 + $0x8] sm:$0xff]
        %v2071 = vld [vmem:[%s956 + $0x10] sm:$0xff]
        %v2072 = vld [vmem:[%s956 + $0x18] sm:$0xff]
        %vm2073 = vcmp.gt.f32.partialorder %v2069, 0.5
        %vm2074 = vcmp.gt.f32.partialorder %v2070, 0.5
        %vm2075 = vcmp.gt.f32.partialorder %v2071, 0.5
        %vm2076 = vcmp.gt.f32.partialorder %v2072, 0.5
        %v2077 = vsel %vm2073, 1, 0
        %v2078 = vsel %vm2074, 1, 0
        %v2079 = vsel %vm2075, 1, 0
        %v2080 = vsel %vm2076, 1, 0
        %2081 = vset.pattern.permute.xlu0 0
        %2082 = vperm.xlu0 %2081, %v2077
        %v2083 = vpop.permute.xlu0 %2082
        %2084 = vset.pattern.permute.xlu0 0
        %2085 = vperm.xlu0 %2084, %v2078
        %v2086 = vpop.permute.xlu0 %2085
        %2087 = vset.pattern.permute.xlu0 0
        %2088 = vperm.xlu0 %2087, %v2079
        %v2089 = vpop.permute.xlu0 %2088
        %2090 = vset.pattern.permute.xlu0 0
        %2091 = vperm.xlu0 %2090, %v2080
        %v2092 = vpop.permute.xlu0 %2091
        %vm2093 = vcmp.eq.s32.totalorder %v2083, 1
        %vm2094 = vcmp.eq.s32.totalorder %v2086, 1
        %vm2095 = vcmp.eq.s32.totalorder %v2089, 1
        %vm2096 = vcmp.eq.s32.totalorder %v2092, 1
        %v2097 = vsel %vm2093, -1e+12, %v2010
        %v2098 = vsel %vm2093, -1e+12, %v2014
        %v2099 = vsel %vm2094, -1e+12, %v2012
        %v2100 = vsel %vm2094, -1e+12, %v2015
        %v2101 = vsel %vm2095, -1e+12, %v2010
        %v2102 = vsel %vm2095, -1e+12, %v2014
        %v2103 = vsel %vm2096, -1e+12, %v2012
        %v2104 = vsel %vm2096, -1e+12, %v2015
        %v2105 = vmax.f32 %v2097, %v2099
        %v2106 = vrot.slane %v2105, 4
        %v2107 = vmax.f32 %v2105, %v2106
        %v2108 = vrot.slane %v2107, 2
        %v2109 = vmax.f32 %v2107, %v2108
        %v2110 = vrot.slane %v2109, 1
        %v2111 = vmax.f32 %v2109, %v2110
        %v2112 = vsel %vm1952, %v2098, -inf
        %v2113 = vsel %vm1952, %v2100, -inf
        %v2114 = vmax.f32 %v2112, %v2113
        %v2115 = vrot.slane %v2114, 4
        %v2116 = vmax.f32 %v2114, %v2115
        %v2117 = vrot.slane %v2116, 2
        %v2118 = vmax.f32 %v2116, %v2117
        %v2119 = vrot.slane %v2118, 1
        %v2120 = vmax.f32 %v2118, %v2119
        %v2121 = vmax.f32 %v2101, %v2103
        %v2122 = vrot.slane %v2121, 4
        %v2123 = vmax.f32 %v2121, %v2122
        %v2124 = vrot.slane %v2123, 2
        %v2125 = vmax.f32 %v2123, %v2124
        %v2126 = vrot.slane %v2125, 1
        %v2127 = vmax.f32 %v2125, %v2126
        %v2128 = vsel %vm1952, %v2102, -inf
        %v2129 = vsel %vm1952, %v2104, -inf
        %v2130 = vmax.f32 %v2128, %v2129
        %v2131 = vrot.slane %v2130, 4
        %v2132 = vmax.f32 %v2130, %v2131
        %v2133 = vrot.slane %v2132, 2
        %v2134 = vmax.f32 %v2132, %v2133
        %v2135 = vrot.slane %v2134, 1
        %v2136 = vmax.f32 %v2134, %v2135
        %v2137 = vld [vmem:[%s961] sm:$0xff]
        %v2138 = vld [vmem:[%s961 + $0x8] sm:$0xff]
        %v2139 = vld [vmem:[%s961 + $0x10] sm:$0xff]
        %v2140 = vld [vmem:[%s961 + $0x18] sm:$0xff]
        %vm2141 = vcmp.gt.f32.partialorder %v2137, 0.5
        %vm2142 = vcmp.gt.f32.partialorder %v2138, 0.5
        %vm2143 = vcmp.gt.f32.partialorder %v2139, 0.5
        %vm2144 = vcmp.gt.f32.partialorder %v2140, 0.5
        %v2145 = vsel %vm2141, 1, 0
        %v2146 = vsel %vm2142, 1, 0
        %v2147 = vsel %vm2143, 1, 0
        %v2148 = vsel %vm2144, 1, 0
        %2149 = vset.pattern.permute.xlu0 0
        %2150 = vperm.xlu0 %2149, %v2145
        %v2151 = vpop.permute.xlu0 %2150
        %2152 = vset.pattern.permute.xlu0 0
        %2153 = vperm.xlu0 %2152, %v2146
        %v2154 = vpop.permute.xlu0 %2153
        %2155 = vset.pattern.permute.xlu0 0
        %2156 = vperm.xlu0 %2155, %v2147
        %v2157 = vpop.permute.xlu0 %2156
        %2158 = vset.pattern.permute.xlu0 0
        %2159 = vperm.xlu0 %2158, %v2148
        %v2160 = vpop.permute.xlu0 %2159
        %vm2161 = vcmp.eq.s32.totalorder %v2151, 1
        %vm2162 = vcmp.eq.s32.totalorder %v2154, 1
        %vm2163 = vcmp.eq.s32.totalorder %v2157, 1
        %vm2164 = vcmp.eq.s32.totalorder %v2160, 1
        %v2165 = vsel %vm2161, -1e+12, %v2010
        %v2166 = vsel %vm2161, -1e+12, %v2014
        %v2167 = vsel %vm2162, -1e+12, %v2012
        %v2168 = vsel %vm2162, -1e+12, %v2015
        %v2169 = vsel %vm2163, -1e+12, %v2010
        %v2170 = vsel %vm2163, -1e+12, %v2014
        %v2171 = vsel %vm2164, -1e+12, %v2012
        %v2172 = vsel %vm2164, -1e+12, %v2015
        %v2173 = vmax.f32 %v2165, %v2167
        %v2174 = vrot.slane %v2173, 4
        %v2175 = vmax.f32 %v2173, %v2174
        %v2176 = vrot.slane %v2175, 2
        %v2177 = vmax.f32 %v2175, %v2176
        %v2178 = vrot.slane %v2177, 1
        %v2179 = vmax.f32 %v2177, %v2178
        %v2180 = vsel %vm1952, %v2166, -inf
        %v2181 = vsel %vm1952, %v2168, -inf
        %v2182 = vmax.f32 %v2180, %v2181
        %v2183 = vrot.slane %v2182, 4
        %v2184 = vmax.f32 %v2182, %v2183
        %v2185 = vrot.slane %v2184, 2
        %v2186 = vmax.f32 %v2184, %v2185
        %v2187 = vrot.slane %v2186, 1
        %v2188 = vmax.f32 %v2186, %v2187
        %v2189 = vmax.f32 %v2169, %v2171
        %v2190 = vrot.slane %v2189, 4
        %v2191 = vmax.f32 %v2189, %v2190
        %v2192 = vrot.slane %v2191, 2
        %v2193 = vmax.f32 %v2191, %v2192
        %v2194 = vrot.slane %v2193, 1
        %v2195 = vmax.f32 %v2193, %v2194
        %v2196 = vsel %vm1952, %v2170, -inf
        %v2197 = vsel %vm1952, %v2172, -inf
        %v2198 = vmax.f32 %v2196, %v2197
        %v2199 = vrot.slane %v2198, 4
        %v2200 = vmax.f32 %v2198, %v2199
        %v2201 = vrot.slane %v2200, 2
        %v2202 = vmax.f32 %v2200, %v2201
        %v2203 = vrot.slane %v2202, 1
        %v2204 = vmax.f32 %v2202, %v2203
        %v2205 = vld [vmem:[%s965] sm:$0x3]
        %vm2210 = vcmask 1041409
        %v2211 = vsel %vm2210, %v2127, %v2111
        %v2212 = vsel %vm2210, %v2136, %v2120
        %2216 = vrot.lane.b32.xlu0 %v2205, 92
        %v2217 = vpop.permute.xlu0 %2216
        %v2219 = vsel %vm1952, %v2212, %v2217
        %v2220 = vld [vmem:[%s969] sm:$0x3]
        %v2225 = vsel %vm2210, %v2195, %v2179
        %v2226 = vsel %vm2210, %v2204, %v2188
        %2230 = vrot.lane.b32.xlu0 %v2220, 92
        %v2231 = vpop.permute.xlu0 %2230
        %v2233 = vsel %vm1952, %v2226, %v2231
        %v2234 = vld [vmem:[%s974] sm:$0xff]
        %v2235 = vld [vmem:[%s974 + $0x8] sm:$0xff]
        %v2236 = vld [vmem:[%s974 + $0x10] sm:$0xff]
        %v2237 = vld [vmem:[%s974 + $0x18] sm:$0xff]
        %v2238 = vld [vmem:[%s979] sm:$0xff]
        %v2239 = vld [vmem:[%s979 + $0x8] sm:$0xff]
        %vm2240 = vcmp.gt.f32.partialorder %v2238, 0.5
        %vm2241 = vcmp.gt.f32.partialorder %v2239, 0.5
        %v2242 = vsel %vm2240, 1, 0
        %v2243 = vsel %vm2241, 1, 0
        %2244 = vset.pattern.permute.xlu0 0
        %2245 = vperm.xlu0 %2244, %v2242
        %v2246 = vpop.permute.xlu0 %2245
        %2247 = vset.pattern.permute.xlu0 0
        %2248 = vperm.xlu0 %2247, %v2243
        %v2249 = vpop.permute.xlu0 %2248
        %vm2250 = vcmp.eq.s32.totalorder %v2246, 1
        %vm2251 = vcmp.eq.s32.totalorder %v2249, 1
        %v2252 = vsel %vm2250, -1e+12, %v2234
        %v2253 = vsel %vm2250, -1e+12, %v2235
        %v2254 = vsel %vm2251, -1e+12, %v2236
        %v2255 = vsel %vm2251, -1e+12, %v2237
        %v2256 = vrot.slane %v2252, 4
        %v2257 = vmax.f32 %v2252, %v2256
        %v2258 = vrot.slane %v2257, 2
        %v2259 = vmax.f32 %v2257, %v2258
        %v2260 = vrot.slane %v2259, 1
        %v2261 = vmax.f32 %v2259, %v2260
        %vm2262 = vcmask 834560
        %v2263 = vsel %vm2262, %v2253, -inf
        %v2264 = vrot.slane %v2263, 4
        %v2265 = vmax.f32 %v2263, %v2264
        %v2266 = vrot.slane %v2265, 2
        %v2267 = vmax.f32 %v2265, %v2266
        %v2268 = vrot.slane %v2267, 1
        %v2269 = vmax.f32 %v2267, %v2268
        %v2270 = vrot.slane %v2254, 4
        %v2271 = vmax.f32 %v2254, %v2270
        %v2272 = vrot.slane %v2271, 2
        %v2273 = vmax.f32 %v2271, %v2272
        %v2274 = vrot.slane %v2273, 1
        %v2275 = vmax.f32 %v2273, %v2274
        %v2276 = vsel %vm2262, %v2255, -inf
        %v2277 = vrot.slane %v2276, 4
        %v2278 = vmax.f32 %v2276, %v2277
        %v2279 = vrot.slane %v2278, 2
        %v2280 = vmax.f32 %v2278, %v2279
        %v2281 = vrot.slane %v2280, 1
        %v2282 = vmax.f32 %v2280, %v2281
        %v2283 = vld [vmem:[%s984] sm:$0xff]
        %v2284 = vld [vmem:[%s984 + $0x8] sm:$0xff]
        %vm2285 = vcmp.gt.f32.partialorder %v2283, 0.5
        %vm2286 = vcmp.gt.f32.partialorder %v2284, 0.5
        %v2287 = vsel %vm2285, 1, 0
        %v2288 = vsel %vm2286, 1, 0
        %2289 = vset.pattern.permute.xlu0 0
        %2290 = vperm.xlu0 %2289, %v2287
        %v2291 = vpop.permute.xlu0 %2290
        %2292 = vset.pattern.permute.xlu0 0
        %2293 = vperm.xlu0 %2292, %v2288
        %v2294 = vpop.permute.xlu0 %2293
        %vm2295 = vcmp.eq.s32.totalorder %v2291, 1
        %vm2296 = vcmp.eq.s32.totalorder %v2294, 1
        %v2297 = vsel %vm2295, -1e+12, %v2234
        %v2298 = vsel %vm2295, -1e+12, %v2235
        %v2299 = vsel %vm2296, -1e+12, %v2236
        %v2300 = vsel %vm2296, -1e+12, %v2237
        %v2301 = vrot.slane %v2297, 4
        %v2302 = vmax.f32 %v2297, %v2301
        %v2303 = vrot.slane %v2302, 2
        %v2304 = vmax.f32 %v2302, %v2303
        %v2305 = vrot.slane %v2304, 1
        %v2306 = vmax.f32 %v2304, %v2305
        %v2307 = vsel %vm2262, %v2298, -inf
        %v2308 = vrot.slane %v2307, 4
        %v2309 = vmax.f32 %v2307, %v2308
        %v2310 = vrot.slane %v2309, 2
        %v2311 = vmax.f32 %v2309, %v2310
        %v2312 = vrot.slane %v2311, 1
        %v2313 = vmax.f32 %v2311, %v2312
        %v2314 = vrot.slane %v2299, 4
        %v2315 = vmax.f32 %v2299, %v2314
        %v2316 = vrot.slane %v2315, 2
        %v2317 = vmax.f32 %v2315, %v2316
        %v2318 = vrot.slane %v2317, 1
        %v2319 = vmax.f32 %v2317, %v2318
        %v2320 = vsel %vm2262, %v2300, -inf
        %v2321 = vrot.slane %v2320, 4
        %v2322 = vmax.f32 %v2320, %v2321
        %v2323 = vrot.slane %v2322, 2
        %v2324 = vmax.f32 %v2322, %v2323
        %v2325 = vrot.slane %v2324, 1
        %v2326 = vmax.f32 %v2324, %v2325
        %v2327 = vld [vmem:[%s951] sm:$0x3f]
        %v2329 = vlaneseq
        %v2330 = vshrl.u32 %v2329, 7
        %v2331 = vsub.s32 0, %v2330
        %v2332 = vrot.slane %v2327, %v2331
        %v2333 = vlaneseq
        %v2334 = vshrl.u32 %v2333, 7
        %v2335 = vsub.s32 1, %v2334
        %v2336 = vrot.slane %v2327, %v2335
        %v2337 = vlaneseq
        %v2338 = vshrl.u32 %v2337, 7
        %v2339 = vsub.s32 2, %v2338
        %v2340 = vrot.slane %v2327, %v2339
        %v2341 = vlaneseq
        %v2342 = vshrl.u32 %v2341, 7
        %v2343 = vsub.s32 3, %v2342
        %v2344 = vrot.slane %v2327, %v2343
        %v2345 = vlaneseq
        %v2346 = vshrl.u32 %v2345, 7
        %v2347 = vsub.s32 4, %v2346
        %v2348 = vrot.slane %v2327, %v2347
        %v2349 = vlaneseq
        %v2350 = vshrl.u32 %v2349, 7
        %v2351 = vsub.s32 5, %v2350
        %v2352 = vrot.slane %v2327, %v2351
        %v2359 = vpack.c.bf16 %v2332, %v2332
        %v2360 = vpack.c.bf16 %v2336, %v2336
        %v2361 = vpack.c.bf16 %v2340, %v2340
        %v2362 = vpack.c.bf16 %v2344, %v2344
        %v2363 = vpack.c.bf16 %v2348, %v2348
        %v2364 = vpack.c.bf16 %v2352, %v2352
        %v2365 = vld [vmem:[%s17] sm:$0xff]
        %v2366 = vld [vmem:[%s17 + $0x8] sm:$0xff]
        %v2367 = vld [vmem:[%s17 + $0x10] sm:$0xff]
        %v2368 = vld [vmem:[%s17 + $0x18] sm:$0xff]
        %v2369 = vld [vmem:[%s17 + $0x20] sm:$0xff]
        %v2370 = vld [vmem:[%s17 + $0x28] sm:$0xff]
        %v2371 = vld [vmem:[%s17 + $0x30] sm:$0xff]
        %v2372 = vld [vmem:[%s17 + $0x38] sm:$0xff]
        %v2373 = vld [vmem:[%s17 + $0x40] sm:$0xff]
        %v2374 = vld [vmem:[%s17 + $0x48] sm:$0xff]
        %v2375 = vld [vmem:[%s17 + $0x50] sm:$0xff]
        %v2376 = vld [vmem:[%s17 + $0x58] sm:$0xff]
        %v2377 = vld [vmem:[%s17 + $0x60] sm:$0xff]
        %v2378 = vld [vmem:[%s17 + $0x68] sm:$0xff]
        %v2379 = vld [vmem:[%s17 + $0x70] sm:$0xff]
        %v2380 = vld [vmem:[%s17 + $0x78] sm:$0xff]
        %v2381 = vld [vmem:[%s17 + $0x80] sm:$0xff]
        %v2382 = vld [vmem:[%s17 + $0x88] sm:$0xff]
        %v2383 = vld [vmem:[%s17 + $0x90] sm:$0xff]
        %v2384 = vld [vmem:[%s17 + $0x98] sm:$0xff]
        %v2385 = vld [vmem:[%s17 + $0xa0] sm:$0xff]
        %v2386 = vld [vmem:[%s17 + $0xa8] sm:$0xff]
        %v2387 = vld [vmem:[%s17 + $0xb0] sm:$0xff]
        %v2388 = vld [vmem:[%s17 + $0xb8] sm:$0xff]
        %v2389 = vld [vmem:[%s17 + $0xc0] sm:$0xff]
        %v2390 = vld [vmem:[%s17 + $0xc8] sm:$0xff]
        %v2391 = vld [vmem:[%s17 + $0xd0] sm:$0xff]
        %v2392 = vld [vmem:[%s17 + $0xd8] sm:$0xff]
        %v2393 = vld [vmem:[%s17 + $0xe0] sm:$0xff]
        %v2394 = vld [vmem:[%s17 + $0xe8] sm:$0xff]
        %v2395 = vld [vmem:[%s17 + $0xf0] sm:$0xff]
        %v2396 = vld [vmem:[%s17 + $0xf8] sm:$0xff]
        %v2397 = vld [vmem:[%s17 + $0x100] sm:$0xff]
        %v2398 = vld [vmem:[%s17 + $0x108] sm:$0xff]
        %v2399 = vld [vmem:[%s17 + $0x110] sm:$0xff]
        %v2400 = vld [vmem:[%s17 + $0x118] sm:$0xff]
        %v2401 = vld [vmem:[%s17 + $0x120] sm:$0xff]
        %v2402 = vld [vmem:[%s17 + $0x128] sm:$0xff]
        %v2403 = vld [vmem:[%s17 + $0x130] sm:$0xff]
        %v2404 = vld [vmem:[%s17 + $0x138] sm:$0xff]
        %v2405 = vld [vmem:[%s17 + $0x140] sm:$0xff]
        %v2406 = vld [vmem:[%s17 + $0x148] sm:$0xff]
        %v2407 = vld [vmem:[%s17 + $0x150] sm:$0xff]
        %v2408 = vld [vmem:[%s17 + $0x158] sm:$0xff]
        %v2409 = vld [vmem:[%s17 + $0x160] sm:$0xff]
        %v2410 = vld [vmem:[%s17 + $0x168] sm:$0xff]
        %v2411 = vld [vmem:[%s17 + $0x170] sm:$0xff]
        %v2412 = vld [vmem:[%s17 + $0x178] sm:$0xff]
        %v2413 = vld [vmem:[%s17 + $0x180] sm:$0xff]
        %v2414 = vld [vmem:[%s17 + $0x188] sm:$0xff]
        %v2415 = vld [vmem:[%s17 + $0x190] sm:$0xff]
        %v2416 = vld [vmem:[%s17 + $0x198] sm:$0xff]
        %v2417 = vld [vmem:[%s17 + $0x1a0] sm:$0xff]
        %v2418 = vld [vmem:[%s17 + $0x1a8] sm:$0xff]
        %v2419 = vld [vmem:[%s17 + $0x1b0] sm:$0xff]
        %v2420 = vld [vmem:[%s17 + $0x1b8] sm:$0xff]
        %v2421 = vld [vmem:[%s17 + $0x1c0] sm:$0xff]
        %v2422 = vld [vmem:[%s17 + $0x1c8] sm:$0xff]
        %v2423 = vld [vmem:[%s17 + $0x1d0] sm:$0xff]
        %v2424 = vld [vmem:[%s17 + $0x1d8] sm:$0xff]
        %v2425 = vld [vmem:[%s17 + $0x1e0] sm:$0xff]
        %v2426 = vld [vmem:[%s17 + $0x1e8] sm:$0xff]
        %v2427 = vld [vmem:[%s17 + $0x1f0] sm:$0xff]
        %v2428 = vld [vmem:[%s17 + $0x1f8] sm:$0xff]
        %v2429 = vld [vmem:[%s17 + $0x200] sm:$0xff]
        %v2430 = vld [vmem:[%s17 + $0x208] sm:$0xff]
        %v2431 = vld [vmem:[%s17 + $0x210] sm:$0xff]
        %v2432 = vld [vmem:[%s17 + $0x218] sm:$0xff]
        %v2433 = vld [vmem:[%s17 + $0x220] sm:$0xff]
        %v2434 = vld [vmem:[%s17 + $0x228] sm:$0xff]
        %v2435 = vld [vmem:[%s17 + $0x230] sm:$0xff]
        %v2436 = vld [vmem:[%s17 + $0x238] sm:$0xff]
        %v2437 = vld [vmem:[%s17 + $0x240] sm:$0xff]
        %v2438 = vld [vmem:[%s17 + $0x248] sm:$0xff]
        %v2439 = vld [vmem:[%s17 + $0x250] sm:$0xff]
        %v2440 = vld [vmem:[%s17 + $0x258] sm:$0xff]
        %v2441 = vld [vmem:[%s17 + $0x260] sm:$0xff]
        %v2442 = vld [vmem:[%s17 + $0x268] sm:$0xff]
        %v2443 = vld [vmem:[%s17 + $0x270] sm:$0xff]
        %v2444 = vld [vmem:[%s17 + $0x278] sm:$0xff]
        %v2445 = vld [vmem:[%s17 + $0x280] sm:$0xff]
        %v2446 = vld [vmem:[%s17 + $0x288] sm:$0xff]
        %v2447 = vld [vmem:[%s17 + $0x290] sm:$0xff]
        %v2448 = vld [vmem:[%s17 + $0x298] sm:$0xff]
        %v2449 = vld [vmem:[%s17 + $0x2a0] sm:$0xff]
        %v2450 = vld [vmem:[%s17 + $0x2a8] sm:$0xff]
        %v2451 = vld [vmem:[%s17 + $0x2b0] sm:$0xff]
        %v2452 = vld [vmem:[%s17 + $0x2b8] sm:$0xff]
        %v2453 = vld [vmem:[%s17 + $0x2c0] sm:$0xff]
        %v2454 = vld [vmem:[%s17 + $0x2c8] sm:$0xff]
        %v2455 = vld [vmem:[%s17 + $0x2d0] sm:$0xff]
        %v2456 = vld [vmem:[%s17 + $0x2d8] sm:$0xff]
        %v2457 = vld [vmem:[%s17 + $0x2e0] sm:$0xff]
        %v2458 = vld [vmem:[%s17 + $0x2e8] sm:$0xff]
        %v2459 = vld [vmem:[%s17 + $0x2f0] sm:$0xff]
        %v2460 = vld [vmem:[%s17 + $0x2f8] sm:$0xff]
        %v2461 = vld [vmem:[%s18] sm:$0x3]
        %v2558 = vunpack.c.l.b16 %v2365
        %v2559 = vunpack.c.h.b16 %v2365
        %v2560 = vunpack.c.l.b16 %v2366
        %v2561 = vunpack.c.h.b16 %v2366
        %v2562 = vunpack.c.l.b16 %v2367
        %v2563 = vunpack.c.h.b16 %v2367
        %v2564 = vunpack.c.l.b16 %v2368
        %v2565 = vunpack.c.h.b16 %v2368
        %v2566 = vunpack.c.l.b16 %v2369
        %v2567 = vunpack.c.h.b16 %v2369
        %v2568 = vunpack.c.l.b16 %v2370
        %v2569 = vunpack.c.h.b16 %v2370
        %v2570 = vunpack.c.l.b16 %v2371
        %v2571 = vunpack.c.h.b16 %v2371
        %v2572 = vunpack.c.l.b16 %v2372
        %v2573 = vunpack.c.h.b16 %v2372
        %v2574 = vunpack.c.l.b16 %v2373
        %v2575 = vunpack.c.h.b16 %v2373
        %v2576 = vunpack.c.l.b16 %v2374
        %v2577 = vunpack.c.h.b16 %v2374
        %v2578 = vunpack.c.l.b16 %v2375
        %v2579 = vunpack.c.h.b16 %v2375
        %v2580 = vunpack.c.l.b16 %v2376
        %v2581 = vunpack.c.h.b16 %v2376
        %v2582 = vunpack.c.l.b16 %v2377
        %v2583 = vunpack.c.h.b16 %v2377
        %v2584 = vunpack.c.l.b16 %v2378
        %v2585 = vunpack.c.h.b16 %v2378
        %v2586 = vunpack.c.l.b16 %v2379
        %v2587 = vunpack.c.h.b16 %v2379
        %v2588 = vunpack.c.l.b16 %v2380
        %v2589 = vunpack.c.h.b16 %v2380
        %v2590 = vunpack.c.l.b16 %v2381
        %v2591 = vunpack.c.h.b16 %v2381
        %v2592 = vunpack.c.l.b16 %v2382
        %v2593 = vunpack.c.h.b16 %v2382
        %v2594 = vunpack.c.l.b16 %v2383
        %v2595 = vunpack.c.h.b16 %v2383
        %v2596 = vunpack.c.l.b16 %v2384
        %v2597 = vunpack.c.h.b16 %v2384
        %v2598 = vunpack.c.l.b16 %v2385
        %v2599 = vunpack.c.h.b16 %v2385
        %v2600 = vunpack.c.l.b16 %v2386
        %v2601 = vunpack.c.h.b16 %v2386
        %v2602 = vunpack.c.l.b16 %v2387
        %v2603 = vunpack.c.h.b16 %v2387
        %v2604 = vunpack.c.l.b16 %v2388
        %v2605 = vunpack.c.h.b16 %v2388
        %v2606 = vunpack.c.l.b16 %v2389
        %v2607 = vunpack.c.h.b16 %v2389
        %v2608 = vunpack.c.l.b16 %v2390
        %v2609 = vunpack.c.h.b16 %v2390
        %v2610 = vunpack.c.l.b16 %v2391
        %v2611 = vunpack.c.h.b16 %v2391
        %v2612 = vunpack.c.l.b16 %v2392
        %v2613 = vunpack.c.h.b16 %v2392
        %v2614 = vunpack.c.l.b16 %v2393
        %v2615 = vunpack.c.h.b16 %v2393
        %v2616 = vunpack.c.l.b16 %v2394
        %v2617 = vunpack.c.h.b16 %v2394
        %v2618 = vunpack.c.l.b16 %v2395
        %v2619 = vunpack.c.h.b16 %v2395
        %v2620 = vunpack.c.l.b16 %v2396
        %v2621 = vunpack.c.h.b16 %v2396
        %v2622 = vunpack.c.l.b16 %v2397
        %v2623 = vunpack.c.h.b16 %v2397
        %v2624 = vunpack.c.l.b16 %v2398
        %v2625 = vunpack.c.h.b16 %v2398
        %v2626 = vunpack.c.l.b16 %v2399
        %v2627 = vunpack.c.h.b16 %v2399
        %v2628 = vunpack.c.l.b16 %v2400
        %v2629 = vunpack.c.h.b16 %v2400
        %v2630 = vunpack.c.l.b16 %v2401
        %v2631 = vunpack.c.h.b16 %v2401
        %v2632 = vunpack.c.l.b16 %v2402
        %v2633 = vunpack.c.h.b16 %v2402
        %v2634 = vunpack.c.l.b16 %v2403
        %v2635 = vunpack.c.h.b16 %v2403
        %v2636 = vunpack.c.l.b16 %v2404
        %v2637 = vunpack.c.h.b16 %v2404
        %v2638 = vunpack.c.l.b16 %v2405
        %v2639 = vunpack.c.h.b16 %v2405
        %v2640 = vunpack.c.l.b16 %v2406
        %v2641 = vunpack.c.h.b16 %v2406
        %v2642 = vunpack.c.l.b16 %v2407
        %v2643 = vunpack.c.h.b16 %v2407
        %v2644 = vunpack.c.l.b16 %v2408
        %v2645 = vunpack.c.h.b16 %v2408
        %v2646 = vunpack.c.l.b16 %v2409
        %v2647 = vunpack.c.h.b16 %v2409
        %v2648 = vunpack.c.l.b16 %v2410
        %v2649 = vunpack.c.h.b16 %v2410
        %v2650 = vunpack.c.l.b16 %v2411
        %v2651 = vunpack.c.h.b16 %v2411
        %v2652 = vunpack.c.l.b16 %v2412
        %v2653 = vunpack.c.h.b16 %v2412
        %v2654 = vunpack.c.l.b16 %v2413
        %v2655 = vunpack.c.h.b16 %v2413
        %v2656 = vunpack.c.l.b16 %v2414
        %v2657 = vunpack.c.h.b16 %v2414
        %v2658 = vunpack.c.l.b16 %v2415
        %v2659 = vunpack.c.h.b16 %v2415
        %v2660 = vunpack.c.l.b16 %v2416
        %v2661 = vunpack.c.h.b16 %v2416
        %v2662 = vunpack.c.l.b16 %v2417
        %v2663 = vunpack.c.h.b16 %v2417
        %v2664 = vunpack.c.l.b16 %v2418
        %v2665 = vunpack.c.h.b16 %v2418
        %v2666 = vunpack.c.l.b16 %v2419
        %v2667 = vunpack.c.h.b16 %v2419
        %v2668 = vunpack.c.l.b16 %v2420
        %v2669 = vunpack.c.h.b16 %v2420
        %v2670 = vunpack.c.l.b16 %v2421
        %v2671 = vunpack.c.h.b16 %v2421
        %v2672 = vunpack.c.l.b16 %v2422
        %v2673 = vunpack.c.h.b16 %v2422
        %v2674 = vunpack.c.l.b16 %v2423
        %v2675 = vunpack.c.h.b16 %v2423
        %v2676 = vunpack.c.l.b16 %v2424
        %v2677 = vunpack.c.h.b16 %v2424
        %v2678 = vunpack.c.l.b16 %v2425
        %v2679 = vunpack.c.h.b16 %v2425
        %v2680 = vunpack.c.l.b16 %v2426
        %v2681 = vunpack.c.h.b16 %v2426
        %v2682 = vunpack.c.l.b16 %v2427
        %v2683 = vunpack.c.h.b16 %v2427
        %v2684 = vunpack.c.l.b16 %v2428
        %v2685 = vunpack.c.h.b16 %v2428
        %v2686 = vunpack.c.l.b16 %v2429
        %v2687 = vunpack.c.h.b16 %v2429
        %v2688 = vunpack.c.l.b16 %v2430
        %v2689 = vunpack.c.h.b16 %v2430
        %v2690 = vunpack.c.l.b16 %v2431
        %v2691 = vunpack.c.h.b16 %v2431
        %v2692 = vunpack.c.l.b16 %v2432
        %v2693 = vunpack.c.h.b16 %v2432
        %v2694 = vunpack.c.l.b16 %v2433
        %v2695 = vunpack.c.h.b16 %v2433
        %v2696 = vunpack.c.l.b16 %v2434
        %v2697 = vunpack.c.h.b16 %v2434
        %v2698 = vunpack.c.l.b16 %v2435
        %v2699 = vunpack.c.h.b16 %v2435
        %v2700 = vunpack.c.l.b16 %v2436
        %v2701 = vunpack.c.h.b16 %v2436
        %v2702 = vunpack.c.l.b16 %v2437
        %v2703 = vunpack.c.h.b16 %v2437
        %v2704 = vunpack.c.l.b16 %v2438
        %v2705 = vunpack.c.h.b16 %v2438
        %v2706 = vunpack.c.l.b16 %v2439
        %v2707 = vunpack.c.h.b16 %v2439
        %v2708 = vunpack.c.l.b16 %v2440
        %v2709 = vunpack.c.h.b16 %v2440
        %v2710 = vunpack.c.l.b16 %v2441
        %v2711 = vunpack.c.h.b16 %v2441
        %v2712 = vunpack.c.l.b16 %v2442
        %v2713 = vunpack.c.h.b16 %v2442
        %v2714 = vunpack.c.l.b16 %v2443
        %v2715 = vunpack.c.h.b16 %v2443
        %v2716 = vunpack.c.l.b16 %v2444
        %v2717 = vunpack.c.h.b16 %v2444
        %v2718 = vunpack.c.l.b16 %v2445
        %v2719 = vunpack.c.h.b16 %v2445
        %v2720 = vunpack.c.l.b16 %v2446
        %v2721 = vunpack.c.h.b16 %v2446
        %v2722 = vunpack.c.l.b16 %v2447
        %v2723 = vunpack.c.h.b16 %v2447
        %v2724 = vunpack.c.l.b16 %v2448
        %v2725 = vunpack.c.h.b16 %v2448
        %v2726 = vunpack.c.l.b16 %v2449
        %v2727 = vunpack.c.h.b16 %v2449
        %v2728 = vunpack.c.l.b16 %v2450
        %v2729 = vunpack.c.h.b16 %v2450
        %v2730 = vunpack.c.l.b16 %v2451
        %v2731 = vunpack.c.h.b16 %v2451
        %v2732 = vunpack.c.l.b16 %v2452
        %v2733 = vunpack.c.h.b16 %v2452
        %v2734 = vunpack.c.l.b16 %v2453
        %v2735 = vunpack.c.h.b16 %v2453
        %v2736 = vunpack.c.l.b16 %v2454
        %v2737 = vunpack.c.h.b16 %v2454
        %v2738 = vunpack.c.l.b16 %v2455
        %v2739 = vunpack.c.h.b16 %v2455
        %v2740 = vunpack.c.l.b16 %v2456
        %v2741 = vunpack.c.h.b16 %v2456
        %v2742 = vunpack.c.l.b16 %v2457
        %v2743 = vunpack.c.h.b16 %v2457
        %v2744 = vunpack.c.l.b16 %v2458
        %v2745 = vunpack.c.h.b16 %v2458
        %v2746 = vunpack.c.l.b16 %v2459
        %v2747 = vunpack.c.h.b16 %v2459
        %v2748 = vunpack.c.l.b16 %v2460
        %v2749 = vunpack.c.h.b16 %v2460
        %v2750 = vpack.c.b16 %v2560, %v2558
        %v2751 = vpack.c.b16 %v2561, %v2559
        %v2752 = vpack.c.b16 %v2564, %v2562
        %v2753 = vpack.c.b16 %v2565, %v2563
        %v2754 = vpack.c.b16 %v2568, %v2566
        %v2755 = vpack.c.b16 %v2569, %v2567
        %v2756 = vpack.c.b16 %v2572, %v2570
        %v2757 = vpack.c.b16 %v2573, %v2571
        %v2758 = vpack.c.b16 %v2576, %v2574
        %v2759 = vpack.c.b16 %v2577, %v2575
        %v2760 = vpack.c.b16 %v2580, %v2578
        %v2761 = vpack.c.b16 %v2581, %v2579
        %v2762 = vpack.c.b16 %v2584, %v2582
        %v2763 = vpack.c.b16 %v2585, %v2583
        %v2764 = vpack.c.b16 %v2588, %v2586
        %v2765 = vpack.c.b16 %v2589, %v2587
        %v2766 = vpack.c.b16 %v2592, %v2590
        %v2767 = vpack.c.b16 %v2593, %v2591
        %v2768 = vpack.c.b16 %v2596, %v2594
        %v2769 = vpack.c.b16 %v2597, %v2595
        %v2770 = vpack.c.b16 %v2600, %v2598
        %v2771 = vpack.c.b16 %v2601, %v2599
        %v2772 = vpack.c.b16 %v2604, %v2602
        %v2773 = vpack.c.b16 %v2605, %v2603
        %v2774 = vpack.c.b16 %v2608, %v2606
        %v2775 = vpack.c.b16 %v2609, %v2607
        %v2776 = vpack.c.b16 %v2612, %v2610
        %v2777 = vpack.c.b16 %v2613, %v2611
        %v2778 = vpack.c.b16 %v2616, %v2614
        %v2779 = vpack.c.b16 %v2617, %v2615
        %v2780 = vpack.c.b16 %v2620, %v2618
        %v2781 = vpack.c.b16 %v2621, %v2619
        %v2782 = vpack.c.b16 %v2624, %v2622
        %v2783 = vpack.c.b16 %v2625, %v2623
        %v2784 = vpack.c.b16 %v2628, %v2626
        %v2785 = vpack.c.b16 %v2629, %v2627
        %v2786 = vpack.c.b16 %v2632, %v2630
        %v2787 = vpack.c.b16 %v2633, %v2631
        %v2788 = vpack.c.b16 %v2636, %v2634
        %v2789 = vpack.c.b16 %v2637, %v2635
        %v2790 = vpack.c.b16 %v2640, %v2638
        %v2791 = vpack.c.b16 %v2641, %v2639
        %v2792 = vpack.c.b16 %v2644, %v2642
        %v2793 = vpack.c.b16 %v2645, %v2643
        %v2794 = vpack.c.b16 %v2648, %v2646
        %v2795 = vpack.c.b16 %v2649, %v2647
        %v2796 = vpack.c.b16 %v2652, %v2650
        %v2797 = vpack.c.b16 %v2653, %v2651
        %v2798 = vpack.c.b16 %v2656, %v2654
        %v2799 = vpack.c.b16 %v2657, %v2655
        %v2800 = vpack.c.b16 %v2660, %v2658
        %v2801 = vpack.c.b16 %v2661, %v2659
        %v2802 = vpack.c.b16 %v2664, %v2662
        %v2803 = vpack.c.b16 %v2665, %v2663
        %v2804 = vpack.c.b16 %v2668, %v2666
        %v2805 = vpack.c.b16 %v2669, %v2667
        %v2806 = vpack.c.b16 %v2672, %v2670
        %v2807 = vpack.c.b16 %v2673, %v2671
        %v2808 = vpack.c.b16 %v2676, %v2674
        %v2809 = vpack.c.b16 %v2677, %v2675
        %v2810 = vpack.c.b16 %v2680, %v2678
        %v2811 = vpack.c.b16 %v2681, %v2679
        %v2812 = vpack.c.b16 %v2684, %v2682
        %v2813 = vpack.c.b16 %v2685, %v2683
        %v2814 = vpack.c.b16 %v2688, %v2686
        %v2815 = vpack.c.b16 %v2689, %v2687
        %v2816 = vpack.c.b16 %v2692, %v2690
        %v2817 = vpack.c.b16 %v2693, %v2691
        %v2818 = vpack.c.b16 %v2696, %v2694
        %v2819 = vpack.c.b16 %v2697, %v2695
        %v2820 = vpack.c.b16 %v2700, %v2698
        %v2821 = vpack.c.b16 %v2701, %v2699
        %v2822 = vpack.c.b16 %v2704, %v2702
        %v2823 = vpack.c.b16 %v2705, %v2703
        %v2824 = vpack.c.b16 %v2708, %v2706
        %v2825 = vpack.c.b16 %v2709, %v2707
        %v2826 = vpack.c.b16 %v2712, %v2710
        %v2827 = vpack.c.b16 %v2713, %v2711
        %v2828 = vpack.c.b16 %v2716, %v2714
        %v2829 = vpack.c.b16 %v2717, %v2715
        %v2830 = vpack.c.b16 %v2720, %v2718
        %v2831 = vpack.c.b16 %v2721, %v2719
        %v2832 = vpack.c.b16 %v2724, %v2722
        %v2833 = vpack.c.b16 %v2725, %v2723
        %v2834 = vpack.c.b16 %v2728, %v2726
        %v2835 = vpack.c.b16 %v2729, %v2727
        %v2836 = vpack.c.b16 %v2732, %v2730
        %v2837 = vpack.c.b16 %v2733, %v2731
        %v2838 = vpack.c.b16 %v2736, %v2734
        %v2839 = vpack.c.b16 %v2737, %v2735
        %v2840 = vpack.c.b16 %v2740, %v2738
        %v2841 = vpack.c.b16 %v2741, %v2739
        %v2842 = vpack.c.b16 %v2744, %v2742
        %v2843 = vpack.c.b16 %v2745, %v2743
        %v2844 = vpack.c.b16 %v2748, %v2746
        %v2845 = vpack.c.b16 %v2749, %v2747
        %v2943 = vlaneseq
        %v2944 = vshrl.u32 %v2943, 7
        %v2945 = vsub.s32 0, %v2944
        %v2946 = vrot.slane %v2461, %v2945
        %v2947 = vlaneseq
        %v2948 = vshrl.u32 %v2947, 7
        %v2949 = vsub.s32 1, %v2948
        %v2950 = vrot.slane %v2461, %v2949
        %2953 = vmatprep.subr.bf16.mxu0 %v2751
        %2954 = vmatpush1.bf16.msra.mxu0 %v2750
        %2955 = vmatprep.subr.bf16.mxu0 %v2753
        %2956 = vmatpush1.bf16.msra.mxu0 %v2752
        %2957 = vmatprep.subr.bf16.mxu0 %v2755
        %2958 = vmatpush1.bf16.msra.mxu0 %v2754
        %2959 = vmatprep.subr.bf16.mxu0 %v2757
        %2960 = vmatpush1.bf16.msra.mxu0 %v2756
        %2961 = vmatprep.subr.bf16.mxu0 %v2759
        %2962 = vmatpush1.bf16.msra.mxu0 %v2758
        %2963 = vmatprep.subr.bf16.mxu0 %v2761
        %2964 = vmatpush1.bf16.msra.mxu0 %v2760
        %2965 = vmatprep.subr.bf16.mxu0 %v2763
        %2966 = vmatpush1.bf16.msra.mxu0 %v2762
        %2967 = vmatprep.subr.bf16.mxu0 %v2765
        %2968 = vmatpush1.bf16.msra.mxu0 %v2764
        %2969 = vmatprep.subr.bf16.mxu0 %v2767
        %2970 = vmatpush1.bf16.msra.mxu0 %v2766
        %2971 = vmatprep.subr.bf16.mxu0 %v2769
        %2972 = vmatpush1.bf16.msra.mxu0 %v2768
        %2973 = vmatprep.subr.bf16.mxu0 %v2771
        %2974 = vmatpush1.bf16.msra.mxu0 %v2770
        %2975 = vmatprep.subr.bf16.mxu0 %v2773
        %2976 = vmatpush1.bf16.msra.mxu0 %v2772
        %2977 = vmatprep.subr.bf16.mxu0 %v2775
        %2978 = vmatpush1.bf16.msra.mxu0 %v2774
        %2979 = vmatprep.subr.bf16.mxu0 %v2777
        %2980 = vmatpush1.bf16.msra.mxu0 %v2776
        %2981 = vmatprep.subr.bf16.mxu0 %v2779
        %2982 = vmatpush1.bf16.msra.mxu0 %v2778
        %2983 = vmatprep.subr.bf16.mxu0 %v2781
        %2984 = vmatpush1.bf16.msra.mxu0 %v2780
        %2985 = vmatprep.mubr.bf16.mxu0 %v2360
        %2986 = vmatmul.mubr.bf16.gmra.mrb[0].mxu0 %v2359
        %v2987 = vpop.f32.mrb[0].mxu0
        %v2988 = vadd.f32 %v2946, %v2987
        %v2989 = vpop.f32.mrb[0].mxu0
        %v2990 = vadd.f32 %v2950, %v2989
        %v2991 = vpop.f32.mrb[0].mxu0
        %v2992 = vpop.f32.mrb[0].mxu0
        %2993 = vdwg.mxu0
        %2994 = vmatprep.subr.bf16.mxu0 %v2783
        %2995 = vmatpush1.bf16.msra.mxu0 %v2782
        %2996 = vmatprep.subr.bf16.mxu0 %v2785
        %2997 = vmatpush1.bf16.msra.mxu0 %v2784
        %2998 = vmatprep.subr.bf16.mxu0 %v2787
        %2999 = vmatpush1.bf16.msra.mxu0 %v2786
        %3000 = vmatprep.subr.bf16.mxu0 %v2789
        %3001 = vmatpush1.bf16.msra.mxu0 %v2788
        %3002 = vmatprep.subr.bf16.mxu0 %v2791
        %3003 = vmatpush1.bf16.msra.mxu0 %v2790
        %3004 = vmatprep.subr.bf16.mxu0 %v2793
        %3005 = vmatpush1.bf16.msra.mxu0 %v2792
        %3006 = vmatprep.subr.bf16.mxu0 %v2795
        %3007 = vmatpush1.bf16.msra.mxu0 %v2794
        %3008 = vmatprep.subr.bf16.mxu0 %v2797
        %3009 = vmatpush1.bf16.msra.mxu0 %v2796
        %3010 = vmatprep.subr.bf16.mxu0 %v2799
        %3011 = vmatpush1.bf16.msra.mxu0 %v2798
        %3012 = vmatprep.subr.bf16.mxu0 %v2801
        %3013 = vmatpush1.bf16.msra.mxu0 %v2800
        %3014 = vmatprep.subr.bf16.mxu0 %v2803
        %3015 = vmatpush1.bf16.msra.mxu0 %v2802
        %3016 = vmatprep.subr.bf16.mxu0 %v2805
        %3017 = vmatpush1.bf16.msra.mxu0 %v2804
        %3018 = vmatprep.subr.bf16.mxu0 %v2807
        %3019 = vmatpush1.bf16.msra.mxu0 %v2806
        %3020 = vmatprep.subr.bf16.mxu0 %v2809
        %3021 = vmatpush1.bf16.msra.mxu0 %v2808
        %3022 = vmatprep.subr.bf16.mxu0 %v2811
        %3023 = vmatpush1.bf16.msra.mxu0 %v2810
        %3024 = vmatprep.subr.bf16.mxu0 %v2813
        %3025 = vmatpush1.bf16.msra.mxu0 %v2812
        %3026 = vmatprep.mubr.bf16.mxu0 %v2362
        %3027 = vmatmul.mubr.bf16.gmra.mrb[0].mxu0 %v2361
        %v3028 = vpop.f32.mrb[0].mxu0
        %v3029 = vadd.f32 %v2988, %v3028
        %v3030 = vpop.f32.mrb[0].mxu0
        %v3031 = vadd.f32 %v2990, %v3030
        %v3032 = vpop.f32.mrb[0].mxu0
        %v3033 = vpop.f32.mrb[0].mxu0
        %3034 = vdwg.mxu0
        %3035 = vmatprep.subr.bf16.mxu0 %v2815
        %3036 = vmatpush1.bf16.msra.mxu0 %v2814
        %3037 = vmatprep.subr.bf16.mxu0 %v2817
        %3038 = vmatpush1.bf16.msra.mxu0 %v2816
        %3039 = vmatprep.subr.bf16.mxu0 %v2819
        %3040 = vmatpush1.bf16.msra.mxu0 %v2818
        %3041 = vmatprep.subr.bf16.mxu0 %v2821
        %3042 = vmatpush1.bf16.msra.mxu0 %v2820
        %3043 = vmatprep.subr.bf16.mxu0 %v2823
        %3044 = vmatpush1.bf16.msra.mxu0 %v2822
        %3045 = vmatprep.subr.bf16.mxu0 %v2825
        %3046 = vmatpush1.bf16.msra.mxu0 %v2824
        %3047 = vmatprep.subr.bf16.mxu0 %v2827
        %3048 = vmatpush1.bf16.msra.mxu0 %v2826
        %3049 = vmatprep.subr.bf16.mxu0 %v2829
        %3050 = vmatpush1.bf16.msra.mxu0 %v2828
        %3051 = vmatprep.subr.bf16.mxu0 %v2831
        %3052 = vmatpush1.bf16.msra.mxu0 %v2830
        %3053 = vmatprep.subr.bf16.mxu0 %v2833
        %3054 = vmatpush1.bf16.msra.mxu0 %v2832
        %3055 = vmatprep.subr.bf16.mxu0 %v2835
        %3056 = vmatpush1.bf16.msra.mxu0 %v2834
        %3057 = vmatprep.subr.bf16.mxu0 %v2837
        %3058 = vmatpush1.bf16.msra.mxu0 %v2836
        %3059 = vmatprep.subr.bf16.mxu0 %v2839
        %3060 = vmatpush1.bf16.msra.mxu0 %v2838
        %3061 = vmatprep.subr.bf16.mxu0 %v2841
        %3062 = vmatpush1.bf16.msra.mxu0 %v2840
        %3063 = vmatprep.subr.bf16.mxu0 %v2843
        %3064 = vmatpush1.bf16.msra.mxu0 %v2842
        %3065 = vmatprep.subr.bf16.mxu0 %v2845
        %3066 = vmatpush1.bf16.msra.mxu0 %v2844
        %3067 = vmatprep.mubr.bf16.mxu0 %v2364
        %3068 = vmatmul.mubr.bf16.gmra.mrb[0].mxu0 %v2363
        %v3069 = vpop.f32.mrb[0].mxu0
        %v3070 = vadd.f32 %v3029, %v3069
        %v3071 = vpop.f32.mrb[0].mxu0
        %v3072 = vadd.f32 %v3031, %v3071
        %v3073 = vpop.f32.mrb[0].mxu0
        %v3074 = vpop.f32.mrb[0].mxu0
        %3075 = vdwg.mxu0
        %v3076 = vlaneseq
        %v3077 = vshrl.u32 %v3076, 7
        %v3078 = vsub.s32 0, %v3077
        %v3079 = vrot.slane %v3070, %v3078
        %v3080 = vlaneseq
        %v3081 = vshrl.u32 %v3080, 7
        %v3082 = vsub.s32 0, %v3081
        %v3083 = vrot.slane %v3072, %v3082
        %v3084 = vadd.f32 %v3079, %v2211
        %v3085 = vadd.f32 %v3083, %v2219
        %v3090 = vsel %vm2210, %v2275, %v2261
        %v3091 = vsel %vm2210, %v2282, %v2269
        %v3094 = vadd.f32 %v3084, %v3090
        %v3095 = vadd.f32 %v3085, %v3091
        %v3096 = vsel %vm1020, %v3094, 0.0
        %vm3097 = vcmask 828416
        %v3098 = vsel %vm3097, %v3095, 0.0
        %v3099 = vadd.f32 %v3096, %v3098
        %3100 = vadd.xlane.f32.xlu0 %v3099
        %v3101 = vpop.xlane.xlu0 %3100
        %v3102 = vrcp.pop 230.0
        %v3103 = vmul.f32 %v3101, %v3102
        %v3104 = vsub.f32 %v3094, %v3103
        %v3105 = vsub.f32 %v3095, %v3103
        %v3106 = vmul.f32 %v3104, %v3104
        %v3107 = vmul.f32 %v3105, %v3105
        %v3108 = vsel %vm1020, %v3106, 0.0
        %v3109 = vsel %vm3097, %v3107, 0.0
        %v3110 = vadd.f32 %v3108, %v3109
        %3111 = vadd.xlane.f32.xlu0 %v3110
        %v3112 = vpop.xlane.xlu0 %3111
        %v3113 = vmul.f32 %v3112, %v3102
        %v3114 = vadd.f32 %v3113, 1e-05
        %v3115 = vrsqrt.pop %v3114
        %v3116 = vmul.f32 %v3104, %v3115
        %v3117 = vmul.f32 %v3105, %v3115
        %v3118 = vld [vmem:[%s19] sm:$0x3]
        %v3120 = vlaneseq
        %v3121 = vshrl.u32 %v3120, 7
        %v3122 = vsub.s32 0, %v3121
        %v3123 = vrot.slane %v3118, %v3122
        %v3124 = vlaneseq
        %v3125 = vshrl.u32 %v3124, 7
        %v3126 = vsub.s32 1, %v3125
        %v3127 = vrot.slane %v3118, %v3126
        %v3130 = vmul.f32 %v3116, %v3123
        %v3131 = vmul.f32 %v3117, %v3127
        %v3132 = vld [vmem:[%s20] sm:$0x3]
        %v3134 = vlaneseq
        %v3135 = vshrl.u32 %v3134, 7
        %v3136 = vsub.s32 0, %v3135
        %v3137 = vrot.slane %v3132, %v3136
        %v3138 = vlaneseq
        %v3139 = vshrl.u32 %v3138, 7
        %v3140 = vsub.s32 1, %v3139
        %v3141 = vrot.slane %v3132, %v3140
        %v3144 = vadd.f32 %v3130, %v3137
        %v3145 = vadd.f32 %v3131, %v3141
        %v3146 = vadd.f32 %v3079, %v2225
        %v3147 = vadd.f32 %v3083, %v2233
        %v3152 = vsel %vm2210, %v2319, %v2306
        %v3153 = vsel %vm2210, %v2326, %v2313
        %v3156 = vadd.f32 %v3146, %v3152
        %v3157 = vadd.f32 %v3147, %v3153
        %v3158 = vsel %vm1020, %v3156, 0.0
        %v3159 = vsel %vm3097, %v3157, 0.0
        %v3160 = vadd.f32 %v3158, %v3159
        %3161 = vadd.xlane.f32.xlu0 %v3160
        %v3162 = vpop.xlane.xlu0 %3161
        %v3163 = vmul.f32 %v3162, %v3102
        %v3164 = vsub.f32 %v3156, %v3163
        %v3165 = vsub.f32 %v3157, %v3163
        %v3166 = vmul.f32 %v3164, %v3164
        %v3167 = vmul.f32 %v3165, %v3165
        %v3168 = vsel %vm1020, %v3166, 0.0
        %v3169 = vsel %vm3097, %v3167, 0.0
        %v3170 = vadd.f32 %v3168, %v3169
        %3171 = vadd.xlane.f32.xlu0 %v3170
        %v3172 = vpop.xlane.xlu0 %3171
        %v3173 = vmul.f32 %v3172, %v3102
        %v3174 = vadd.f32 %v3173, 1e-05
        %v3175 = vrsqrt.pop %v3174
        %v3176 = vmul.f32 %v3164, %v3175
        %v3177 = vmul.f32 %v3165, %v3175
        %v3178 = vmul.f32 %v3176, %v3123
        %v3179 = vmul.f32 %v3177, %v3127
        %v3180 = vadd.f32 %v3178, %v3137
        %v3181 = vadd.f32 %v3179, %v3141
        %v3182 = vpack.c.bf16 %v3144, %v3144
        %v3183 = vpack.c.bf16 %v3145, %v3145
        %v3184 = vld [vmem:[%s21] sm:$0xff]
        %v3185 = vld [vmem:[%s21 + $0x8] sm:$0xff]
        %v3186 = vld [vmem:[%s21 + $0x10] sm:$0xff]
        %v3187 = vld [vmem:[%s21 + $0x18] sm:$0xff]
        %v3188 = vld [vmem:[%s21 + $0x20] sm:$0xff]
        %v3189 = vld [vmem:[%s21 + $0x28] sm:$0xff]
        %v3190 = vld [vmem:[%s21 + $0x30] sm:$0xff]
        %v3191 = vld [vmem:[%s21 + $0x38] sm:$0xff]
        %v3192 = vld [vmem:[%s21 + $0x40] sm:$0xff]
        %v3193 = vld [vmem:[%s21 + $0x48] sm:$0xff]
        %v3194 = vld [vmem:[%s21 + $0x50] sm:$0xff]
        %v3195 = vld [vmem:[%s21 + $0x58] sm:$0xff]
        %v3196 = vld [vmem:[%s21 + $0x60] sm:$0xff]
        %v3197 = vld [vmem:[%s21 + $0x68] sm:$0xff]
        %v3198 = vld [vmem:[%s21 + $0x70] sm:$0xff]
        %v3199 = vld [vmem:[%s21 + $0x78] sm:$0xff]
        %v3200 = vld [vmem:[%s21 + $0x80] sm:$0xff]
        %v3201 = vld [vmem:[%s21 + $0x88] sm:$0xff]
        %v3202 = vld [vmem:[%s21 + $0x90] sm:$0xff]
        %v3203 = vld [vmem:[%s21 + $0x98] sm:$0xff]
        %v3204 = vld [vmem:[%s21 + $0xa0] sm:$0xff]
        %v3205 = vld [vmem:[%s21 + $0xa8] sm:$0xff]
        %v3206 = vld [vmem:[%s21 + $0xb0] sm:$0xff]
        %v3207 = vld [vmem:[%s21 + $0xb8] sm:$0xff]
        %v3208 = vld [vmem:[%s21 + $0xc0] sm:$0xff]
        %v3209 = vld [vmem:[%s21 + $0xc8] sm:$0xff]
        %v3210 = vld [vmem:[%s21 + $0xd0] sm:$0xff]
        %v3211 = vld [vmem:[%s21 + $0xd8] sm:$0xff]
        %v3212 = vld [vmem:[%s21 + $0xe0] sm:$0xff]
        %v3213 = vld [vmem:[%s21 + $0xe8] sm:$0xff]
        %v3214 = vld [vmem:[%s21 + $0xf0] sm:$0xff]
        %v3215 = vld [vmem:[%s21 + $0xf8] sm:$0xff]
        %v3216 = vld [vmem:[%s21 + $0x100] sm:$0xff]
        %v3217 = vld [vmem:[%s21 + $0x108] sm:$0xff]
        %v3218 = vld [vmem:[%s21 + $0x110] sm:$0xff]
        %v3219 = vld [vmem:[%s21 + $0x118] sm:$0xff]
        %v3220 = vld [vmem:[%s21 + $0x120] sm:$0xff]
        %v3221 = vld [vmem:[%s21 + $0x128] sm:$0xff]
        %v3222 = vld [vmem:[%s21 + $0x130] sm:$0xff]
        %v3223 = vld [vmem:[%s21 + $0x138] sm:$0xff]
        %v3224 = vld [vmem:[%s21 + $0x140] sm:$0xff]
        %v3225 = vld [vmem:[%s21 + $0x148] sm:$0xff]
        %v3226 = vld [vmem:[%s21 + $0x150] sm:$0xff]
        %v3227 = vld [vmem:[%s21 + $0x158] sm:$0xff]
        %v3228 = vld [vmem:[%s21 + $0x160] sm:$0xff]
        %v3229 = vld [vmem:[%s21 + $0x168] sm:$0xff]
        %v3230 = vld [vmem:[%s21 + $0x170] sm:$0xff]
        %v3231 = vld [vmem:[%s21 + $0x178] sm:$0xff]
        %v3232 = vld [vmem:[%s21 + $0x180] sm:$0xff]
        %v3233 = vld [vmem:[%s21 + $0x188] sm:$0xff]
        %v3234 = vld [vmem:[%s21 + $0x190] sm:$0xff]
        %v3235 = vld [vmem:[%s21 + $0x198] sm:$0xff]
        %v3236 = vld [vmem:[%s21 + $0x1a0] sm:$0xff]
        %v3237 = vld [vmem:[%s21 + $0x1a8] sm:$0xff]
        %v3238 = vld [vmem:[%s21 + $0x1b0] sm:$0xff]
        %v3239 = vld [vmem:[%s21 + $0x1b8] sm:$0xff]
        %v3240 = vld [vmem:[%s21 + $0x1c0] sm:$0xff]
        %v3241 = vld [vmem:[%s21 + $0x1c8] sm:$0xff]
        %v3242 = vld [vmem:[%s21 + $0x1d0] sm:$0xff]
        %v3243 = vld [vmem:[%s21 + $0x1d8] sm:$0xff]
        %v3244 = vld [vmem:[%s21 + $0x1e0] sm:$0xff]
        %v3245 = vld [vmem:[%s21 + $0x1e8] sm:$0xff]
        %v3246 = vld [vmem:[%s21 + $0x1f0] sm:$0xff]
        %v3247 = vld [vmem:[%s21 + $0x1f8] sm:$0xff]
        %v3248 = vld [vmem:[%s21 + $0x200] sm:$0xff]
        %v3249 = vld [vmem:[%s21 + $0x208] sm:$0xff]
        %v3250 = vld [vmem:[%s21 + $0x210] sm:$0xff]
        %v3251 = vld [vmem:[%s21 + $0x218] sm:$0xff]
        %v3252 = vld [vmem:[%s21 + $0x220] sm:$0xff]
        %v3253 = vld [vmem:[%s21 + $0x228] sm:$0xff]
        %v3254 = vld [vmem:[%s21 + $0x230] sm:$0xff]
        %v3255 = vld [vmem:[%s21 + $0x238] sm:$0xff]
        %v3256 = vld [vmem:[%s21 + $0x240] sm:$0xff]
        %v3257 = vld [vmem:[%s21 + $0x248] sm:$0xff]
        %v3258 = vld [vmem:[%s21 + $0x250] sm:$0xff]
        %v3259 = vld [vmem:[%s21 + $0x258] sm:$0xff]
        %v3260 = vld [vmem:[%s21 + $0x260] sm:$0xff]
        %v3261 = vld [vmem:[%s21 + $0x268] sm:$0xff]
        %v3262 = vld [vmem:[%s21 + $0x270] sm:$0xff]
        %v3263 = vld [vmem:[%s21 + $0x278] sm:$0xff]
        %v3264 = vld [vmem:[%s21 + $0x280] sm:$0xff]
        %v3265 = vld [vmem:[%s21 + $0x288] sm:$0xff]
        %v3266 = vld [vmem:[%s21 + $0x290] sm:$0xff]
        %v3267 = vld [vmem:[%s21 + $0x298] sm:$0xff]
        %v3268 = vld [vmem:[%s21 + $0x2a0] sm:$0x77]
        %v3269 = vld [vmem:[%s21 + $0x2a8] sm:$0x77]
        %v3270 = vld [vmem:[%s21 + $0x2b0] sm:$0x77]
        %v3358 = vunpack.c.l.b16 %v3184
        %v3359 = vunpack.c.h.b16 %v3184
        %v3360 = vunpack.c.l.b16 %v3185
        %v3361 = vunpack.c.h.b16 %v3185
        %v3362 = vunpack.c.l.b16 %v3186
        %v3363 = vunpack.c.h.b16 %v3186
        %v3364 = vunpack.c.l.b16 %v3187
        %v3365 = vunpack.c.h.b16 %v3187
        %v3366 = vunpack.c.l.b16 %v3188
        %v3367 = vunpack.c.h.b16 %v3188
        %v3368 = vunpack.c.l.b16 %v3189
        %v3369 = vunpack.c.h.b16 %v3189
        %v3370 = vunpack.c.l.b16 %v3190
        %v3371 = vunpack.c.h.b16 %v3190
        %v3372 = vunpack.c.l.b16 %v3191
        %v3373 = vunpack.c.h.b16 %v3191
        %v3374 = vunpack.c.l.b16 %v3192
        %v3375 = vunpack.c.h.b16 %v3192
        %v3376 = vunpack.c.l.b16 %v3193
        %v3377 = vunpack.c.h.b16 %v3193
        %v3378 = vunpack.c.l.b16 %v3194
        %v3379 = vunpack.c.h.b16 %v3194
        %v3380 = vunpack.c.l.b16 %v3195
        %v3381 = vunpack.c.h.b16 %v3195
        %v3382 = vunpack.c.l.b16 %v3196
        %v3383 = vunpack.c.h.b16 %v3196
        %v3384 = vunpack.c.l.b16 %v3197
        %v3385 = vunpack.c.h.b16 %v3197
        %v3386 = vunpack.c.l.b16 %v3198
        %v3387 = vunpack.c.h.b16 %v3198
        %v3388 = vunpack.c.l.b16 %v3199
        %v3389 = vunpack.c.h.b16 %v3199
        %v3390 = vunpack.c.l.b16 %v3200
        %v3391 = vunpack.c.h.b16 %v3200
        %v3392 = vunpack.c.l.b16 %v3201
        %v3393 = vunpack.c.h.b16 %v3201
        %v3394 = vunpack.c.l.b16 %v3202
        %v3395 = vunpack.c.h.b16 %v3202
        %v3396 = vunpack.c.l.b16 %v3203
        %v3397 = vunpack.c.h.b16 %v3203
        %v3398 = vunpack.c.l.b16 %v3204
        %v3399 = vunpack.c.h.b16 %v3204
        %v3400 = vunpack.c.l.b16 %v3205
        %v3401 = vunpack.c.h.b16 %v3205
        %v3402 = vunpack.c.l.b16 %v3206
        %v3403 = vunpack.c.h.b16 %v3206
        %v3404 = vunpack.c.l.b16 %v3207
        %v3405 = vunpack.c.h.b16 %v3207
        %v3406 = vunpack.c.l.b16 %v3208
        %v3407 = vunpack.c.h.b16 %v3208
        %v3408 = vunpack.c.l.b16 %v3209
        %v3409 = vunpack.c.h.b16 %v3209
        %v3410 = vunpack.c.l.b16 %v3210
        %v3411 = vunpack.c.h.b16 %v3210
        %v3412 = vunpack.c.l.b16 %v3211
        %v3413 = vunpack.c.h.b16 %v3211
        %v3414 = vunpack.c.l.b16 %v3212
        %v3415 = vunpack.c.h.b16 %v3212
        %v3416 = vunpack.c.l.b16 %v3213
        %v3417 = vunpack.c.h.b16 %v3213
        %v3418 = vunpack.c.l.b16 %v3214
        %v3419 = vunpack.c.h.b16 %v3214
        %v3420 = vunpack.c.l.b16 %v3215
        %v3421 = vunpack.c.h.b16 %v3215
        %v3422 = vunpack.c.l.b16 %v3216
        %v3423 = vunpack.c.h.b16 %v3216
        %v3424 = vunpack.c.l.b16 %v3217
        %v3425 = vunpack.c.h.b16 %v3217
        %v3426 = vunpack.c.l.b16 %v3218
        %v3427 = vunpack.c.h.b16 %v3218
        %v3428 = vunpack.c.l.b16 %v3219
        %v3429 = vunpack.c.h.b16 %v3219
        %v3430 = vunpack.c.l.b16 %v3220
        %v3431 = vunpack.c.h.b16 %v3220
        %v3432 = vunpack.c.l.b16 %v3221
        %v3433 = vunpack.c.h.b16 %v3221
        %v3434 = vunpack.c.l.b16 %v3222
        %v3435 = vunpack.c.h.b16 %v3222
        %v3436 = vunpack.c.l.b16 %v3223
        %v3437 = vunpack.c.h.b16 %v3223
        %v3438 = vunpack.c.l.b16 %v3224
        %v3439 = vunpack.c.h.b16 %v3224
        %v3440 = vunpack.c.l.b16 %v3225
        %v3441 = vunpack.c.h.b16 %v3225
        %v3442 = vunpack.c.l.b16 %v3226
        %v3443 = vunpack.c.h.b16 %v3226
        %v3444 = vunpack.c.l.b16 %v3227
        %v3445 = vunpack.c.h.b16 %v3227
        %v3446 = vunpack.c.l.b16 %v3228
        %v3447 = vunpack.c.h.b16 %v3228
        %v3448 = vunpack.c.l.b16 %v3229
        %v3449 = vunpack.c.h.b16 %v3229
        %v3450 = vunpack.c.l.b16 %v3230
        %v3451 = vunpack.c.h.b16 %v3230
        %v3452 = vunpack.c.l.b16 %v3231
        %v3453 = vunpack.c.h.b16 %v3231
        %v3454 = vunpack.c.l.b16 %v3232
        %v3455 = vunpack.c.h.b16 %v3232
        %v3456 = vunpack.c.l.b16 %v3233
        %v3457 = vunpack.c.h.b16 %v3233
        %v3458 = vunpack.c.l.b16 %v3234
        %v3459 = vunpack.c.h.b16 %v3234
        %v3460 = vunpack.c.l.b16 %v3235
        %v3461 = vunpack.c.h.b16 %v3235
        %v3462 = vunpack.c.l.b16 %v3236
        %v3463 = vunpack.c.h.b16 %v3236
        %v3464 = vunpack.c.l.b16 %v3237
        %v3465 = vunpack.c.h.b16 %v3237
        %v3466 = vunpack.c.l.b16 %v3238
        %v3467 = vunpack.c.h.b16 %v3238
        %v3468 = vunpack.c.l.b16 %v3239
        %v3469 = vunpack.c.h.b16 %v3239
        %v3470 = vunpack.c.l.b16 %v3240
        %v3471 = vunpack.c.h.b16 %v3240
        %v3472 = vunpack.c.l.b16 %v3241
        %v3473 = vunpack.c.h.b16 %v3241
        %v3474 = vunpack.c.l.b16 %v3242
        %v3475 = vunpack.c.h.b16 %v3242
        %v3476 = vunpack.c.l.b16 %v3243
        %v3477 = vunpack.c.h.b16 %v3243
        %v3478 = vunpack.c.l.b16 %v3244
        %v3479 = vunpack.c.h.b16 %v3244
        %v3480 = vunpack.c.l.b16 %v3245
        %v3481 = vunpack.c.h.b16 %v3245
        %v3482 = vunpack.c.l.b16 %v3246
        %v3483 = vunpack.c.h.b16 %v3246
        %v3484 = vunpack.c.l.b16 %v3247
        %v3485 = vunpack.c.h.b16 %v3247
        %v3486 = vunpack.c.l.b16 %v3248
        %v3487 = vunpack.c.h.b16 %v3248
        %v3488 = vunpack.c.l.b16 %v3249
        %v3489 = vunpack.c.h.b16 %v3249
        %v3490 = vunpack.c.l.b16 %v3250
        %v3491 = vunpack.c.h.b16 %v3250
        %v3492 = vunpack.c.l.b16 %v3251
        %v3493 = vunpack.c.h.b16 %v3251
        %v3494 = vunpack.c.l.b16 %v3252
        %v3495 = vunpack.c.h.b16 %v3252
        %v3496 = vunpack.c.l.b16 %v3253
        %v3497 = vunpack.c.h.b16 %v3253
        %v3498 = vunpack.c.l.b16 %v3254
        %v3499 = vunpack.c.h.b16 %v3254
        %v3500 = vunpack.c.l.b16 %v3255
        %v3501 = vunpack.c.h.b16 %v3255
        %v3502 = vunpack.c.l.b16 %v3256
        %v3503 = vunpack.c.h.b16 %v3256
        %v3504 = vunpack.c.l.b16 %v3257
        %v3505 = vunpack.c.h.b16 %v3257
        %v3506 = vunpack.c.l.b16 %v3258
        %v3507 = vunpack.c.h.b16 %v3258
        %v3508 = vunpack.c.l.b16 %v3259
        %v3509 = vunpack.c.h.b16 %v3259
        %v3510 = vunpack.c.l.b16 %v3260
        %v3511 = vunpack.c.h.b16 %v3260
        %v3512 = vunpack.c.l.b16 %v3261
        %v3513 = vunpack.c.h.b16 %v3261
        %v3514 = vunpack.c.l.b16 %v3262
        %v3515 = vunpack.c.h.b16 %v3262
        %v3516 = vunpack.c.l.b16 %v3263
        %v3517 = vunpack.c.h.b16 %v3263
        %v3518 = vunpack.c.l.b16 %v3264
        %v3519 = vunpack.c.h.b16 %v3264
        %v3520 = vunpack.c.l.b16 %v3265
        %v3521 = vunpack.c.h.b16 %v3265
        %v3522 = vunpack.c.l.b16 %v3266
        %v3523 = vunpack.c.h.b16 %v3266
        %v3524 = vunpack.c.l.b16 %v3267
        %v3525 = vunpack.c.h.b16 %v3267
        %v3526 = vunpack.c.l.b16 %v3268
        %v3527 = vunpack.c.h.b16 %v3268
        %v3528 = vunpack.c.l.b16 %v3269
        %v3529 = vunpack.c.h.b16 %v3269
        %v3530 = vunpack.c.l.b16 %v3270
        %v3531 = vunpack.c.h.b16 %v3270
        %v3532 = vpack.c.b16 %v3364, %v3358
        %v3533 = vpack.c.b16 %v3365, %v3359
        %v3534 = vpack.c.b16 %v3366, %v3360
        %v3535 = vpack.c.b16 %v3367, %v3361
        %v3536 = vpack.c.b16 %v3368, %v3362
        %v3537 = vpack.c.b16 %v3369, %v3363
        %v3538 = vpack.c.b16 %v3376, %v3370
        %v3539 = vpack.c.b16 %v3377, %v3371
        %v3540 = vpack.c.b16 %v3378, %v3372
        %v3541 = vpack.c.b16 %v3379, %v3373
        %v3542 = vpack.c.b16 %v3380, %v3374
        %v3543 = vpack.c.b16 %v3381, %v3375
        %v3544 = vpack.c.b16 %v3388, %v3382
        %v3545 = vpack.c.b16 %v3389, %v3383
        %v3546 = vpack.c.b16 %v3390, %v3384
        %v3547 = vpack.c.b16 %v3391, %v3385
        %v3548 = vpack.c.b16 %v3392, %v3386
        %v3549 = vpack.c.b16 %v3393, %v3387
        %v3550 = vpack.c.b16 %v3400, %v3394
        %v3551 = vpack.c.b16 %v3401, %v3395
        %v3552 = vpack.c.b16 %v3402, %v3396
        %v3553 = vpack.c.b16 %v3403, %v3397
        %v3554 = vpack.c.b16 %v3404, %v3398
        %v3555 = vpack.c.b16 %v3405, %v3399
        %v3556 = vpack.c.b16 %v3412, %v3406
        %v3557 = vpack.c.b16 %v3413, %v3407
        %v3558 = vpack.c.b16 %v3414, %v3408
        %v3559 = vpack.c.b16 %v3415, %v3409
        %v3560 = vpack.c.b16 %v3416, %v3410
        %v3561 = vpack.c.b16 %v3417, %v3411
        %v3562 = vpack.c.b16 %v3424, %v3418
        %v3563 = vpack.c.b16 %v3425, %v3419
        %v3564 = vpack.c.b16 %v3426, %v3420
        %v3565 = vpack.c.b16 %v3427, %v3421
        %v3566 = vpack.c.b16 %v3428, %v3422
        %v3567 = vpack.c.b16 %v3429, %v3423
        %v3568 = vpack.c.b16 %v3436, %v3430
        %v3569 = vpack.c.b16 %v3437, %v3431
        %v3570 = vpack.c.b16 %v3438, %v3432
        %v3571 = vpack.c.b16 %v3439, %v3433
        %v3572 = vpack.c.b16 %v3440, %v3434
        %v3573 = vpack.c.b16 %v3441, %v3435
        %v3574 = vpack.c.b16 %v3448, %v3442
        %v3575 = vpack.c.b16 %v3449, %v3443
        %v3576 = vpack.c.b16 %v3450, %v3444
        %v3577 = vpack.c.b16 %v3451, %v3445
        %v3578 = vpack.c.b16 %v3452, %v3446
        %v3579 = vpack.c.b16 %v3453, %v3447
        %v3580 = vpack.c.b16 %v3460, %v3454
        %v3581 = vpack.c.b16 %v3461, %v3455
        %v3582 = vpack.c.b16 %v3462, %v3456
        %v3583 = vpack.c.b16 %v3463, %v3457
        %v3584 = vpack.c.b16 %v3464, %v3458
        %v3585 = vpack.c.b16 %v3465, %v3459
        %v3586 = vpack.c.b16 %v3472, %v3466
        %v3587 = vpack.c.b16 %v3473, %v3467
        %v3588 = vpack.c.b16 %v3474, %v3468
        %v3589 = vpack.c.b16 %v3475, %v3469
        %v3590 = vpack.c.b16 %v3476, %v3470
        %v3591 = vpack.c.b16 %v3477, %v3471
        %v3592 = vpack.c.b16 %v3484, %v3478
        %v3593 = vpack.c.b16 %v3485, %v3479
        %v3594 = vpack.c.b16 %v3486, %v3480
        %v3595 = vpack.c.b16 %v3487, %v3481
        %v3596 = vpack.c.b16 %v3488, %v3482
        %v3597 = vpack.c.b16 %v3489, %v3483
        %v3598 = vpack.c.b16 %v3496, %v3490
        %v3599 = vpack.c.b16 %v3497, %v3491
        %v3600 = vpack.c.b16 %v3498, %v3492
        %v3601 = vpack.c.b16 %v3499, %v3493
        %v3602 = vpack.c.b16 %v3500, %v3494
        %v3603 = vpack.c.b16 %v3501, %v3495
        %v3604 = vpack.c.b16 %v3508, %v3502
        %v3605 = vpack.c.b16 %v3509, %v3503
        %v3606 = vpack.c.b16 %v3510, %v3504
        %v3607 = vpack.c.b16 %v3511, %v3505
        %v3608 = vpack.c.b16 %v3512, %v3506
        %v3609 = vpack.c.b16 %v3513, %v3507
        %v3610 = vpack.c.b16 %v3520, %v3514
        %v3611 = vpack.c.b16 %v3521, %v3515
        %v3612 = vpack.c.b16 %v3522, %v3516
        %v3613 = vpack.c.b16 %v3523, %v3517
        %v3614 = vpack.c.b16 %v3524, %v3518
        %v3615 = vpack.c.b16 %v3525, %v3519
        %v3616 = vpack.c.b16 %v3526, %v3526
        %v3617 = vpack.c.b16 %v3527, %v3527
        %v3618 = vpack.c.b16 %v3528, %v3528
        %v3619 = vpack.c.b16 %v3529, %v3529
        %v3620 = vpack.c.b16 %v3530, %v3530
        %v3621 = vpack.c.b16 %v3531, %v3531
        %v3707 = vsel %vm2262, %v3183, 0
        %vm3709 = vcmask 1042432
        %v3711 = vsel %vm3709, %v3616, 0
        %v3714 = vsel %vm3709, %v3617, 0
        %v3717 = vsel %vm3709, %v3618, 0
        %v3720 = vsel %vm3709, %v3619, 0
        %v3723 = vsel %vm3709, %v3620, 0
        %v3726 = vsel %vm3709, %v3621, 0
        %3728 = vmatprep.subr.bf16.mxu0 %v3533
        %3729 = vmatpush1.bf16.msra.mxu0 %v3532
        %3730 = vmatprep.subr.bf16.mxu0 %v3539
        %3731 = vmatpush1.bf16.msra.mxu0 %v3538
        %3732 = vmatprep.subr.bf16.mxu0 %v3545
        %3733 = vmatpush1.bf16.msra.mxu0 %v3544
        %3734 = vmatprep.subr.bf16.mxu0 %v3551
        %3735 = vmatpush1.bf16.msra.mxu0 %v3550
        %3736 = vmatprep.subr.bf16.mxu0 %v3557
        %3737 = vmatpush1.bf16.msra.mxu0 %v3556
        %3738 = vmatprep.subr.bf16.mxu0 %v3563
        %3739 = vmatpush1.bf16.msra.mxu0 %v3562
        %3740 = vmatprep.subr.bf16.mxu0 %v3569
        %3741 = vmatpush1.bf16.msra.mxu0 %v3568
        %3742 = vmatprep.subr.bf16.mxu0 %v3575
        %3743 = vmatpush1.bf16.msra.mxu0 %v3574
        %3744 = vmatprep.subr.bf16.mxu0 %v3581
        %3745 = vmatpush1.bf16.msra.mxu0 %v3580
        %3746 = vmatprep.subr.bf16.mxu0 %v3587
        %3747 = vmatpush1.bf16.msra.mxu0 %v3586
        %3748 = vmatprep.subr.bf16.mxu0 %v3593
        %3749 = vmatpush1.bf16.msra.mxu0 %v3592
        %3750 = vmatprep.subr.bf16.mxu0 %v3599
        %3751 = vmatpush1.bf16.msra.mxu0 %v3598
        %3752 = vmatprep.subr.bf16.mxu0 %v3605
        %3753 = vmatpush1.bf16.msra.mxu0 %v3604
        %3754 = vmatprep.subr.bf16.mxu0 %v3611
        %3755 = vmatpush1.bf16.msra.mxu0 %v3610
        %3756 = vmatprep.subr.bf16.mxu0 %v3714
        %3757 = vmatpush1.bf16.msra.mxu0 %v3711
        %3758 = vmatprep.subr.bf16.mxu0 0
        %3759 = vmatpush1.bf16.msra.mxu0 0
        %3760 = vmatprep.mubr.bf16.mxu0 %v3707
        %3761 = vmatmul.mubr.bf16.gmra.mrb[0].mxu0 %v3182
        %v3762 = vpop.f32.mrb[0].mxu0
        %v3763 = vadd.f32 0.0, %v3762
        %v3764 = vpop.f32.mrb[0].mxu0
        %v3765 = vadd.f32 0.0, %v3764
        %v3766 = vpop.f32.mrb[0].mxu0
        %v3767 = vpop.f32.mrb[0].mxu0
        %3768 = vdwg.mxu0
        %3769 = vmatprep.subr.bf16.mxu0 %v3535
        %3770 = vmatpush1.bf16.msra.mxu0 %v3534
        %3771 = vmatprep.subr.bf16.mxu0 %v3541
        %3772 = vmatpush1.bf16.msra.mxu0 %v3540
        %3773 = vmatprep.subr.bf16.mxu0 %v3547
        %3774 = vmatpush1.bf16.msra.mxu0 %v3546
        %3775 = vmatprep.subr.bf16.mxu0 %v3553
        %3776 = vmatpush1.bf16.msra.mxu0 %v3552
        %3777 = vmatprep.subr.bf16.mxu0 %v3559
        %3778 = vmatpush1.bf16.msra.mxu0 %v3558
        %3779 = vmatprep.subr.bf16.mxu0 %v3565
        %3780 = vmatpush1.bf16.msra.mxu0 %v3564
        %3781 = vmatprep.subr.bf16.mxu0 %v3571
        %3782 = vmatpush1.bf16.msra.mxu0 %v3570
        %3783 = vmatprep.subr.bf16.mxu0 %v3577
        %3784 = vmatpush1.bf16.msra.mxu0 %v3576
        %3785 = vmatprep.subr.bf16.mxu0 %v3583
        %3786 = vmatpush1.bf16.msra.mxu0 %v3582
        %3787 = vmatprep.subr.bf16.mxu0 %v3589
        %3788 = vmatpush1.bf16.msra.mxu0 %v3588
        %3789 = vmatprep.subr.bf16.mxu0 %v3595
        %3790 = vmatpush1.bf16.msra.mxu0 %v3594
        %3791 = vmatprep.subr.bf16.mxu0 %v3601
        %3792 = vmatpush1.bf16.msra.mxu0 %v3600
        %3793 = vmatprep.subr.bf16.mxu0 %v3607
        %3794 = vmatpush1.bf16.msra.mxu0 %v3606
        %3795 = vmatprep.subr.bf16.mxu0 %v3613
        %3796 = vmatpush1.bf16.msra.mxu0 %v3612
        %3797 = vmatprep.subr.bf16.mxu0 %v3720
        %3798 = vmatpush1.bf16.msra.mxu0 %v3717
        %3799 = vmatprep.subr.bf16.mxu0 0
        %3800 = vmatpush1.bf16.msra.mxu0 0
        %3801 = vmatprep.mubr.bf16.mxu0 %v3707
        %3802 = vmatmul.mubr.bf16.gmra.mrb[0].mxu0 %v3182
        %v3803 = vpop.f32.mrb[0].mxu0
        %v3804 = vadd.f32 0.0, %v3803
        %v3805 = vpop.f32.mrb[0].mxu0
        %v3806 = vadd.f32 0.0, %v3805
        %v3807 = vpop.f32.mrb[0].mxu0
        %v3808 = vpop.f32.mrb[0].mxu0
        %3809 = vdwg.mxu0
        %3810 = vmatprep.subr.bf16.mxu0 %v3537
        %3811 = vmatpush1.bf16.msra.mxu0 %v3536
        %3812 = vmatprep.subr.bf16.mxu0 %v3543
        %3813 = vmatpush1.bf16.msra.mxu0 %v3542
        %3814 = vmatprep.subr.bf16.mxu0 %v3549
        %3815 = vmatpush1.bf16.msra.mxu0 %v3548
        %3816 = vmatprep.subr.bf16.mxu0 %v3555
        %3817 = vmatpush1.bf16.msra.mxu0 %v3554
        %3818 = vmatprep.subr.bf16.mxu0 %v3561
        %3819 = vmatpush1.bf16.msra.mxu0 %v3560
        %3820 = vmatprep.subr.bf16.mxu0 %v3567
        %3821 = vmatpush1.bf16.msra.mxu0 %v3566
        %3822 = vmatprep.subr.bf16.mxu0 %v3573
        %3823 = vmatpush1.bf16.msra.mxu0 %v3572
        %3824 = vmatprep.subr.bf16.mxu0 %v3579
        %3825 = vmatpush1.bf16.msra.mxu0 %v3578
        %3826 = vmatprep.subr.bf16.mxu0 %v3585
        %3827 = vmatpush1.bf16.msra.mxu0 %v3584
        %3828 = vmatprep.subr.bf16.mxu0 %v3591
        %3829 = vmatpush1.bf16.msra.mxu0 %v3590
        %3830 = vmatprep.subr.bf16.mxu0 %v3597
        %3831 = vmatpush1.bf16.msra.mxu0 %v3596
        %3832 = vmatprep.subr.bf16.mxu0 %v3603
        %3833 = vmatpush1.bf16.msra.mxu0 %v3602
        %3834 = vmatprep.subr.bf16.mxu0 %v3609
        %3835 = vmatpush1.bf16.msra.mxu0 %v3608
        %3836 = vmatprep.subr.bf16.mxu0 %v3615
        %3837 = vmatpush1.bf16.msra.mxu0 %v3614
        %3838 = vmatprep.subr.bf16.mxu0 %v3726
        %3839 = vmatpush1.bf16.msra.mxu0 %v3723
        %3840 = vmatprep.subr.bf16.mxu0 0
        %3841 = vmatpush1.bf16.msra.mxu0 0
        %3842 = vmatprep.mubr.bf16.mxu0 %v3707
        %3843 = vmatmul.mubr.bf16.gmra.mrb[0].mxu0 %v3182
        %v3844 = vpop.f32.mrb[0].mxu0
        %v3845 = vadd.f32 0.0, %v3844
        %v3846 = vpop.f32.mrb[0].mxu0
        %v3847 = vadd.f32 0.0, %v3846
        %v3848 = vpop.f32.mrb[0].mxu0
        %v3849 = vpop.f32.mrb[0].mxu0
        %3850 = vdwg.mxu0
        %3853 = vrot.lane.b32.xlu0 %v3180, 102
        %v3854 = vpop.permute.xlu0 %3853
        %3855 = vrot.lane.b32.xlu0 %v3181, 102
        %v3856 = vpop.permute.xlu0 %3855
        %v3857 = vsel %vm2262, %v3854, %v3856
        %3861 = vrot.lane.b32.xlu0 %v3180, 76
        %v3862 = vpop.permute.xlu0 %3861
        %3863 = vrot.lane.b32.xlu0 %v3181, 76
        %v3864 = vpop.permute.xlu0 %3863
        %vm3865 = vcmask 621568
        %v3866 = vsel %vm3865, %v3862, %v3864
        %v3870 = vsel %vm2262, %v3181, %v3854
        %v3871 = vsel %vm3865, %v3856, %v3862
        %v3872 = vmul.f32 %v3763, %v3180
        %v3873 = vmul.f32 %v3765, %v3870
        %v3874 = vmul.f32 %v3804, %v3857
        %v3875 = vmul.f32 %v3806, %v3871
        %v3876 = vmul.f32 %v3845, %v3866
        %v3877 = vmul.f32 %v3847, %v3864
        %3880 = vrot.lane.b32.xlu0 %v3144, 50
        %v3881 = vpop.permute.xlu0 %3880
        %3882 = vrot.lane.b32.xlu0 %v3145, 50
        %v3883 = vpop.permute.xlu0 %3882
        %vm3884 = vcmask 408576
        %v3885 = vsel %vm3884, %v3881, %v3883
        %3889 = vrot.lane.b32.xlu0 %v3180, 24
        %v3890 = vpop.permute.xlu0 %3889
        %3891 = vrot.lane.b32.xlu0 %v3181, 24
        %v3892 = vpop.permute.xlu0 %3891
        %vm3893 = vcmask 195584
        %v3894 = vsel %vm3893, %v3890, %v3892
        %v3896 = vsel %vm3884, %v3877, %v3881
        %v3897 = vsel %vm3893, %v3883, %v3890
        %v3898 = vld [vmem:[%s22] sm:$0xff]
        %v3899 = vld [vmem:[%s22 + $0x8] sm:$0xff]
        %v3900 = vld [vmem:[%s22 + $0x10] sm:$0xff]
        %v3901 = vld [vmem:[%s22 + $0x18] sm:$0xff]
        %v3902 = vld [vmem:[%s22 + $0x20] sm:$0xff]
        %v3903 = vld [vmem:[%s22 + $0x28] sm:$0xff]
        %v3904 = vld [vmem:[%s22 + $0x30] sm:$0xff]
        %v3905 = vld [vmem:[%s22 + $0x38] sm:$0xff]
        %v3906 = vld [vmem:[%s22 + $0x40] sm:$0xff]
        %v3907 = vld [vmem:[%s22 + $0x48] sm:$0xff]
        %v3908 = vld [vmem:[%s22 + $0x50] sm:$0xff]
        %v3909 = vld [vmem:[%s22 + $0x58] sm:$0xff]
        %v3910 = vld [vmem:[%s22 + $0x60] sm:$0xff]
        %v3911 = vld [vmem:[%s22 + $0x68] sm:$0xff]
        %v3912 = vld [vmem:[%s22 + $0x70] sm:$0xff]
        %v3913 = vld [vmem:[%s22 + $0x78] sm:$0xff]
        %v3914 = vld [vmem:[%s22 + $0x80] sm:$0xff]
        %v3915 = vld [vmem:[%s22 + $0x88] sm:$0xff]
        %v3916 = vld [vmem:[%s22 + $0x90] sm:$0xff]
        %v3917 = vld [vmem:[%s22 + $0x98] sm:$0xff]
        %v3918 = vld [vmem:[%s22 + $0xa0] sm:$0xff]
        %v3919 = vld [vmem:[%s22 + $0xa8] sm:$0xff]
        %v3920 = vld [vmem:[%s22 + $0xb0] sm:$0xff]
        %v3921 = vld [vmem:[%s22 + $0xb8] sm:$0xff]
        %v3922 = vld [vmem:[%s22 + $0xc0] sm:$0xff]
        %v3923 = vld [vmem:[%s22 + $0xc8] sm:$0xff]
        %v3924 = vld [vmem:[%s22 + $0xd0] sm:$0xff]
        %v3925 = vld [vmem:[%s22 + $0xd8] sm:$0xff]
        %v3926 = vld [vmem:[%s22 + $0xe0] sm:$0xff]
        %v3927 = vld [vmem:[%s22 + $0xe8] sm:$0xff]
        %v3928 = vld [vmem:[%s22 + $0xf0] sm:$0xff]
        %v3929 = vld [vmem:[%s22 + $0xf8] sm:$0xff]
        %v3930 = vld [vmem:[%s22 + $0x100] sm:$0xff]
        %v3931 = vld [vmem:[%s22 + $0x108] sm:$0xff]
        %v3932 = vld [vmem:[%s22 + $0x110] sm:$0xff]
        %v3933 = vld [vmem:[%s22 + $0x118] sm:$0xff]
        %v3934 = vld [vmem:[%s22 + $0x120] sm:$0xff]
        %v3935 = vld [vmem:[%s22 + $0x128] sm:$0xff]
        %v3936 = vld [vmem:[%s22 + $0x130] sm:$0xff]
        %v3937 = vld [vmem:[%s22 + $0x138] sm:$0xff]
        %v3938 = vld [vmem:[%s22 + $0x140] sm:$0xff]
        %v3939 = vld [vmem:[%s22 + $0x148] sm:$0xff]
        %v3940 = vld [vmem:[%s22 + $0x150] sm:$0xff]
        %v3941 = vld [vmem:[%s22 + $0x158] sm:$0xff]
        %v3942 = vld [vmem:[%s22 + $0x160] sm:$0xff]
        %v3943 = vld [vmem:[%s22 + $0x168] sm:$0xff]
        %v3944 = vld [vmem:[%s22 + $0x170] sm:$0xff]
        %v3945 = vld [vmem:[%s22 + $0x178] sm:$0xff]
        %v3946 = vld [vmem:[%s22 + $0x180] sm:$0xff]
        %v3947 = vld [vmem:[%s22 + $0x188] sm:$0xff]
        %v3948 = vld [vmem:[%s22 + $0x190] sm:$0xff]
        %v3949 = vld [vmem:[%s22 + $0x198] sm:$0xff]
        %v3950 = vld [vmem:[%s22 + $0x1a0] sm:$0xff]
        %v3951 = vld [vmem:[%s22 + $0x1a8] sm:$0xff]
        %v3952 = vld [vmem:[%s22 + $0x1b0] sm:$0xff]
        %v3953 = vld [vmem:[%s22 + $0x1b8] sm:$0xff]
        %v3954 = vld [vmem:[%s22 + $0x1c0] sm:$0xff]
        %v3955 = vld [vmem:[%s22 + $0x1c8] sm:$0xff]
        %v3956 = vld [vmem:[%s22 + $0x1d0] sm:$0xff]
        %v3957 = vld [vmem:[%s22 + $0x1d8] sm:$0xff]
        %v3958 = vld [vmem:[%s22 + $0x1e0] sm:$0xff]
        %v3959 = vld [vmem:[%s22 + $0x1e8] sm:$0xff]
        %v3960 = vld [vmem:[%s22 + $0x1f0] sm:$0xff]
        %v3961 = vld [vmem:[%s22 + $0x1f8] sm:$0xff]
        %v3962 = vld [vmem:[%s22 + $0x200] sm:$0xff]
        %v3963 = vld [vmem:[%s22 + $0x208] sm:$0xff]
        %v3964 = vld [vmem:[%s22 + $0x210] sm:$0xff]
        %v3965 = vld [vmem:[%s22 + $0x218] sm:$0xff]
        %v3966 = vld [vmem:[%s22 + $0x220] sm:$0xff]
        %v3967 = vld [vmem:[%s22 + $0x228] sm:$0xff]
        %v3968 = vld [vmem:[%s22 + $0x230] sm:$0xff]
        %v3969 = vld [vmem:[%s22 + $0x238] sm:$0xff]
        %v3970 = vld [vmem:[%s22 + $0x240] sm:$0xff]
        %v3971 = vld [vmem:[%s22 + $0x248] sm:$0xff]
        %v3972 = vld [vmem:[%s22 + $0x250] sm:$0xff]
        %v3973 = vld [vmem:[%s22 + $0x258] sm:$0xff]
        %v3974 = vld [vmem:[%s22 + $0x260] sm:$0xff]
        %v3975 = vld [vmem:[%s22 + $0x268] sm:$0xff]
        %v3976 = vld [vmem:[%s22 + $0x270] sm:$0xff]
        %v3977 = vld [vmem:[%s22 + $0x278] sm:$0xff]
        %v3978 = vld [vmem:[%s22 + $0x280] sm:$0xff]
        %v3979 = vld [vmem:[%s22 + $0x288] sm:$0xff]
        %v3980 = vld [vmem:[%s22 + $0x290] sm:$0xff]
        %v3981 = vld [vmem:[%s22 + $0x298] sm:$0xff]
        %v3982 = vld [vmem:[%s22 + $0x2a0] sm:$0xff]
        %v3983 = vld [vmem:[%s22 + $0x2a8] sm:$0xff]
        %v3984 = vld [vmem:[%s22 + $0x2b0] sm:$0xff]
        %v3985 = vld [vmem:[%s22 + $0x2b8] sm:$0xff]
        %v3986 = vld [vmem:[%s22 + $0x2c0] sm:$0xff]
        %v3987 = vld [vmem:[%s22 + $0x2c8] sm:$0xff]
        %v3988 = vld [vmem:[%s22 + $0x2d0] sm:$0xff]
        %v3989 = vld [vmem:[%s22 + $0x2d8] sm:$0xff]
        %v3990 = vld [vmem:[%s22 + $0x2e0] sm:$0xff]
        %v3991 = vld [vmem:[%s22 + $0x2e8] sm:$0xff]
        %v3992 = vld [vmem:[%s22 + $0x2f0] sm:$0xff]
        %v3993 = vld [vmem:[%s22 + $0x2f8] sm:$0xff]
        %v3994 = vld [vmem:[%s22 + $0x300] sm:$0xff]
        %v3995 = vld [vmem:[%s22 + $0x308] sm:$0xff]
        %v3996 = vld [vmem:[%s22 + $0x310] sm:$0xff]
        %v3997 = vld [vmem:[%s22 + $0x318] sm:$0xff]
        %v3998 = vld [vmem:[%s22 + $0x320] sm:$0xff]
        %v3999 = vld [vmem:[%s22 + $0x328] sm:$0xff]
        %v4000 = vld [vmem:[%s22 + $0x330] sm:$0xff]
        %v4001 = vld [vmem:[%s22 + $0x338] sm:$0xff]
        %v4002 = vld [vmem:[%s22 + $0x340] sm:$0xff]
        %v4003 = vld [vmem:[%s22 + $0x348] sm:$0xff]
        %v4004 = vld [vmem:[%s22 + $0x350] sm:$0xff]
        %v4005 = vld [vmem:[%s22 + $0x358] sm:$0xff]
        %v4006 = vld [vmem:[%s22 + $0x360] sm:$0xff]
        %v4007 = vld [vmem:[%s22 + $0x368] sm:$0xff]
        %v4008 = vld [vmem:[%s22 + $0x370] sm:$0xff]
        %v4009 = vld [vmem:[%s22 + $0x378] sm:$0xff]
        %v4010 = vld [vmem:[%s22 + $0x380] sm:$0xff]
        %v4011 = vld [vmem:[%s22 + $0x388] sm:$0xff]
        %v4012 = vld [vmem:[%s22 + $0x390] sm:$0xff]
        %v4013 = vld [vmem:[%s22 + $0x398] sm:$0xff]
        %v4014 = vld [vmem:[%s22 + $0x3a0] sm:$0xff]
        %v4015 = vld [vmem:[%s22 + $0x3a8] sm:$0xff]
        %v4016 = vld [vmem:[%s22 + $0x3b0] sm:$0xff]
        %v4017 = vld [vmem:[%s22 + $0x3b8] sm:$0xff]
        %v4018 = vld [vmem:[%s22 + $0x3c0] sm:$0xff]
        %v4019 = vld [vmem:[%s22 + $0x3c8] sm:$0xff]
        %v4020 = vld [vmem:[%s22 + $0x3d0] sm:$0xff]
        %v4021 = vld [vmem:[%s22 + $0x3d8] sm:$0xff]
        %v4022 = vld [vmem:[%s22 + $0x3e0] sm:$0xff]
        %v4023 = vld [vmem:[%s22 + $0x3e8] sm:$0xff]
        %v4024 = vld [vmem:[%s22 + $0x3f0] sm:$0xff]
        %v4025 = vld [vmem:[%s22 + $0x3f8] sm:$0xff]
        %v4026 = vld [vmem:[%s22 + $0x400] sm:$0xff]
        %v4027 = vld [vmem:[%s22 + $0x408] sm:$0xff]
        %v4028 = vld [vmem:[%s22 + $0x410] sm:$0xff]
        %v4029 = vld [vmem:[%s22 + $0x418] sm:$0xff]
        %v4030 = vld [vmem:[%s22 + $0x420] sm:$0xff]
        %v4031 = vld [vmem:[%s22 + $0x428] sm:$0xff]
        %v4032 = vld [vmem:[%s22 + $0x430] sm:$0xff]
        %v4033 = vld [vmem:[%s22 + $0x438] sm:$0xff]
        %v4034 = vld [vmem:[%s22 + $0x440] sm:$0xff]
        %v4035 = vld [vmem:[%s22 + $0x448] sm:$0xff]
        %v4036 = vld [vmem:[%s22 + $0x450] sm:$0xff]
        %v4037 = vld [vmem:[%s22 + $0x458] sm:$0xff]
        %v4038 = vld [vmem:[%s22 + $0x460] sm:$0xff]
        %v4039 = vld [vmem:[%s22 + $0x468] sm:$0xff]
        %v4040 = vld [vmem:[%s22 + $0x470] sm:$0xff]
        %v4041 = vld [vmem:[%s22 + $0x478] sm:$0x3f]
        %v4042 = vld [vmem:[%s23] sm:$0x1]
        %v4044 = vlaneseq
        %v4045 = vshrl.u32 %v4044, 7
        %v4046 = vsub.s32 0, %v4045
        %v4047 = vrot.slane %v4042, %v4046
        %vm4049 = vcmask 1031168
        %v4050 = vsel %vm4049, %v3894, 0
        %v4053 = vsel %vm1956, %v4041, 0
        %4055 = vmatprep.subr.mxu0 0.0
        %4056 = vmatpush1.msra.mxu0 %v3898
        %4057 = vmatprep.subr.mxu0 0.0
        %4058 = vmatpush1.msra.mxu0 %v3899
        %4059 = vmatprep.subr.mxu0 0.0
        %4060 = vmatpush1.msra.mxu0 %v3900
        %4061 = vmatprep.subr.mxu0 0.0
        %4062 = vmatpush1.msra.mxu0 %v3901
        %4063 = vmatprep.subr.mxu0 0.0
        %4064 = vmatpush1.msra.mxu0 %v3902
        %4065 = vmatprep.subr.mxu0 0.0
        %4066 = vmatpush1.msra.mxu0 %v3903
        %4067 = vmatprep.subr.mxu0 0.0
        %4068 = vmatpush1.msra.mxu0 %v3904
        %4069 = vmatprep.subr.mxu0 0.0
        %4070 = vmatpush1.msra.mxu0 %v3905
        %4071 = vmatprep.subr.mxu0 0.0
        %4072 = vmatpush1.msra.mxu0 %v3906
        %4073 = vmatprep.subr.mxu0 0.0
        %4074 = vmatpush1.msra.mxu0 %v3907
        %4075 = vmatprep.subr.mxu0 0.0
        %4076 = vmatpush1.msra.mxu0 %v3908
        %4077 = vmatprep.subr.mxu0 0.0
        %4078 = vmatpush1.msra.mxu0 %v3909
        %4079 = vmatprep.subr.mxu0 0.0
        %4080 = vmatpush1.msra.mxu0 %v3910
        %4081 = vmatprep.subr.mxu0 0.0
        %4082 = vmatpush1.msra.mxu0 %v3911
        %4083 = vmatprep.subr.mxu0 0.0
        %4084 = vmatpush1.msra.mxu0 %v3912
        %4085 = vmatprep.subr.mxu0 0.0
        %4086 = vmatpush1.msra.mxu0 %v3913
        %4087 = vmatprep.subr.mxu0 0.0
        %4088 = vmatpush1.msra.mxu0 %v3914
        %4089 = vmatprep.subr.mxu0 0.0
        %4090 = vmatpush1.msra.mxu0 %v3915
        %4091 = vmatprep.subr.mxu0 0.0
        %4092 = vmatpush1.msra.mxu0 %v3916
        %4093 = vmatprep.subr.mxu0 0.0
        %4094 = vmatpush1.msra.mxu0 %v3917
        %4095 = vmatprep.subr.mxu0 0.0
        %4096 = vmatpush1.msra.mxu0 %v3918
        %4097 = vmatprep.subr.mxu0 0.0
        %4098 = vmatpush1.msra.mxu0 %v3919
        %4099 = vmatprep.subr.mxu0 0.0
        %4100 = vmatpush1.msra.mxu0 %v3920
        %4101 = vmatprep.subr.mxu0 0.0
        %4102 = vmatpush1.msra.mxu0 %v3921
        %4103 = vmatprep.subr.mxu0 0.0
        %4104 = vmatpush1.msra.mxu0 %v3922
        %4105 = vmatprep.subr.mxu0 0.0
        %4106 = vmatpush1.msra.mxu0 %v3923
        %4107 = vmatprep.subr.mxu0 0.0
        %4108 = vmatpush1.msra.mxu0 %v3924
        %4109 = vmatprep.subr.mxu0 0.0
        %4110 = vmatpush1.msra.mxu0 %v3925
        %4111 = vmatprep.subr.mxu0 0.0
        %4112 = vmatpush1.msra.mxu0 %v3926
        %4113 = vmatprep.subr.mxu0 0.0
        %4114 = vmatpush1.msra.mxu0 %v3927
        %4115 = vmatprep.subr.mxu0 0.0
        %4116 = vmatpush1.msra.mxu0 %v3928
        %4117 = vmatprep.subr.mxu0 0.0
        %4118 = vmatpush1.msra.mxu0 %v3929
        %4119 = vmatprep.mubr.f32.mxu0 %v3873
        %4120 = vmatmul.mubr.f32.gmra.mrb[0].mxu0 %v3872
        %v4121 = vpop.f32.mrb[0].mxu0
        %v4122 = vadd.f32 %v4047, %v4121
        %v4123 = vpop.f32.mrb[0].mxu0
        %4124 = vdwg.mxu0
        %4125 = vmatprep.subr.mxu0 0.0
        %4126 = vmatpush1.msra.mxu0 %v3930
        %4127 = vmatprep.subr.mxu0 0.0
        %4128 = vmatpush1.msra.mxu0 %v3931
        %4129 = vmatprep.subr.mxu0 0.0
        %4130 = vmatpush1.msra.mxu0 %v3932
        %4131 = vmatprep.subr.mxu0 0.0
        %4132 = vmatpush1.msra.mxu0 %v3933
        %4133 = vmatprep.subr.mxu0 0.0
        %4134 = vmatpush1.msra.mxu0 %v3934
        %4135 = vmatprep.subr.mxu0 0.0
        %4136 = vmatpush1.msra.mxu0 %v3935
        %4137 = vmatprep.subr.mxu0 0.0
        %4138 = vmatpush1.msra.mxu0 %v3936
        %4139 = vmatprep.subr.mxu0 0.0
        %4140 = vmatpush1.msra.mxu0 %v3937
        %4141 = vmatprep.subr.mxu0 0.0
        %4142 = vmatpush1.msra.mxu0 %v3938
        %4143 = vmatprep.subr.mxu0 0.0
        %4144 = vmatpush1.msra.mxu0 %v3939
        %4145 = vmatprep.subr.mxu0 0.0
        %4146 = vmatpush1.msra.mxu0 %v3940
        %4147 = vmatprep.subr.mxu0 0.0
        %4148 = vmatpush1.msra.mxu0 %v3941
        %4149 = vmatprep.subr.mxu0 0.0
        %4150 = vmatpush1.msra.mxu0 %v3942
        %4151 = vmatprep.subr.mxu0 0.0
        %4152 = vmatpush1.msra.mxu0 %v3943
        %4153 = vmatprep.subr.mxu0 0.0
        %4154 = vmatpush1.msra.mxu0 %v3944
        %4155 = vmatprep.subr.mxu0 0.0
        %4156 = vmatpush1.msra.mxu0 %v3945
        %4157 = vmatprep.subr.mxu0 0.0
        %4158 = vmatpush1.msra.mxu0 %v3946
        %4159 = vmatprep.subr.mxu0 0.0
        %4160 = vmatpush1.msra.mxu0 %v3947
        %4161 = vmatprep.subr.mxu0 0.0
        %4162 = vmatpush1.msra.mxu0 %v3948
        %4163 = vmatprep.subr.mxu0 0.0
        %4164 = vmatpush1.msra.mxu0 %v3949
        %4165 = vmatprep.subr.mxu0 0.0
        %4166 = vmatpush1.msra.mxu0 %v3950
        %4167 = vmatprep.subr.mxu0 0.0
        %4168 = vmatpush1.msra.mxu0 %v3951
        %4169 = vmatprep.subr.mxu0 0.0
        %4170 = vmatpush1.msra.mxu0 %v3952
        %4171 = vmatprep.subr.mxu0 0.0
        %4172 = vmatpush1.msra.mxu0 %v3953
        %4173 = vmatprep.subr.mxu0 0.0
        %4174 = vmatpush1.msra.mxu0 %v3954
        %4175 = vmatprep.subr.mxu0 0.0
        %4176 = vmatpush1.msra.mxu0 %v3955
        %4177 = vmatprep.subr.mxu0 0.0
        %4178 = vmatpush1.msra.mxu0 %v3956
        %4179 = vmatprep.subr.mxu0 0.0
        %4180 = vmatpush1.msra.mxu0 %v3957
        %4181 = vmatprep.subr.mxu0 0.0
        %4182 = vmatpush1.msra.mxu0 %v3958
        %4183 = vmatprep.subr.mxu0 0.0
        %4184 = vmatpush1.msra.mxu0 %v3959
        %4185 = vmatprep.subr.mxu0 0.0
        %4186 = vmatpush1.msra.mxu0 %v3960
        %4187 = vmatprep.subr.mxu0 0.0
        %4188 = vmatpush1.msra.mxu0 %v3961
        %4189 = vmatprep.mubr.f32.mxu0 %v3875
        %4190 = vmatmul.mubr.f32.gmra.mrb[0].mxu0 %v3874
        %v4191 = vpop.f32.mrb[0].mxu0
        %v4192 = vadd.f32 %v4122, %v4191
        %v4193 = vpop.f32.mrb[0].mxu0
        %4194 = vdwg.mxu0
        %4195 = vmatprep.subr.mxu0 0.0
        %4196 = vmatpush1.msra.mxu0 %v3962
        %4197 = vmatprep.subr.mxu0 0.0
        %4198 = vmatpush1.msra.mxu0 %v3963
        %4199 = vmatprep.subr.mxu0 0.0
        %4200 = vmatpush1.msra.mxu0 %v3964
        %4201 = vmatprep.subr.mxu0 0.0
        %4202 = vmatpush1.msra.mxu0 %v3965
        %4203 = vmatprep.subr.mxu0 0.0
        %4204 = vmatpush1.msra.mxu0 %v3966
        %4205 = vmatprep.subr.mxu0 0.0
        %4206 = vmatpush1.msra.mxu0 %v3967
        %4207 = vmatprep.subr.mxu0 0.0
        %4208 = vmatpush1.msra.mxu0 %v3968
        %4209 = vmatprep.subr.mxu0 0.0
        %4210 = vmatpush1.msra.mxu0 %v3969
        %4211 = vmatprep.subr.mxu0 0.0
        %4212 = vmatpush1.msra.mxu0 %v3970
        %4213 = vmatprep.subr.mxu0 0.0
        %4214 = vmatpush1.msra.mxu0 %v3971
        %4215 = vmatprep.subr.mxu0 0.0
        %4216 = vmatpush1.msra.mxu0 %v3972
        %4217 = vmatprep.subr.mxu0 0.0
        %4218 = vmatpush1.msra.mxu0 %v3973
        %4219 = vmatprep.subr.mxu0 0.0
        %4220 = vmatpush1.msra.mxu0 %v3974
        %4221 = vmatprep.subr.mxu0 0.0
        %4222 = vmatpush1.msra.mxu0 %v3975
        %4223 = vmatprep.subr.mxu0 0.0
        %4224 = vmatpush1.msra.mxu0 %v3976
        %4225 = vmatprep.subr.mxu0 0.0
        %4226 = vmatpush1.msra.mxu0 %v3977
        %4227 = vmatprep.subr.mxu0 0.0
        %4228 = vmatpush1.msra.mxu0 %v3978
        %4229 = vmatprep.subr.mxu0 0.0
        %4230 = vmatpush1.msra.mxu0 %v3979
        %4231 = vmatprep.subr.mxu0 0.0
        %4232 = vmatpush1.msra.mxu0 %v3980
        %4233 = vmatprep.subr.mxu0 0.0
        %4234 = vmatpush1.msra.mxu0 %v3981
        %4235 = vmatprep.subr.mxu0 0.0
        %4236 = vmatpush1.msra.mxu0 %v3982
        %4237 = vmatprep.subr.mxu0 0.0
        %4238 = vmatpush1.msra.mxu0 %v3983
        %4239 = vmatprep.subr.mxu0 0.0
        %4240 = vmatpush1.msra.mxu0 %v3984
        %4241 = vmatprep.subr.mxu0 0.0
        %4242 = vmatpush1.msra.mxu0 %v3985
        %4243 = vmatprep.subr.mxu0 0.0
        %4244 = vmatpush1.msra.mxu0 %v3986
        %4245 = vmatprep.subr.mxu0 0.0
        %4246 = vmatpush1.msra.mxu0 %v3987
        %4247 = vmatprep.subr.mxu0 0.0
        %4248 = vmatpush1.msra.mxu0 %v3988
        %4249 = vmatprep.subr.mxu0 0.0
        %4250 = vmatpush1.msra.mxu0 %v3989
        %4251 = vmatprep.subr.mxu0 0.0
        %4252 = vmatpush1.msra.mxu0 %v3990
        %4253 = vmatprep.subr.mxu0 0.0
        %4254 = vmatpush1.msra.mxu0 %v3991
        %4255 = vmatprep.subr.mxu0 0.0
        %4256 = vmatpush1.msra.mxu0 %v3992
        %4257 = vmatprep.subr.mxu0 0.0
        %4258 = vmatpush1.msra.mxu0 %v3993
        %4259 = vmatprep.mubr.f32.mxu0 %v3896
        %4260 = vmatmul.mubr.f32.gmra.mrb[0].mxu0 %v3876
        %v4261 = vpop.f32.mrb[0].mxu0
        %v4262 = vadd.f32 %v4192, %v4261
        %v4263 = vpop.f32.mrb[0].mxu0
        %4264 = vdwg.mxu0
        %4265 = vmatprep.subr.mxu0 0.0
        %4266 = vmatpush1.msra.mxu0 %v3994
        %4267 = vmatprep.subr.mxu0 0.0
        %4268 = vmatpush1.msra.mxu0 %v3995
        %4269 = vmatprep.subr.mxu0 0.0
        %4270 = vmatpush1.msra.mxu0 %v3996
        %4271 = vmatprep.subr.mxu0 0.0
        %4272 = vmatpush1.msra.mxu0 %v3997
        %4273 = vmatprep.subr.mxu0 0.0
        %4274 = vmatpush1.msra.mxu0 %v3998
        %4275 = vmatprep.subr.mxu0 0.0
        %4276 = vmatpush1.msra.mxu0 %v3999
        %4277 = vmatprep.subr.mxu0 0.0
        %4278 = vmatpush1.msra.mxu0 %v4000
        %4279 = vmatprep.subr.mxu0 0.0
        %4280 = vmatpush1.msra.mxu0 %v4001
        %4281 = vmatprep.subr.mxu0 0.0
        %4282 = vmatpush1.msra.mxu0 %v4002
        %4283 = vmatprep.subr.mxu0 0.0
        %4284 = vmatpush1.msra.mxu0 %v4003
        %4285 = vmatprep.subr.mxu0 0.0
        %4286 = vmatpush1.msra.mxu0 %v4004
        %4287 = vmatprep.subr.mxu0 0.0
        %4288 = vmatpush1.msra.mxu0 %v4005
        %4289 = vmatprep.subr.mxu0 0.0
        %4290 = vmatpush1.msra.mxu0 %v4006
        %4291 = vmatprep.subr.mxu0 0.0
        %4292 = vmatpush1.msra.mxu0 %v4007
        %4293 = vmatprep.subr.mxu0 0.0
        %4294 = vmatpush1.msra.mxu0 %v4008
        %4295 = vmatprep.subr.mxu0 0.0
        %4296 = vmatpush1.msra.mxu0 %v4009
        %4297 = vmatprep.subr.mxu0 0.0
        %4298 = vmatpush1.msra.mxu0 %v4010
        %4299 = vmatprep.subr.mxu0 0.0
        %4300 = vmatpush1.msra.mxu0 %v4011
        %4301 = vmatprep.subr.mxu0 0.0
        %4302 = vmatpush1.msra.mxu0 %v4012
        %4303 = vmatprep.subr.mxu0 0.0
        %4304 = vmatpush1.msra.mxu0 %v4013
        %4305 = vmatprep.subr.mxu0 0.0
        %4306 = vmatpush1.msra.mxu0 %v4014
        %4307 = vmatprep.subr.mxu0 0.0
        %4308 = vmatpush1.msra.mxu0 %v4015
        %4309 = vmatprep.subr.mxu0 0.0
        %4310 = vmatpush1.msra.mxu0 %v4016
        %4311 = vmatprep.subr.mxu0 0.0
        %4312 = vmatpush1.msra.mxu0 %v4017
        %4313 = vmatprep.subr.mxu0 0.0
        %4314 = vmatpush1.msra.mxu0 %v4018
        %4315 = vmatprep.subr.mxu0 0.0
        %4316 = vmatpush1.msra.mxu0 %v4019
        %4317 = vmatprep.subr.mxu0 0.0
        %4318 = vmatpush1.msra.mxu0 %v4020
        %4319 = vmatprep.subr.mxu0 0.0
        %4320 = vmatpush1.msra.mxu0 %v4021
        %4321 = vmatprep.subr.mxu0 0.0
        %4322 = vmatpush1.msra.mxu0 %v4022
        %4323 = vmatprep.subr.mxu0 0.0
        %4324 = vmatpush1.msra.mxu0 %v4023
        %4325 = vmatprep.subr.mxu0 0.0
        %4326 = vmatpush1.msra.mxu0 %v4024
        %4327 = vmatprep.subr.mxu0 0.0
        %4328 = vmatpush1.msra.mxu0 %v4025
        %4329 = vmatprep.mubr.f32.mxu0 %v3897
        %4330 = vmatmul.mubr.f32.gmra.mrb[0].mxu0 %v3885
        %v4331 = vpop.f32.mrb[0].mxu0
        %v4332 = vadd.f32 %v4262, %v4331
        %v4333 = vpop.f32.mrb[0].mxu0
        %4334 = vdwg.mxu0
        %4335 = vmatprep.subr.mxu0 0.0
        %4336 = vmatpush1.msra.mxu0 %v4026
        %4337 = vmatprep.subr.mxu0 0.0
        %4338 = vmatpush1.msra.mxu0 %v4027
        %4339 = vmatprep.subr.mxu0 0.0
        %4340 = vmatpush1.msra.mxu0 %v4028
        %4341 = vmatprep.subr.mxu0 0.0
        %4342 = vmatpush1.msra.mxu0 %v4029
        %4343 = vmatprep.subr.mxu0 0.0
        %4344 = vmatpush1.msra.mxu0 %v4030
        %4345 = vmatprep.subr.mxu0 0.0
        %4346 = vmatpush1.msra.mxu0 %v4031
        %4347 = vmatprep.subr.mxu0 0.0
        %4348 = vmatpush1.msra.mxu0 %v4032
        %4349 = vmatprep.subr.mxu0 0.0
        %4350 = vmatpush1.msra.mxu0 %v4033
        %4351 = vmatprep.subr.mxu0 0.0
        %4352 = vmatpush1.msra.mxu0 %v4034
        %4353 = vmatprep.subr.mxu0 0.0
        %4354 = vmatpush1.msra.mxu0 %v4035
        %4355 = vmatprep.subr.mxu0 0.0
        %4356 = vmatpush1.msra.mxu0 %v4036
        %4357 = vmatprep.subr.mxu0 0.0
        %4358 = vmatpush1.msra.mxu0 %v4037
        %4359 = vmatprep.subr.mxu0 0.0
        %4360 = vmatpush1.msra.mxu0 %v4038
        %4361 = vmatprep.subr.mxu0 0.0
        %4362 = vmatpush1.msra.mxu0 %v4039
        %4363 = vmatprep.subr.mxu0 0.0
        %4364 = vmatpush1.msra.mxu0 %v4040
        %4365 = vmatprep.subr.mxu0 0.0
        %4366 = vmatpush1.msra.mxu0 %v4053
        %4367 = vmatprep.subr.mxu0 0.0
        %4368 = vmatpush1.msra.mxu0 0.0
        %4369 = vmatprep.subr.mxu0 0.0
        %4370 = vmatpush1.msra.mxu0 0.0
        %4371 = vmatprep.subr.mxu0 0.0
        %4372 = vmatpush1.msra.mxu0 0.0
        %4373 = vmatprep.subr.mxu0 0.0
        %4374 = vmatpush1.msra.mxu0 0.0
        %4375 = vmatprep.subr.mxu0 0.0
        %4376 = vmatpush1.msra.mxu0 0.0
        %4377 = vmatprep.subr.mxu0 0.0
        %4378 = vmatpush1.msra.mxu0 0.0
        %4379 = vmatprep.subr.mxu0 0.0
        %4380 = vmatpush1.msra.mxu0 0.0
        %4381 = vmatprep.subr.mxu0 0.0
        %4382 = vmatpush1.msra.mxu0 0.0
        %4383 = vmatprep.subr.mxu0 0.0
        %4384 = vmatpush1.msra.mxu0 0.0
        %4385 = vmatprep.subr.mxu0 0.0
        %4386 = vmatpush1.msra.mxu0 0.0
        %4387 = vmatprep.subr.mxu0 0.0
        %4388 = vmatpush1.msra.mxu0 0.0
        %4389 = vmatprep.subr.mxu0 0.0
        %4390 = vmatpush1.msra.mxu0 0.0
        %4391 = vmatprep.subr.mxu0 0.0
        %4392 = vmatpush1.msra.mxu0 0.0
        %4393 = vmatprep.subr.mxu0 0.0
        %4394 = vmatpush1.msra.mxu0 0.0
        %4395 = vmatprep.subr.mxu0 0.0
        %4396 = vmatpush1.msra.mxu0 0.0
        %4397 = vmatprep.subr.mxu0 0.0
        %4398 = vmatpush1.msra.mxu0 0.0
        %4399 = vmatprep.mubr.f32.mxu0 0.0
        %4400 = vmatmul.mubr.f32.gmra.mrb[0].mxu0 %v4050
        %v4401 = vpop.f32.mrb[0].mxu0
        %v4402 = vadd.f32 %v4332, %v4401
        %v4403 = vpop.f32.mrb[0].mxu0
        %4404 = vdwg.mxu0
        %vm4405 = vcmask 17408
        %4406 = vst.msk [vmem:[%s920] sm:$0x3] %vm4405, %v4402
        %s4407 = sand.u32 %s615, 1
        %s4408 = scalar_lea.sflag [#allocation3], %s4407
        %s4409 = sand.u32 %s615, 1
        %s4410 = smul.addr %s4409, 2
        %s4411 = scalar_lea.vmem [#allocation2], %s4410
        %s4412 = sand.u32 %s641, 1
        %s4413 = scalar_lea.sflag [#allocation5], %s4412
        %s4414 = sand.u32 %s641, 1
        %s4415 = smul.addr %s4414, 2
        %s4416 = scalar_lea.vmem [#allocation4], %s4415
        // Predicated region
        $region117: #{gcn_classifier_forward.1} parent=115 // pred_check
          %p4417 = pneg %p625
        $region118: #{gcn_classifier_forward.1} parent=115 // pred_check_branch
          %4419 = sbr.rel (%p4417) target = $region120
        $region119: #{gcn_classifier_forward.1} parent=115 // pred_region
          %s4421 = ssub.s32 32, 32
          %4422 = vsyncadd %s4408, %s4421
          %s4423 = smul.addr %s43, 32
          %s4424 = scalar_lea.hbm %s24, %s4423
          %s4426 = sshll.u32 %s4411, 4
          %s4427 = int_to_ptr.vmem [resolvable:$true] %s4426
          %4429 = dma.vmem_to_hbm [thread:$0]  %s4427, 32, %s4424, %s4408
        $region120: #{gcn_classifier_forward.1} parent=115 // pred_fallthru
          _
        // Predicated region
        $region121: #{gcn_classifier_forward.1} parent=115 // pred_check
          %p4430 = pneg %p651
        $region122: #{gcn_classifier_forward.1} parent=115 // pred_check_branch
          %4432 = sbr.rel (%p4430) target = $region124
        $region123: #{gcn_classifier_forward.1} parent=115 // pred_region
          %s4434 = ssub.s32 32, 32
          %4435 = vsyncadd %s4413, %s4434
          %s4436 = smul.addr %s43, 2
          %s4437 = smul.addr %s4436, 16
          %s4438 = scalar_lea.hbm %s25, %s4437
          %s4440 = sshll.u32 %s4416, 4
          %s4441 = int_to_ptr.vmem [resolvable:$true] %s4440
          %4443 = dma.vmem_to_hbm [thread:$0]  %s4441, 32, %s4438, %s4413
        $region124: #{gcn_classifier_forward.1} parent=115 // pred_fallthru
          _
      $region116: #{gcn_classifier_forward.1} parent=5 // pred_fallthru
        _
      %p4444 = scmp.le.s32.totalorder 2, %s38
      // Predicated region
      $region125: #{gcn_classifier_forward.1} parent=5 // pred_check
        %p4445 = pneg %p4444
      $region126: #{gcn_classifier_forward.1} parent=5 // pred_check_branch
        %4447 = sbr.rel (%p4445) target = $region128
      $region127: #{gcn_classifier_forward.1} parent=5 // pred_region
        %s4448 = ssub.s32 %s38, 2
        // Predicated region
        $region129: #{gcn_classifier_forward.1} parent=127 // pred_check
          %p4449 = pneg %p631
        $region130: #{gcn_classifier_forward.1} parent=127 // pred_check_branch
          %4451 = sbr.rel (%p4449) target = $region132
        $region131: #{gcn_classifier_forward.1} parent=127 // pred_region
          %s4452 = sand.u32 %s616, 1
          %s4453 = scalar_lea.sflag [#allocation3], %s4452
          %s4454 = sand.u32 %s616, 1
          %s4455 = smul.addr %s4454, 2
          %s4456 = scalar_lea.vmem [#allocation2], %s4455
          %4457 = dma.done %s4453, 32
        $region132: #{gcn_classifier_forward.1} parent=127 // pred_fallthru
          _
        // Predicated region
        $region133: #{gcn_classifier_forward.1} parent=127 // pred_check
          %p4458 = pneg %p657
        $region134: #{gcn_classifier_forward.1} parent=127 // pred_check_branch
          %4460 = sbr.rel (%p4458) target = $region136
        $region135: #{gcn_classifier_forward.1} parent=127 // pred_region
          %s4461 = sand.u32 %s642, 1
          %s4462 = scalar_lea.sflag [#allocation5], %s4461
          %s4463 = sand.u32 %s642, 1
          %s4464 = smul.addr %s4463, 2
          %s4465 = scalar_lea.vmem [#allocation4], %s4464
          %4466 = dma.done %s4462, 32
        $region136: #{gcn_classifier_forward.1} parent=127 // pred_fallthru
          _
      $region128: #{gcn_classifier_forward.1} parent=5 // pred_fallthru
        _
    $region6: #{gcn_classifier_forward.1} parent=1 // loop_footer
      %s42 = sadd.s32 1, %s38
    $region7: #{gcn_classifier_forward.1} parent=1 // loop_footer_branch
      %37 = sbr.rel target = $region3
    $region8: #{gcn_classifier_forward.1} parent=1 // loop_exit
      _
    %4467 = vsyncpa [#allocation3], 1
    %s4468 = scalar_lea.sflag [#allocation3], 1
    %4469 = vsyncpa %s4468, 1
    %4470 = vsyncpa [#allocation5], 1
    %s4471 = scalar_lea.sflag [#allocation5], 1
    %4472 = vsyncpa %s4471, 1

</llo_original>
